<compile_context>
chip_gen: v7x
topology: tpu7x:2x2x1
jax: 0.10.0
libtpu: 0.0.40
codegen_flags: <defaults>
</compile_context>

<pallas_src>
import functools

import jax
import jax.numpy as jnp
from jax.experimental import pallas as pl
from jax.experimental.pallas import tpu as pltpu


def _cbr_kernel(x_ref, w_ref, shift_ref, out_ref, xp_ref, *,
                H, W, KH, KW, PH, PW, PAD):
    """Fused conv(KHxKW,'same') + folded-BN shift + ReLU + PHxPW max-pool for ONE batch image.

    x_ref     : (H, W, Cin)        unpadded NHWC image slice (compute dtype)
    w_ref     : (KH*KW, Cin, Cout) conv weights with BN scale folded in (compute dtype)
    shift_ref : (1, Cout)          per-channel shift = beta + (conv_bias - mean) * scale (f32)
    out_ref   : (Ho, Wo, Cout)     output (compute dtype)
    xp_ref    : (H+KH-1, W+KW-1, Cin) VMEM scratch holding the zero-padded image
    """
    Cin = x_ref.shape[-1]
    Cout = out_ref.shape[-1]
    Ho, Wo = H // PH, W // PW

    # --- Fused 'same' padding: zero halo scratch + interior copy, all inside VMEM. ---
    # (Zeroed every grid step so the kernel stays correct under megacore grid sharding.)
    xp_ref[...] = jnp.zeros_like(xp_ref)
    xp_ref[PAD:PAD + H, PAD:PAD + W, :] = x_ref[...]

    # --- Direct convolution: KH*KW accumulated matmuls (K = Cin), f32 accumulation. ---
    # No lane-axis concatenation / im2col buffer; each tap is a shifted window of the scratch.
    acc = None
    for kh in range(KH):
        for kw in range(KW):
            tap = xp_ref[kh:kh + H, kw:kw + W, :].reshape(H * W, Cin)
            part = jnp.dot(tap, w_ref[kh * KW + kw],
                           preferred_element_type=jnp.float32)
            acc = part if acc is None else acc + part

    # --- Max-pool the RAW accumulator first (pool, +shift and ReLU commute). ---
    a = jnp.max(acc.reshape(Ho, PH, W, Cout), axis=1)        # pool rows   -> (Ho, W, Cout)
    a = jnp.max(a.reshape(Ho, Wo, PW, Cout), axis=2)         # pool cols   -> (Ho, Wo, Cout)
    # TODO(synk): replace the second reshape+max with strided-slice maxima
    #             (a[:, 0::PW, :], a[:, 1::PW, :]) once strided value slices lower reliably.

    # --- Folded BatchNorm shift (scale already in the weights) + ReLU on the pooled tensor. ---
    y = jnp.maximum(a + shift_ref[...], 0.0)
    out_ref[...] = y.astype(out_ref.dtype)


def _pick_vmem_limit():
    """Generation-aware scoped-VMEM limit (~60% of physical VMEM, capped)."""
    cap = None
    try:
        info = pltpu.get_tpu_info()
        cap = getattr(info, "vmem_capacity_bytes", None)
    except Exception:
        cap = None
    if not cap:
        cap = 64 * 1024 * 1024          # assume the smallest (v7x per-TC) when unknown
    return int(min(cap * 6 // 10, 96 * 1024 * 1024))


def cbr_tiny_block(x_nchw, params, *, conv_pad=1, pool=2, eps=1e-5,
                   compute_dtype=jnp.bfloat16):
    """Forward pass of CBRTinyBlock (inference-mode BN). Input/output are NCHW (PyTorch)."""
    w, b = params["conv_w"], params["conv_b"]
    gamma, beta = params["bn_gamma"], params["bn_beta"]
    mean, var = params["bn_mean"], params["bn_var"]

    B, Cin, H, W = x_nchw.shape
    Cout, _, KH, KW = w.shape
    PH = PW = pool
    assert H % PH == 0 and W % PW == 0, "spatial dims must be divisible by the pool size"
    assert 2 * conv_pad == KH - 1 and 2 * conv_pad == KW - 1, \
        "kernel assumes 'same' convolution (2*padding == kernel_size - 1)"
    Ho, Wo = H // PH, W // PW
    Hp, Wp = H + 2 * conv_pad, W + 2 * conv_pad
    KT = KH * KW

    # ---- Fold BatchNorm (running stats) + conv bias into weight/shift (one-time, f32). ----
    scale = (gamma / jnp.sqrt(var.astype(jnp.float32) + eps)).astype(jnp.float32)   # (Cout,)
    shift = (beta + (b - mean) * scale).astype(jnp.float32)                          # (Cout,)

    # Weights: (Cout, Cin, KH, KW) -> (KH*KW, Cin, Cout), BN scale folded on the output channel.
    w_t = jnp.transpose(w.astype(jnp.float32), (2, 3, 1, 0)).reshape(KT, Cin, Cout)
    w_t = (w_t * scale[None, None, :]).astype(compute_dtype)
    shift_2d = shift.reshape(1, Cout)

    # ---- Glue: NCHW -> NHWC + cast to MXU dtype (padding is fused into the kernel). ----
    x = jnp.transpose(x_nchw, (0, 2, 3, 1)).astype(compute_dtype)

    kernel = functools.partial(_cbr_kernel, H=H, W=W, KH=KH, KW=KW,
                               PH=PH, PW=PW, PAD=conv_pad)

    out = pl.pallas_call(
        kernel,
        out_shape=jax.ShapeDtypeStruct((B, Ho, Wo, Cout), compute_dtype),
        grid=(B,),
        in_specs=[
            # One unpadded image per grid step; batch dim squeezed out of the kernel view.
            pl.BlockSpec((None, H, W, Cin), lambda bb: (bb, 0, 0, 0)),
            # Weights / shift: constant blocks, fetched once and kept resident.
            pl.BlockSpec((KT, Cin, Cout), lambda bb: (0, 0, 0)),
            pl.BlockSpec((1, Cout), lambda bb: (0, 0)),
        ],
        out_specs=pl.BlockSpec((None, Ho, Wo, Cout), lambda bb: (bb, 0, 0, 0)),
        scratch_shapes=[pltpu.VMEM((Hp, Wp, Cin), compute_dtype)],
        compiler_params=pltpu.CompilerParams(
            dimension_semantics=("parallel",),      # batch axis (sharded across TCs on v7x)
            vmem_limit_bytes=_pick_vmem_limit(),
        ),
    )(x, w_t, shift_2d)

    # Glue: NHWC -> NCHW to match PyTorch; cast back to the input dtype (fuses with the transpose).
    return jnp.transpose(out, (0, 3, 1, 2)).astype(x_nchw.dtype)


def _reference(x_nchw, params, *, conv_pad=1, pool=2, eps=1e-5):
    """Pure-JAX reference (lax conv + BN eval + ReLU + maxpool) for correctness check."""
    y = jax.lax.conv_general_dilated(
        x_nchw.astype(jnp.float32), params["conv_w"].astype(jnp.float32),
        window_strides=(1, 1), padding=[(conv_pad, conv_pad)] * 2,
        dimension_numbers=("NCHW", "OIHW", "NCHW"))
    y = y + params["conv_b"][None, :, None, None]
    scale = params["bn_gamma"] / jnp.sqrt(params["bn_var"] + eps)
    y = (y - params["bn_mean"][None, :, None, None]) * scale[None, :, None, None]
    y = y + params["bn_beta"][None, :, None, None]
    y = jnp.maximum(y, 0.0)
    y = jax.lax.reduce_window(y, -jnp.inf, jax.lax.max,
                              (1, 1, pool, pool), (1, 1, pool, pool), "VALID")
    return y


if __name__ == "__main__":
    # Small shapes consistent with the module: conv 3x3 / pad 1, maxpool 2x2 / stride 2.
    B, Cin, Cout, H, W = 2, 4, 8, 16, 16
    key = jax.random.PRNGKey(0)
    k = jax.random.split(key, 7)

    params = {
        "conv_w":  0.1 * jax.random.normal(k[0], (Cout, Cin, 3, 3), jnp.float32),
        "conv_b":  0.1 * jax.random.normal(k[1], (Cout,), jnp.float32),
        "bn_gamma": 1.0 + 0.1 * jax.random.normal(k[2], (Cout,), jnp.float32),
        "bn_beta": 0.1 * jax.random.normal(k[3], (Cout,), jnp.float32),
        "bn_mean": 0.1 * jax.random.normal(k[4], (Cout,), jnp.float32),
        "bn_var":  jnp.abs(jax.random.normal(k[5], (Cout,), jnp.float32)) + 0.5,
    }
    x = jax.random.normal(k[6], (B, Cin, H, W), jnp.float32)

    ref = jax.block_until_ready(_reference(x, params))

    # Full-precision path: faithful to the PyTorch (f32) forward.
    out_f32 = jax.block_until_ready(cbr_tiny_block(x, params, compute_dtype=jnp.float32))
    assert out_f32.shape == (B, Cout, H // 2, W // 2), out_f32.shape
    assert jnp.allclose(out_f32, ref, atol=1e-4, rtol=1e-4), \
        float(jnp.max(jnp.abs(out_f32 - ref)))

    # Default perf path: bf16 matmul operands + bf16 output, f32 accumulation/elementwise.
    out_bf16 = jax.block_until_ready(cbr_tiny_block(x, params))
    assert out_bf16.shape == (B, Cout, H // 2, W // 2), out_bf16.shape
    assert jnp.allclose(out_bf16, ref, atol=3e-2, rtol=3e-2), \
        float(jnp.max(jnp.abs(out_bf16 - ref)))

    print("KERNEL_OK")
</pallas_src>

<mosaic_0001>
module attributes {stable_mosaic.version = 11 : i64} {
  func.func @_cbr_kernel(%arg0: i32, %arg1: memref<1x16x16x4xf32, #tpu.memory_space<vmem>>, %arg2: memref<9x4x8xf32, #tpu.memory_space<vmem>>, %arg3: memref<1x8xf32, #tpu.memory_space<vmem>>, %arg4: memref<1x8x8x8xf32, #tpu.memory_space<vmem>>, %arg5: memref<18x18x4xf32, #tpu.memory_space<vmem>>) attributes {dimension_semantics = [#tpu.dimension_semantics<parallel>], iteration_bounds = array<i64: 2>, scalar_prefetch = 0 : i64, scratch_operands = 1 : i64, tpu.core_type = #tpu.core_type<tc>, window_params = [{transform_indices = @transform_0, window_bounds = array<i64: 1, 16, 16, 4>}, {pipeline_mode = #tpu.pipeline_mode<synchronous>, transform_indices = @transform_1, window_bounds = array<i64: 9, 4, 8>}, {pipeline_mode = #tpu.pipeline_mode<synchronous>, transform_indices = @transform_2, window_bounds = array<i64: 1, 8>}, {transform_indices = @transform_3, window_bounds = array<i64: 1, 8, 8, 8>}]} {
    %cst = arith.constant 0.000000e+00 : f32
    %0 = vector.broadcast %cst : f32 to vector<18x18x4xf32>
    %c0 = arith.constant 0 : index
    %c0_0 = arith.constant 0 : index
    %c0_1 = arith.constant 0 : index
    %1 = vector.load %arg5[%c0, %c0_0, %c0_1] : memref<18x18x4xf32, #tpu.memory_space<vmem>>, vector<18x18x4xf32>
    tpu.vector_store %arg5[%c0, %c0_0, %c0_1], %0 {strides = array<i32>} : memref<18x18x4xf32, #tpu.memory_space<vmem>>, vector<18x18x4xf32>,
    %c0_2 = arith.constant 0 : index
    %c0_3 = arith.constant 0 : index
    %c0_4 = arith.constant 0 : index
    %c0_5 = arith.constant 0 : index
    %2 = vector.load %arg1[%c0_2, %c0_3, %c0_4, %c0_5] : memref<1x16x16x4xf32, #tpu.memory_space<vmem>>, vector<1x16x16x4xf32>
    %3 = vector.shape_cast %2 : vector<1x16x16x4xf32> to vector<16x16x4xf32>
    %c1 = arith.constant 1 : index
    %c1_6 = arith.constant 1 : index
    %c0_7 = arith.constant 0 : index
    %4 = vector.load %arg5[%c1, %c1_6, %c0_7] : memref<18x18x4xf32, #tpu.memory_space<vmem>>, vector<16x16x4xf32>
    tpu.vector_store %arg5[%c1, %c1_6, %c0_7], %3 {strides = array<i32>} : memref<18x18x4xf32, #tpu.memory_space<vmem>>, vector<16x16x4xf32>,
    %c0_8 = arith.constant 0 : index
    %c0_9 = arith.constant 0 : index
    %c0_10 = arith.constant 0 : index
    %5 = vector.load %arg5[%c0_8, %c0_9, %c0_10] : memref<18x18x4xf32, #tpu.memory_space<vmem>>, vector<16x16x4xf32>
    %6 = vector.shape_cast %5 : vector<16x16x4xf32> to vector<256x4xf32>
    %c0_11 = arith.constant 0 : index
    %c0_12 = arith.constant 0 : index
    %c0_13 = arith.constant 0 : index
    %7 = vector.load %arg2[%c0_11, %c0_12, %c0_13] : memref<9x4x8xf32, #tpu.memory_space<vmem>>, vector<1x4x8xf32>
    %8 = vector.shape_cast %7 : vector<1x4x8xf32> to vector<4x8xf32>
    %cst_14 = arith.constant dense<0.000000e+00> : vector<256x8xf32>
    %9 = tpu.matmul %6, %8, %cst_14 {dimension_numbers = #tpu.dot_dimension_numbers<[1], [0], [0], [1], [0, 0, 1, 1], [], []>} : vector<256x4xf32>, vector<4x8xf32>, vector<256x8xf32> -> vector<256x8xf32>
    %c0_15 = arith.constant 0 : index
    %c1_16 = arith.constant 1 : index
    %c0_17 = arith.constant 0 : index
    %10 = vector.load %arg5[%c0_15, %c1_16, %c0_17] : memref<18x18x4xf32, #tpu.memory_space<vmem>>, vector<16x16x4xf32>
    %11 = vector.shape_cast %10 : vector<16x16x4xf32> to vector<256x4xf32>
    %c1_18 = arith.constant 1 : index
    %c0_19 = arith.constant 0 : index
    %c0_20 = arith.constant 0 : index
    %12 = vector.load %arg2[%c1_18, %c0_19, %c0_20] : memref<9x4x8xf32, #tpu.memory_space<vmem>>, vector<1x4x8xf32>
    %13 = vector.shape_cast %12 : vector<1x4x8xf32> to vector<4x8xf32>
    %cst_21 = arith.constant dense<0.000000e+00> : vector<256x8xf32>
    %14 = tpu.matmul %11, %13, %cst_21 {dimension_numbers = #tpu.dot_dimension_numbers<[1], [0], [0], [1], [0, 0, 1, 1], [], []>} : vector<256x4xf32>, vector<4x8xf32>, vector<256x8xf32> -> vector<256x8xf32>
    %15 = arith.addf %9, %14 : vector<256x8xf32>
    %c0_22 = arith.constant 0 : index
    %c2 = arith.constant 2 : index
    %c0_23 = arith.constant 0 : index
    %16 = vector.load %arg5[%c0_22, %c2, %c0_23] : memref<18x18x4xf32, #tpu.memory_space<vmem>>, vector<16x16x4xf32>
    %17 = vector.shape_cast %16 : vector<16x16x4xf32> to vector<256x4xf32>
    %c2_24 = arith.constant 2 : index
    %c0_25 = arith.constant 0 : index
    %c0_26 = arith.constant 0 : index
    %18 = vector.load %arg2[%c2_24, %c0_25, %c0_26] : memref<9x4x8xf32, #tpu.memory_space<vmem>>, vector<1x4x8xf32>
    %19 = vector.shape_cast %18 : vector<1x4x8xf32> to vector<4x8xf32>
    %cst_27 = arith.constant dense<0.000000e+00> : vector<256x8xf32>
    %20 = tpu.matmul %17, %19, %cst_27 {dimension_numbers = #tpu.dot_dimension_numbers<[1], [0], [0], [1], [0, 0, 1, 1], [], []>} : vector<256x4xf32>, vector<4x8xf32>, vector<256x8xf32> -> vector<256x8xf32>
    %21 = arith.addf %15, %20 : vector<256x8xf32>
    %c1_28 = arith.constant 1 : index
    %c0_29 = arith.constant 0 : index
    %c0_30 = arith.constant 0 : index
    %22 = vector.load %arg5[%c1_28, %c0_29, %c0_30] : memref<18x18x4xf32, #tpu.memory_space<vmem>>, vector<16x16x4xf32>
    %23 = vector.shape_cast %22 : vector<16x16x4xf32> to vector<256x4xf32>
    %c3 = arith.constant 3 : index
    %c0_31 = arith.constant 0 : index
    %c0_32 = arith.constant 0 : index
    %24 = vector.load %arg2[%c3, %c0_31, %c0_32] : memref<9x4x8xf32, #tpu.memory_space<vmem>>, vector<1x4x8xf32>
    %25 = vector.shape_cast %24 : vector<1x4x8xf32> to vector<4x8xf32>
    %cst_33 = arith.constant dense<0.000000e+00> : vector<256x8xf32>
    %26 = tpu.matmul %23, %25, %cst_33 {dimension_numbers = #tpu.dot_dimension_numbers<[1], [0], [0], [1], [0, 0, 1, 1], [], []>} : vector<256x4xf32>, vector<4x8xf32>, vector<256x8xf32> -> vector<256x8xf32>
    %27 = arith.addf %21, %26 : vector<256x8xf32>
    %c1_34 = arith.constant 1 : index
    %c1_35 = arith.constant 1 : index
    %c0_36 = arith.constant 0 : index
    %28 = vector.load %arg5[%c1_34, %c1_35, %c0_36] : memref<18x18x4xf32, #tpu.memory_space<vmem>>, vector<16x16x4xf32>
    %29 = vector.shape_cast %28 : vector<16x16x4xf32> to vector<256x4xf32>
    %c4 = arith.constant 4 : index
    %c0_37 = arith.constant 0 : index
    %c0_38 = arith.constant 0 : index
    %30 = vector.load %arg2[%c4, %c0_37, %c0_38] : memref<9x4x8xf32, #tpu.memory_space<vmem>>, vector<1x4x8xf32>
    %31 = vector.shape_cast %30 : vector<1x4x8xf32> to vector<4x8xf32>
    %cst_39 = arith.constant dense<0.000000e+00> : vector<256x8xf32>
    %32 = tpu.matmul %29, %31, %cst_39 {dimension_numbers = #tpu.dot_dimension_numbers<[1], [0], [0], [1], [0, 0, 1, 1], [], []>} : vector<256x4xf32>, vector<4x8xf32>, vector<256x8xf32> -> vector<256x8xf32>
    %33 = arith.addf %27, %32 : vector<256x8xf32>
    %c1_40 = arith.constant 1 : index
    %c2_41 = arith.constant 2 : index
    %c0_42 = arith.constant 0 : index
    %34 = vector.load %arg5[%c1_40, %c2_41, %c0_42] : memref<18x18x4xf32, #tpu.memory_space<vmem>>, vector<16x16x4xf32>
    %35 = vector.shape_cast %34 : vector<16x16x4xf32> to vector<256x4xf32>
    %c5 = arith.constant 5 : index
    %c0_43 = arith.constant 0 : index
    %c0_44 = arith.constant 0 : index
    %36 = vector.load %arg2[%c5, %c0_43, %c0_44] : memref<9x4x8xf32, #tpu.memory_space<vmem>>, vector<1x4x8xf32>
    %37 = vector.shape_cast %36 : vector<1x4x8xf32> to vector<4x8xf32>
    %cst_45 = arith.constant dense<0.000000e+00> : vector<256x8xf32>
    %38 = tpu.matmul %35, %37, %cst_45 {dimension_numbers = #tpu.dot_dimension_numbers<[1], [0], [0], [1], [0, 0, 1, 1], [], []>} : vector<256x4xf32>, vector<4x8xf32>, vector<256x8xf32> -> vector<256x8xf32>
    %39 = arith.addf %33, %38 : vector<256x8xf32>
    %c2_46 = arith.constant 2 : index
    %c0_47 = arith.constant 0 : index
    %c0_48 = arith.constant 0 : index
    %40 = vector.load %arg5[%c2_46, %c0_47, %c0_48] : memref<18x18x4xf32, #tpu.memory_space<vmem>>, vector<16x16x4xf32>
    %41 = vector.shape_cast %40 : vector<16x16x4xf32> to vector<256x4xf32>
    %c6 = arith.constant 6 : index
    %c0_49 = arith.constant 0 : index
    %c0_50 = arith.constant 0 : index
    %42 = vector.load %arg2[%c6, %c0_49, %c0_50] : memref<9x4x8xf32, #tpu.memory_space<vmem>>, vector<1x4x8xf32>
    %43 = vector.shape_cast %42 : vector<1x4x8xf32> to vector<4x8xf32>
    %cst_51 = arith.constant dense<0.000000e+00> : vector<256x8xf32>
    %44 = tpu.matmul %41, %43, %cst_51 {dimension_numbers = #tpu.dot_dimension_numbers<[1], [0], [0], [1], [0, 0, 1, 1], [], []>} : vector<256x4xf32>, vector<4x8xf32>, vector<256x8xf32> -> vector<256x8xf32>
    %45 = arith.addf %39, %44 : vector<256x8xf32>
    %c2_52 = arith.constant 2 : index
    %c1_53 = arith.constant 1 : index
    %c0_54 = arith.constant 0 : index
    %46 = vector.load %arg5[%c2_52, %c1_53, %c0_54] : memref<18x18x4xf32, #tpu.memory_space<vmem>>, vector<16x16x4xf32>
    %47 = vector.shape_cast %46 : vector<16x16x4xf32> to vector<256x4xf32>
    %c7 = arith.constant 7 : index
    %c0_55 = arith.constant 0 : index
    %c0_56 = arith.constant 0 : index
    %48 = vector.load %arg2[%c7, %c0_55, %c0_56] : memref<9x4x8xf32, #tpu.memory_space<vmem>>, vector<1x4x8xf32>
    %49 = vector.shape_cast %48 : vector<1x4x8xf32> to vector<4x8xf32>
    %cst_57 = arith.constant dense<0.000000e+00> : vector<256x8xf32>
    %50 = tpu.matmul %47, %49, %cst_57 {dimension_numbers = #tpu.dot_dimension_numbers<[1], [0], [0], [1], [0, 0, 1, 1], [], []>} : vector<256x4xf32>, vector<4x8xf32>, vector<256x8xf32> -> vector<256x8xf32>
    %51 = arith.addf %45, %50 : vector<256x8xf32>
    %c2_58 = arith.constant 2 : index
    %c2_59 = arith.constant 2 : index
    %c0_60 = arith.constant 0 : index
    %52 = vector.load %arg5[%c2_58, %c2_59, %c0_60] : memref<18x18x4xf32, #tpu.memory_space<vmem>>, vector<16x16x4xf32>
    %53 = vector.shape_cast %52 : vector<16x16x4xf32> to vector<256x4xf32>
    %c8 = arith.constant 8 : index
    %c0_61 = arith.constant 0 : index
    %c0_62 = arith.constant 0 : index
    %54 = vector.load %arg2[%c8, %c0_61, %c0_62] : memref<9x4x8xf32, #tpu.memory_space<vmem>>, vector<1x4x8xf32>
    %55 = vector.shape_cast %54 : vector<1x4x8xf32> to vector<4x8xf32>
    %cst_63 = arith.constant dense<0.000000e+00> : vector<256x8xf32>
    %56 = tpu.matmul %53, %55, %cst_63 {dimension_numbers = #tpu.dot_dimension_numbers<[1], [0], [0], [1], [0, 0, 1, 1], [], []>} : vector<256x4xf32>, vector<4x8xf32>, vector<256x8xf32> -> vector<256x8xf32>
    %57 = arith.addf %51, %56 : vector<256x8xf32>
    %58 = vector.shape_cast %57 : vector<256x8xf32> to vector<8x2x16x8xf32>
    %cst_64 = arith.constant dense<0xFF800000> : vector<8x16x8xf32>
    %59 = vector.multi_reduction <maximumf>, %58, %cst_64 [1] : vector<8x2x16x8xf32> to vector<8x16x8xf32>
    %60 = vector.shape_cast %59 : vector<8x16x8xf32> to vector<8x8x2x8xf32>
    %cst_65 = arith.constant dense<0xFF800000> : vector<8x8x8xf32>
    %61 = vector.multi_reduction <maximumf>, %60, %cst_65 [2] : vector<8x8x2x8xf32> to vector<8x8x8xf32>
    %c0_66 = arith.constant 0 : index
    %c0_67 = arith.constant 0 : index
    %62 = vector.load %arg3[%c0_66, %c0_67] : memref<1x8xf32, #tpu.memory_space<vmem>>, vector<1x8xf32>
    %63 = vector.shape_cast %62 : vector<1x8xf32> to vector<1x1x8xf32>
    %64 = vector.broadcast %63 : vector<1x1x8xf32> to vector<8x8x8xf32>
    %65 = arith.addf %61, %64 : vector<8x8x8xf32>
    %cst_68 = arith.constant 0.000000e+00 : f32
    %66 = vector.broadcast %cst_68 : f32 to vector<8x8x8xf32>
    %67 = arith.maximumf %65, %66 : vector<8x8x8xf32>
    %c0_69 = arith.constant 0 : index
    %c0_70 = arith.constant 0 : index
    %c0_71 = arith.constant 0 : index
    %c0_72 = arith.constant 0 : index
    %68 = vector.load %arg4[%c0_69, %c0_70, %c0_71, %c0_72] : memref<1x8x8x8xf32, #tpu.memory_space<vmem>>, vector<1x8x8x8xf32>
    %69 = vector.shape_cast %68 : vector<1x8x8x8xf32> to vector<8x8x8xf32>
    %70 = vector.shape_cast %67 : vector<8x8x8xf32> to vector<1x8x8x8xf32>
    tpu.vector_store %arg4[%c0_69, %c0_70, %c0_71, %c0_72], %70 {strides = array<i32>} : memref<1x8x8x8xf32, #tpu.memory_space<vmem>>, vector<1x8x8x8xf32>,
    return
  }
  func.func @transform_0(%arg0: i32) -> (i32, i32, i32, i32) {
    %c0_i32 = arith.constant 0 : i32
    %c0_i32_0 = arith.constant 0 : i32
    %c0_i32_1 = arith.constant 0 : i32
    %c0_i32_2 = arith.constant 0 : i32
    return %arg0, %c0_i32, %c0_i32_0, %c0_i32_1 : i32, i32, i32, i32
  }
  func.func @transform_1(%arg0: i32) -> (i32, i32, i32) {
    %c0_i32 = arith.constant 0 : i32
    %c0_i32_0 = arith.constant 0 : i32
    %c0_i32_1 = arith.constant 0 : i32
    %c0_i32_2 = arith.constant 0 : i32
    return %c0_i32, %c0_i32_0, %c0_i32_1 : i32, i32, i32
  }
  func.func @transform_2(%arg0: i32) -> (i32, i32) {
    %c0_i32 = arith.constant 0 : i32
    %c0_i32_0 = arith.constant 0 : i32
    %c0_i32_1 = arith.constant 0 : i32
    return %c0_i32, %c0_i32_0 : i32, i32
  }
  func.func @transform_3(%arg0: i32) -> (i32, i32, i32, i32) {
    %c0_i32 = arith.constant 0 : i32
    %c0_i32_0 = arith.constant 0 : i32
    %c0_i32_1 = arith.constant 0 : i32
    %c0_i32_2 = arith.constant 0 : i32
    return %arg0, %c0_i32, %c0_i32_0, %c0_i32_1 : i32, i32, i32, i32
  }
}

</mosaic_0001>

<llo_original>
// kernel: tpu_custom_call.1
$region0: #{tpu_custom_call.1}
  #allocation0 [shape = 'u32[]', space=smem, size = 0x4, offset = 0x4, fixed_abs, tag = 'smem constant byte address 0x4 - core index']
  #allocation1 [shape = 'u32[144,128]{1,0:T(1,128)}', space=vmem, size = 0x12000, scoped, tag = 'internal scratch']
  #allocation2 [shape = 'f32[18,18,4]{2,1,0:T(8,128)}', space=vmem, size = 0x36000, scoped, tag = 'scratch operand']
  %s0 = inlined_call_operand.vmem [shape: f32[2,16,16,4], index: 0, kind: input, shape index: {}]
  %s1 = inlined_call_operand.vmem [shape: f32[9,4,8], index: 1, kind: input, shape index: {}]
  %s2 = inlined_call_operand.vmem [shape: f32[1,8], index: 2, kind: input, shape index: {}]
  %s3 = inlined_call_operand.hbm [shape: f32[2,8,8,8], index: 3, kind: output, shape index: {}]
  %s4 = sld [smem:[#allocation0]]
  $region45: #{tpu_custom_call.1} parent=0
    _
  %s6 = ssub.s32 1, %s4
  %s7 = scalar_select 0, %s6, %s4
  $region1: #{tpu_custom_call.1} parent=0
    #allocation3 [shape = 'u8[65536]{0}', space=vmem, size = 0x10000, scoped, tag = 'output window, operand 0']
    #allocation4 [shape = 's32[2]{0}', space=sflag, size = 0x8, scoped, tag = 'scoped memory for tpu_custom_call.1']
    %8 = vsyncpa [#allocation4], 0
    %s9 = scalar_lea.sflag [#allocation4], 1
    %10 = vsyncpa %s9, 0
    loop: start=0, step=1, limit=4
    $region2: #{tpu_custom_call.1} parent=1 // loop_pre_header
      _
    $region3: #{tpu_custom_call.1} parent=1 // loop_header
      %s12 = sphi 0, %s16
      %p13 = scmp.ge.s32.totalorder %s12, 4
      %s22 = sphi 0, %s24
      %s25 = sphi 0, %s22
      %s26 = sphi 0, %s25
      %s42 = sphi 0, %s26
      %s46 = sphi 0, %s46
      %s48 = sphi 0, %s46
      %s49 = sphi 0, %s48
      %s63 = sphi 0, %s49
      %s67 = sphi 0, %s67
      %s69 = sphi 0, %s67
      %s70 = sphi 0, %s69
      %s84 = sphi 0, %s70
      %s90 = sphi 0, %s92
      %s93 = sphi 0, %s90
      %s94 = sphi 0, %s93
      %s110 = sphi 0, %s94
    $region4: #{tpu_custom_call.1} parent=1 // loop_header_branch
      %15 = sbr.rel (%p13) target = $region8
    $region5: #{tpu_custom_call.1} parent=1 // loop_body
      %s17 = ssub.s32 %s12, 1
      %s18 = ssub.s32 %s12, 2
      %s19 = sadd.s32 %s12, 1
      %s20 = ssub.s32 %s12, %s19
      %p21 = scmp.eq.s32.totalorder %s20, 0
      %s23 = sadd.s32 %s22, 1
      %s24 = scalar_select %p21, %s22, %s23
      %p27 = pneg %p21
      %p28 = scmp.eq.s32.totalorder %s12, 1
      %p29 = por %p27, %p28
      %p30 = scmp.ne.s32.totalorder %s22, %s25
      %p31 = scmp.eq.s32.totalorder %s12, 0
      %p32 = por %p30, %p31
      %p33 = scmp.ne.s32.totalorder %s22, %s25
      %p34 = scmp.eq.s32.totalorder %s17, 1
      %p35 = por %p33, %p34
      %p36 = scmp.ne.s32.totalorder %s25, %s26
      %p37 = scmp.eq.s32.totalorder %s17, 0
      %p38 = por %p36, %p37
      %p39 = scmp.ne.s32.totalorder %s25, %s26
      %p40 = scmp.eq.s32.totalorder %s18, 1
      %p41 = por %p39, %p40
      %p43 = scmp.ne.s32.totalorder %s26, %s42
      %p44 = scmp.eq.s32.totalorder %s18, 0
      %p45 = por %p43, %p44
      %s47 = sadd.s32 %s46, 1
      %p50 = scmp.eq.s32.totalorder %s12, 1
      %p51 = scmp.ne.s32.totalorder %s46, %s48
      %p52 = scmp.eq.s32.totalorder %s12, 0
      %p53 = por %p51, %p52
      %p54 = scmp.ne.s32.totalorder %s46, %s48
      %p55 = scmp.eq.s32.totalorder %s17, 1
      %p56 = por %p54, %p55
      %p57 = scmp.ne.s32.totalorder %s48, %s49
      %p58 = scmp.eq.s32.totalorder %s17, 0
      %p59 = por %p57, %p58
      %p60 = scmp.ne.s32.totalorder %s48, %s49
      %p61 = scmp.eq.s32.totalorder %s18, 1
      %p62 = por %p60, %p61
      %p64 = scmp.ne.s32.totalorder %s49, %s63
      %p65 = scmp.eq.s32.totalorder %s18, 0
      %p66 = por %p64, %p65
      %s68 = sadd.s32 %s67, 1
      %p71 = scmp.eq.s32.totalorder %s12, 1
      %p72 = scmp.ne.s32.totalorder %s67, %s69
      %p73 = scmp.eq.s32.totalorder %s12, 0
      %p74 = por %p72, %p73
      %p75 = scmp.ne.s32.totalorder %s67, %s69
      %p76 = scmp.eq.s32.totalorder %s17, 1
      %p77 = por %p75, %p76
      %p78 = scmp.ne.s32.totalorder %s69, %s70
      %p79 = scmp.eq.s32.totalorder %s17, 0
      %p80 = por %p78, %p79
      %p81 = scmp.ne.s32.totalorder %s69, %s70
      %p82 = scmp.eq.s32.totalorder %s18, 1
      %p83 = por %p81, %p82
      %p85 = scmp.ne.s32.totalorder %s70, %s84
      %p86 = scmp.eq.s32.totalorder %s18, 0
      %p87 = por %p85, %p86
      %s88 = ssub.s32 %s12, %s19
      %p89 = scmp.eq.s32.totalorder %s88, 0
      %s91 = sadd.s32 %s90, 1
      %s92 = scalar_select %p89, %s90, %s91
      %p95 = pneg %p89
      %p96 = scmp.eq.s32.totalorder %s12, 1
      %p97 = por %p95, %p96
      %p98 = scmp.ne.s32.totalorder %s90, %s93
      %p99 = scmp.eq.s32.totalorder %s12, 0
      %p100 = por %p98, %p99
      %p101 = scmp.ne.s32.totalorder %s90, %s93
      %p102 = scmp.eq.s32.totalorder %s17, 1
      %p103 = por %p101, %p102
      %p104 = scmp.ne.s32.totalorder %s93, %s94
      %p105 = scmp.eq.s32.totalorder %s17, 0
      %p106 = por %p104, %p105
      %p107 = scmp.ne.s32.totalorder %s93, %s94
      %p108 = scmp.eq.s32.totalorder %s18, 1
      %p109 = por %p107, %p108
      %p111 = scmp.ne.s32.totalorder %s94, %s110
      %p112 = scmp.eq.s32.totalorder %s18, 0
      %p113 = por %p111, %p112
      %p114 = scmp.le.s32.totalorder 1, %s12
      %p115 = scmp.lt.s32.totalorder %s12, 3
      %p116 = pnand %p114, %p115
      %p117 = pneg %p116
      // Predicated region
      $region9: #{tpu_custom_call.1} parent=5 // pred_check
        _
      $region10: #{tpu_custom_call.1} parent=5 // pred_check_branch
        %119 = sbr.rel (%p116) target = $region12
      $region11: #{tpu_custom_call.1} parent=5 // pred_region
        %s120 = ssub.s32 %s12, 1
        // Predicated region
        $region13: #{tpu_custom_call.1} parent=11 // pred_check
          %p121 = pneg %p59
        $region14: #{tpu_custom_call.1} parent=11 // pred_check_branch
          %123 = sbr.rel (%p121) target = $region16
        $region15: #{tpu_custom_call.1} parent=11 // pred_region
          _
        $region16: #{tpu_custom_call.1} parent=11 // pred_fallthru
          _
        // Predicated region
        $region17: #{tpu_custom_call.1} parent=11 // pred_check
          %p124 = pneg %p80
        $region18: #{tpu_custom_call.1} parent=11 // pred_check_branch
          %126 = sbr.rel (%p124) target = $region20
        $region19: #{tpu_custom_call.1} parent=11 // pred_region
          _
        $region20: #{tpu_custom_call.1} parent=11 // pred_fallthru
          _
      $region12: #{tpu_custom_call.1} parent=5 // pred_fallthru
        _
      %p127 = scmp.lt.s32.totalorder %s12, 2
      // Predicated region
      $region21: #{tpu_custom_call.1} parent=5 // pred_check
        %p128 = pneg %p127
      $region22: #{tpu_custom_call.1} parent=5 // pred_check_branch
        %130 = sbr.rel (%p128) target = $region24
      $region23: #{tpu_custom_call.1} parent=5 // pred_region
        // Predicated region
        $region25: #{tpu_custom_call.1} parent=23 // pred_check
          %p131 = pneg %p32
        $region26: #{tpu_custom_call.1} parent=23 // pred_check_branch
          %133 = sbr.rel (%p131) target = $region28
        $region27: #{tpu_custom_call.1} parent=23 // pred_region
          %p134 = scmp.lt.s32.totalorder %s12, 1
          %s135 = scalar_select %p134, %s12, 1
          %s136 = smul.addr %s135, 32
          %s137 = smul.addr %s136, 8
          %s138 = scalar_lea.vmem %s0, %s137
        $region28: #{tpu_custom_call.1} parent=23 // pred_fallthru
          _
      $region24: #{tpu_custom_call.1} parent=5 // pred_fallthru
        _
      %p139 = scmp.le.s32.totalorder 1, %s12
      %p140 = scmp.lt.s32.totalorder %s12, 3
      %p141 = pnand %p139, %p140
      %p142 = pneg %p141
      // Predicated region
      $region29: #{tpu_custom_call.1} parent=5 // pred_check
        _
      $region30: #{tpu_custom_call.1} parent=5 // pred_check_branch
        %144 = sbr.rel (%p141) target = $region32
      $region31: #{tpu_custom_call.1} parent=5 // pred_region
        %s145 = ssub.s32 %s12, 1
        %p146 = scmp.lt.s32.totalorder %s17, 1
        %s147 = scalar_select %p146, %s17, 1
        %s148 = smul.addr %s147, 32
        %s149 = smul.addr %s148, 8
        %s150 = scalar_lea.vmem %s0, %s149
        %p151 = pneg %p38
        %p152 = pneg %p35
        %p153 = pneg %p59
        %p154 = pneg %p56
        %p155 = pneg %p80
        %p156 = pneg %p77
        %p157 = pneg %p106
        %p158 = pneg %p103
        %s159 = sand.u32 %s93, 1
        %s160 = scalar_lea.sflag [#allocation4], %s159
        %s161 = sand.u32 %s93, 1
        %s162 = smul.addr %s161, 64
        %s163 = scalar_lea.vmem [#allocation3], %s162
        %p164 = scmp.lt.s32.totalorder %s17, 1
        %s165 = scalar_select %p164, %s17, 1
        %s166 = smul.addr %s165, 32
        %s167 = smul.addr %s166, 8
        %s168 = scalar_lea.vmem %s0, %s167
        %vm169 = vcmask 31744
        %170 = vst.msk [vmem:[#allocation2] sm:$0xff] %vm169, 0.0
        %171 = vst.msk [vmem:[#allocation2 + $0x8] sm:$0xff] %vm169, 0.0
        %vm172 = vcmask 25600
        %173 = vst.msk [vmem:[#allocation2 + $0x10] sm:$0x3] %vm172, 0.0
        %174 = vst.msk [vmem:[#allocation2 + $0x18] sm:$0xff] %vm169, 0.0
        %175 = vst.msk [vmem:[#allocation2 + $0x20] sm:$0xff] %vm169, 0.0
        %176 = vst.msk [vmem:[#allocation2 + $0x28] sm:$0x3] %vm172, 0.0
        %177 = vst.msk [vmem:[#allocation2 + $0x30] sm:$0xff] %vm169, 0.0
        %178 = vst.msk [vmem:[#allocation2 + $0x38] sm:$0xff] %vm169, 0.0
        %179 = vst.msk [vmem:[#allocation2 + $0x40] sm:$0x3] %vm172, 0.0
        %180 = vst.msk [vmem:[#allocation2 + $0x48] sm:$0xff] %vm169, 0.0
        %181 = vst.msk [vmem:[#allocation2 + $0x50] sm:$0xff] %vm169, 0.0
        %182 = vst.msk [vmem:[#allocation2 + $0x58] sm:$0x3] %vm172, 0.0
        %183 = vst.msk [vmem:[#allocation2 + $0x60] sm:$0xff] %vm169, 0.0
        %184 = vst.msk [vmem:[#allocation2 + $0x68] sm:$0xff] %vm169, 0.0
        %185 = vst.msk [vmem:[#allocation2 + $0x70] sm:$0x3] %vm172, 0.0
        %186 = vst.msk [vmem:[#allocation2 + $0x78] sm:$0xff] %vm169, 0.0
        %187 = vst.msk [vmem:[#allocation2 + $0x80] sm:$0xff] %vm169, 0.0
        %188 = vst.msk [vmem:[#allocation2 + $0x88] sm:$0x3] %vm172, 0.0
        %189 = vst.msk [vmem:[#allocation2 + $0x90] sm:$0xff] %vm169, 0.0
        %190 = vst.msk [vmem:[#allocation2 + $0x98] sm:$0xff] %vm169, 0.0
        %191 = vst.msk [vmem:[#allocation2 + $0xa0] sm:$0x3] %vm172, 0.0
        %192 = vst.msk [vmem:[#allocation2 + $0xa8] sm:$0xff] %vm169, 0.0
        %193 = vst.msk [vmem:[#allocation2 + $0xb0] sm:$0xff] %vm169, 0.0
        %194 = vst.msk [vmem:[#allocation2 + $0xb8] sm:$0x3] %vm172, 0.0
        %195 = vst.msk [vmem:[#allocation2 + $0xc0] sm:$0xff] %vm169, 0.0
        %196 = vst.msk [vmem:[#allocation2 + $0xc8] sm:$0xff] %vm169, 0.0
        %197 = vst.msk [vmem:[#allocation2 + $0xd0] sm:$0x3] %vm172, 0.0
        %198 = vst.msk [vmem:[#allocation2 + $0xd8] sm:$0xff] %vm169, 0.0
        %199 = vst.msk [vmem:[#allocation2 + $0xe0] sm:$0xff] %vm169, 0.0
        %200 = vst.msk [vmem:[#allocation2 + $0xe8] sm:$0x3] %vm172, 0.0
        %201 = vst.msk [vmem:[#allocation2 + $0xf0] sm:$0xff] %vm169, 0.0
        %202 = vst.msk [vmem:[#allocation2 + $0xf8] sm:$0xff] %vm169, 0.0
        %203 = vst.msk [vmem:[#allocation2 + $0x100] sm:$0x3] %vm172, 0.0
        %204 = vst.msk [vmem:[#allocation2 + $0x108] sm:$0xff] %vm169, 0.0
        %205 = vst.msk [vmem:[#allocation2 + $0x110] sm:$0xff] %vm169, 0.0
        %206 = vst.msk [vmem:[#allocation2 + $0x118] sm:$0x3] %vm172, 0.0
        %207 = vst.msk [vmem:[#allocation2 + $0x120] sm:$0xff] %vm169, 0.0
        %208 = vst.msk [vmem:[#allocation2 + $0x128] sm:$0xff] %vm169, 0.0
        %209 = vst.msk [vmem:[#allocation2 + $0x130] sm:$0x3] %vm172, 0.0
        %210 = vst.msk [vmem:[#allocation2 + $0x138] sm:$0xff] %vm169, 0.0
        %211 = vst.msk [vmem:[#allocation2 + $0x140] sm:$0xff] %vm169, 0.0
        %212 = vst.msk [vmem:[#allocation2 + $0x148] sm:$0x3] %vm172, 0.0
        %213 = vst.msk [vmem:[#allocation2 + $0x150] sm:$0xff] %vm169, 0.0
        %214 = vst.msk [vmem:[#allocation2 + $0x158] sm:$0xff] %vm169, 0.0
        %215 = vst.msk [vmem:[#allocation2 + $0x160] sm:$0x3] %vm172, 0.0
        %216 = vst.msk [vmem:[#allocation2 + $0x168] sm:$0xff] %vm169, 0.0
        %217 = vst.msk [vmem:[#allocation2 + $0x170] sm:$0xff] %vm169, 0.0
        %218 = vst.msk [vmem:[#allocation2 + $0x178] sm:$0x3] %vm172, 0.0
        %219 = vst.msk [vmem:[#allocation2 + $0x180] sm:$0xff] %vm169, 0.0
        %220 = vst.msk [vmem:[#allocation2 + $0x188] sm:$0xff] %vm169, 0.0
        %221 = vst.msk [vmem:[#allocation2 + $0x190] sm:$0x3] %vm172, 0.0
        %222 = vst.msk [vmem:[#allocation2 + $0x198] sm:$0xff] %vm169, 0.0
        %223 = vst.msk [vmem:[#allocation2 + $0x1a0] sm:$0xff] %vm169, 0.0
        %224 = vst.msk [vmem:[#allocation2 + $0x1a8] sm:$0x3] %vm172, 0.0
        %v225 = vld [vmem:[%s168] sm:$0xff]
        %v226 = vld [vmem:[%s168 + $0x8] sm:$0xff]
        %v227 = vld [vmem:[%s168 + $0x10] sm:$0xff]
        %v228 = vld [vmem:[%s168 + $0x18] sm:$0xff]
        %v229 = vld [vmem:[%s168 + $0x20] sm:$0xff]
        %v230 = vld [vmem:[%s168 + $0x28] sm:$0xff]
        %v231 = vld [vmem:[%s168 + $0x30] sm:$0xff]
        %v232 = vld [vmem:[%s168 + $0x38] sm:$0xff]
        %v233 = vld [vmem:[%s168 + $0x40] sm:$0xff]
        %v234 = vld [vmem:[%s168 + $0x48] sm:$0xff]
        %v235 = vld [vmem:[%s168 + $0x50] sm:$0xff]
        %v236 = vld [vmem:[%s168 + $0x58] sm:$0xff]
        %v237 = vld [vmem:[%s168 + $0x60] sm:$0xff]
        %v238 = vld [vmem:[%s168 + $0x68] sm:$0xff]
        %v239 = vld [vmem:[%s168 + $0x70] sm:$0xff]
        %v240 = vld [vmem:[%s168 + $0x78] sm:$0xff]
        %v241 = vld [vmem:[%s168 + $0x80] sm:$0xff]
        %v242 = vld [vmem:[%s168 + $0x88] sm:$0xff]
        %v243 = vld [vmem:[%s168 + $0x90] sm:$0xff]
        %v244 = vld [vmem:[%s168 + $0x98] sm:$0xff]
        %v245 = vld [vmem:[%s168 + $0xa0] sm:$0xff]
        %v246 = vld [vmem:[%s168 + $0xa8] sm:$0xff]
        %v247 = vld [vmem:[%s168 + $0xb0] sm:$0xff]
        %v248 = vld [vmem:[%s168 + $0xb8] sm:$0xff]
        %v249 = vld [vmem:[%s168 + $0xc0] sm:$0xff]
        %v250 = vld [vmem:[%s168 + $0xc8] sm:$0xff]
        %v251 = vld [vmem:[%s168 + $0xd0] sm:$0xff]
        %v252 = vld [vmem:[%s168 + $0xd8] sm:$0xff]
        %v253 = vld [vmem:[%s168 + $0xe0] sm:$0xff]
        %v254 = vld [vmem:[%s168 + $0xe8] sm:$0xff]
        %v255 = vld [vmem:[%s168 + $0xf0] sm:$0xff]
        %v256 = vld [vmem:[%s168 + $0xf8] sm:$0xff]
        %s257 = scalar_lea.vmem [#allocation2], 24
        %258 = vst.msk [vmem:[%s257 + $0x1] sm:$0xff] %vm169, %v225
        %259 = vst.msk [vmem:[%s257 + $0x9] sm:$0xff] %vm169, %v226
        %260 = vst.msk [vmem:[%s257 + $0x19] sm:$0xff] %vm169, %v227
        %261 = vst.msk [vmem:[%s257 + $0x21] sm:$0xff] %vm169, %v228
        %262 = vst.msk [vmem:[%s257 + $0x31] sm:$0xff] %vm169, %v229
        %263 = vst.msk [vmem:[%s257 + $0x39] sm:$0xff] %vm169, %v230
        %264 = vst.msk [vmem:[%s257 + $0x49] sm:$0xff] %vm169, %v231
        %265 = vst.msk [vmem:[%s257 + $0x51] sm:$0xff] %vm169, %v232
        %266 = vst.msk [vmem:[%s257 + $0x61] sm:$0xff] %vm169, %v233
        %267 = vst.msk [vmem:[%s257 + $0x69] sm:$0xff] %vm169, %v234
        %268 = vst.msk [vmem:[%s257 + $0x79] sm:$0xff] %vm169, %v235
        %269 = vst.msk [vmem:[%s257 + $0x81] sm:$0xff] %vm169, %v236
        %270 = vst.msk [vmem:[%s257 + $0x91] sm:$0xff] %vm169, %v237
        %271 = vst.msk [vmem:[%s257 + $0x99] sm:$0xff] %vm169, %v238
        %272 = vst.msk [vmem:[%s257 + $0xa9] sm:$0xff] %vm169, %v239
        %273 = vst.msk [vmem:[%s257 + $0xb1] sm:$0xff] %vm169, %v240
        %274 = vst.msk [vmem:[%s257 + $0xc1] sm:$0xff] %vm169, %v241
        %275 = vst.msk [vmem:[%s257 + $0xc9] sm:$0xff] %vm169, %v242
        %276 = vst.msk [vmem:[%s257 + $0xd9] sm:$0xff] %vm169, %v243
        %277 = vst.msk [vmem:[%s257 + $0xe1] sm:$0xff] %vm169, %v244
        %278 = vst.msk [vmem:[%s257 + $0xf1] sm:$0xff] %vm169, %v245
        %279 = vst.msk [vmem:[%s257 + $0xf9] sm:$0xff] %vm169, %v246
        %280 = vst.msk [vmem:[%s257 + $0x109] sm:$0xff] %vm169, %v247
        %281 = vst.msk [vmem:[%s257 + $0x111] sm:$0xff] %vm169, %v248
        %282 = vst.msk [vmem:[%s257 + $0x121] sm:$0xff] %vm169, %v249
        %283 = vst.msk [vmem:[%s257 + $0x129] sm:$0xff] %vm169, %v250
        %284 = vst.msk [vmem:[%s257 + $0x139] sm:$0xff] %vm169, %v251
        %285 = vst.msk [vmem:[%s257 + $0x141] sm:$0xff] %vm169, %v252
        %286 = vst.msk [vmem:[%s257 + $0x151] sm:$0xff] %vm169, %v253
        %287 = vst.msk [vmem:[%s257 + $0x159] sm:$0xff] %vm169, %v254
        %288 = vst.msk [vmem:[%s257 + $0x169] sm:$0xff] %vm169, %v255
        %289 = vst.msk [vmem:[%s257 + $0x171] sm:$0xff] %vm169, %v256
        %v290 = vld [vmem:[#allocation2] sm:$0xff]
        %v291 = vld [vmem:[#allocation2 + $0x8] sm:$0xff]
        %v292 = vld [vmem:[#allocation2 + $0x18] sm:$0xff]
        %v293 = vld [vmem:[#allocation2 + $0x20] sm:$0xff]
        %v294 = vld [vmem:[#allocation2 + $0x30] sm:$0xff]
        %v295 = vld [vmem:[#allocation2 + $0x38] sm:$0xff]
        %v296 = vld [vmem:[#allocation2 + $0x48] sm:$0xff]
        %v297 = vld [vmem:[#allocation2 + $0x50] sm:$0xff]
        %v298 = vld [vmem:[#allocation2 + $0x60] sm:$0xff]
        %v299 = vld [vmem:[#allocation2 + $0x68] sm:$0xff]
        %v300 = vld [vmem:[#allocation2 + $0x78] sm:$0xff]
        %v301 = vld [vmem:[#allocation2 + $0x80] sm:$0xff]
        %v302 = vld [vmem:[#allocation2 + $0x90] sm:$0xff]
        %v303 = vld [vmem:[#allocation2 + $0x98] sm:$0xff]
        %v304 = vld [vmem:[#allocation2 + $0xa8] sm:$0xff]
        %v305 = vld [vmem:[#allocation2 + $0xb0] sm:$0xff]
        %v306 = vld [vmem:[#allocation2 + $0xc0] sm:$0xff]
        %v307 = vld [vmem:[#allocation2 + $0xc8] sm:$0xff]
        %v308 = vld [vmem:[#allocation2 + $0xd8] sm:$0xff]
        %v309 = vld [vmem:[#allocation2 + $0xe0] sm:$0xff]
        %v310 = vld [vmem:[#allocation2 + $0xf0] sm:$0xff]
        %v311 = vld [vmem:[#allocation2 + $0xf8] sm:$0xff]
        %v312 = vld [vmem:[#allocation2 + $0x108] sm:$0xff]
        %v313 = vld [vmem:[#allocation2 + $0x110] sm:$0xff]
        %v314 = vld [vmem:[#allocation2 + $0x120] sm:$0xff]
        %v315 = vld [vmem:[#allocation2 + $0x128] sm:$0xff]
        %v316 = vld [vmem:[#allocation2 + $0x138] sm:$0xff]
        %v317 = vld [vmem:[#allocation2 + $0x140] sm:$0xff]
        %v318 = vld [vmem:[#allocation2 + $0x150] sm:$0xff]
        %v319 = vld [vmem:[#allocation2 + $0x158] sm:$0xff]
        %v320 = vld [vmem:[#allocation2 + $0x168] sm:$0xff]
        %v321 = vld [vmem:[#allocation2 + $0x170] sm:$0xff]
        %v322 = vld [vmem:[%s1] sm:$0xf]
        %v323 = vld [vmem:[#allocation2 + $0x1] sm:$0xff]
        %v324 = vld [vmem:[#allocation2 + $0x9] sm:$0xff]
        %v325 = vld [vmem:[#allocation2 + $0x19] sm:$0xff]
        %v326 = vld [vmem:[#allocation2 + $0x21] sm:$0xff]
        %v327 = vld [vmem:[#allocation2 + $0x31] sm:$0xff]
        %v328 = vld [vmem:[#allocation2 + $0x39] sm:$0xff]
        %v329 = vld [vmem:[#allocation2 + $0x49] sm:$0xff]
        %v330 = vld [vmem:[#allocation2 + $0x51] sm:$0xff]
        %v331 = vld [vmem:[#allocation2 + $0x61] sm:$0xff]
        %v332 = vld [vmem:[#allocation2 + $0x69] sm:$0xff]
        %v333 = vld [vmem:[#allocation2 + $0x79] sm:$0xff]
        %v334 = vld [vmem:[#allocation2 + $0x81] sm:$0xff]
        %v335 = vld [vmem:[#allocation2 + $0x91] sm:$0xff]
        %v336 = vld [vmem:[#allocation2 + $0x99] sm:$0xff]
        %v337 = vld [vmem:[#allocation2 + $0xa9] sm:$0xff]
        %v338 = vld [vmem:[#allocation2 + $0xb1] sm:$0xff]
        %v339 = vld [vmem:[#allocation2 + $0xc1] sm:$0xff]
        %v340 = vld [vmem:[#allocation2 + $0xc9] sm:$0xff]
        %v341 = vld [vmem:[#allocation2 + $0xd9] sm:$0xff]
        %v342 = vld [vmem:[#allocation2 + $0xe1] sm:$0xff]
        %v343 = vld [vmem:[#allocation2 + $0xf1] sm:$0xff]
        %v344 = vld [vmem:[#allocation2 + $0xf9] sm:$0xff]
        %v345 = vld [vmem:[#allocation2 + $0x109] sm:$0xff]
        %v346 = vld [vmem:[#allocation2 + $0x111] sm:$0xff]
        %v347 = vld [vmem:[#allocation2 + $0x121] sm:$0xff]
        %v348 = vld [vmem:[#allocation2 + $0x129] sm:$0xff]
        %v349 = vld [vmem:[#allocation2 + $0x139] sm:$0xff]
        %v350 = vld [vmem:[#allocation2 + $0x141] sm:$0xff]
        %v351 = vld [vmem:[#allocation2 + $0x151] sm:$0xff]
        %v352 = vld [vmem:[#allocation2 + $0x159] sm:$0xff]
        %v353 = vld [vmem:[#allocation2 + $0x169] sm:$0xff]
        %v354 = vld [vmem:[#allocation2 + $0x171] sm:$0xff]
        %s355 = scalar_lea.vmem %s1, 4
        %v356 = vld [vmem:[%s355] sm:$0xf]
        %v358 = vsel %vm169, %v323, 0
        %v361 = vsel %vm169, %v324, 0
        %v364 = vsel %vm169, %v325, 0
        %v367 = vsel %vm169, %v326, 0
        %v370 = vsel %vm169, %v327, 0
        %v373 = vsel %vm169, %v328, 0
        %v376 = vsel %vm169, %v329, 0
        %v379 = vsel %vm169, %v330, 0
        %v382 = vsel %vm169, %v331, 0
        %v385 = vsel %vm169, %v332, 0
        %v388 = vsel %vm169, %v333, 0
        %v391 = vsel %vm169, %v334, 0
        %v394 = vsel %vm169, %v335, 0
        %v397 = vsel %vm169, %v336, 0
        %v400 = vsel %vm169, %v337, 0
        %v403 = vsel %vm169, %v338, 0
        %v406 = vsel %vm169, %v339, 0
        %v409 = vsel %vm169, %v340, 0
        %v412 = vsel %vm169, %v341, 0
        %v415 = vsel %vm169, %v342, 0
        %v418 = vsel %vm169, %v343, 0
        %v421 = vsel %vm169, %v344, 0
        %v424 = vsel %vm169, %v345, 0
        %v427 = vsel %vm169, %v346, 0
        %v430 = vsel %vm169, %v347, 0
        %v433 = vsel %vm169, %v348, 0
        %v436 = vsel %vm169, %v349, 0
        %v439 = vsel %vm169, %v350, 0
        %v442 = vsel %vm169, %v351, 0
        %v445 = vsel %vm169, %v352, 0
        %v448 = vsel %vm169, %v353, 0
        %v451 = vsel %vm169, %v354, 0
        %vm453 = vcmask 1043456
        %v455 = vsel %vm453, %v356, 0
        %457 = vmatprep.subr.mxu0 0.0
        %458 = vmatpush1.msra.mxu0 %v455
        %459 = vmatprep.subr.mxu0 0.0
        %460 = vmatpush1.msra.mxu0 0.0
        %461 = vmatprep.subr.mxu0 0.0
        %462 = vmatpush1.msra.mxu0 0.0
        %463 = vmatprep.subr.mxu0 0.0
        %464 = vmatpush1.msra.mxu0 0.0
        %465 = vmatprep.subr.mxu0 0.0
        %466 = vmatpush1.msra.mxu0 0.0
        %467 = vmatprep.subr.mxu0 0.0
        %468 = vmatpush1.msra.mxu0 0.0
        %469 = vmatprep.subr.mxu0 0.0
        %470 = vmatpush1.msra.mxu0 0.0
        %471 = vmatprep.subr.mxu0 0.0
        %472 = vmatpush1.msra.mxu0 0.0
        %473 = vmatprep.subr.mxu0 0.0
        %474 = vmatpush1.msra.mxu0 0.0
        %475 = vmatprep.subr.mxu0 0.0
        %476 = vmatpush1.msra.mxu0 0.0
        %477 = vmatprep.subr.mxu0 0.0
        %478 = vmatpush1.msra.mxu0 0.0
        %479 = vmatprep.subr.mxu0 0.0
        %480 = vmatpush1.msra.mxu0 0.0
        %481 = vmatprep.subr.mxu0 0.0
        %482 = vmatpush1.msra.mxu0 0.0
        %483 = vmatprep.subr.mxu0 0.0
        %484 = vmatpush1.msra.mxu0 0.0
        %485 = vmatprep.subr.mxu0 0.0
        %486 = vmatpush1.msra.mxu0 0.0
        %487 = vmatprep.subr.mxu0 0.0
        %488 = vmatpush1.msra.mxu0 0.0
        %489 = vmatprep.subr.mxu0 0.0
        %490 = vmatpush1.msra.mxu0 0.0
        %491 = vmatprep.subr.mxu0 0.0
        %492 = vmatpush1.msra.mxu0 0.0
        %493 = vmatprep.subr.mxu0 0.0
        %494 = vmatpush1.msra.mxu0 0.0
        %495 = vmatprep.subr.mxu0 0.0
        %496 = vmatpush1.msra.mxu0 0.0
        %497 = vmatprep.subr.mxu0 0.0
        %498 = vmatpush1.msra.mxu0 0.0
        %499 = vmatprep.subr.mxu0 0.0
        %500 = vmatpush1.msra.mxu0 0.0
        %501 = vmatprep.subr.mxu0 0.0
        %502 = vmatpush1.msra.mxu0 0.0
        %503 = vmatprep.subr.mxu0 0.0
        %504 = vmatpush1.msra.mxu0 0.0
        %505 = vmatprep.subr.mxu0 0.0
        %506 = vmatpush1.msra.mxu0 0.0
        %507 = vmatprep.subr.mxu0 0.0
        %508 = vmatpush1.msra.mxu0 0.0
        %509 = vmatprep.subr.mxu0 0.0
        %510 = vmatpush1.msra.mxu0 0.0
        %511 = vmatprep.subr.mxu0 0.0
        %512 = vmatpush1.msra.mxu0 0.0
        %513 = vmatprep.subr.mxu0 0.0
        %514 = vmatpush1.msra.mxu0 0.0
        %515 = vmatprep.subr.mxu0 0.0
        %516 = vmatpush1.msra.mxu0 0.0
        %517 = vmatprep.subr.mxu0 0.0
        %518 = vmatpush1.msra.mxu0 0.0
        %519 = vmatprep.subr.mxu0 0.0
        %520 = vmatpush1.msra.mxu0 0.0
        %521 = vmatprep.mubr.f32.mxu0 0.0
        %522 = vmatmul.mubr.f32.gmra.mrb[0].mxu0 %v358
        %v523 = vpop.f32.mrb[0].mxu0
        %v524 = vadd.f32 0.0, %v523
        %v525 = vpop.f32.mrb[0].mxu0
        %526 = vmatprep.mubr.f32.mxu0 0.0
        %527 = vmatmul.mubr.f32.gmra.mrb[0].mxu0 %v361
        %v528 = vpop.f32.mrb[0].mxu0
        %v529 = vadd.f32 0.0, %v528
        %v530 = vpop.f32.mrb[0].mxu0
        %531 = vmatprep.mubr.f32.mxu0 0.0
        %532 = vmatmul.mubr.f32.gmra.mrb[0].mxu0 %v364
        %v533 = vpop.f32.mrb[0].mxu0
        %v534 = vadd.f32 0.0, %v533
        %v535 = vpop.f32.mrb[0].mxu0
        %536 = vmatprep.mubr.f32.mxu0 0.0
        %537 = vmatmul.mubr.f32.gmra.mrb[0].mxu0 %v367
        %v538 = vpop.f32.mrb[0].mxu0
        %v539 = vadd.f32 0.0, %v538
        %v540 = vpop.f32.mrb[0].mxu0
        %541 = vmatprep.mubr.f32.mxu0 0.0
        %542 = vmatmul.mubr.f32.gmra.mrb[0].mxu0 %v370
        %v543 = vpop.f32.mrb[0].mxu0
        %v544 = vadd.f32 0.0, %v543
        %v545 = vpop.f32.mrb[0].mxu0
        %546 = vmatprep.mubr.f32.mxu0 0.0
        %547 = vmatmul.mubr.f32.gmra.mrb[0].mxu0 %v373
        %v548 = vpop.f32.mrb[0].mxu0
        %v549 = vadd.f32 0.0, %v548
        %v550 = vpop.f32.mrb[0].mxu0
        %551 = vmatprep.mubr.f32.mxu0 0.0
        %552 = vmatmul.mubr.f32.gmra.mrb[0].mxu0 %v376
        %v553 = vpop.f32.mrb[0].mxu0
        %v554 = vadd.f32 0.0, %v553
        %v555 = vpop.f32.mrb[0].mxu0
        %556 = vmatprep.mubr.f32.mxu0 0.0
        %557 = vmatmul.mubr.f32.gmra.mrb[0].mxu0 %v379
        %v558 = vpop.f32.mrb[0].mxu0
        %v559 = vadd.f32 0.0, %v558
        %v560 = vpop.f32.mrb[0].mxu0
        %561 = vmatprep.mubr.f32.mxu0 0.0
        %562 = vmatmul.mubr.f32.gmra.mrb[0].mxu0 %v382
        %v563 = vpop.f32.mrb[0].mxu0
        %v564 = vadd.f32 0.0, %v563
        %v565 = vpop.f32.mrb[0].mxu0
        %566 = vmatprep.mubr.f32.mxu0 0.0
        %567 = vmatmul.mubr.f32.gmra.mrb[0].mxu0 %v385
        %v568 = vpop.f32.mrb[0].mxu0
        %v569 = vadd.f32 0.0, %v568
        %v570 = vpop.f32.mrb[0].mxu0
        %571 = vmatprep.mubr.f32.mxu0 0.0
        %572 = vmatmul.mubr.f32.gmra.mrb[0].mxu0 %v388
        %v573 = vpop.f32.mrb[0].mxu0
        %v574 = vadd.f32 0.0, %v573
        %v575 = vpop.f32.mrb[0].mxu0
        %576 = vmatprep.mubr.f32.mxu0 0.0
        %577 = vmatmul.mubr.f32.gmra.mrb[0].mxu0 %v391
        %v578 = vpop.f32.mrb[0].mxu0
        %v579 = vadd.f32 0.0, %v578
        %v580 = vpop.f32.mrb[0].mxu0
        %581 = vmatprep.mubr.f32.mxu0 0.0
        %582 = vmatmul.mubr.f32.gmra.mrb[0].mxu0 %v394
        %v583 = vpop.f32.mrb[0].mxu0
        %v584 = vadd.f32 0.0, %v583
        %v585 = vpop.f32.mrb[0].mxu0
        %586 = vmatprep.mubr.f32.mxu0 0.0
        %587 = vmatmul.mubr.f32.gmra.mrb[0].mxu0 %v397
        %v588 = vpop.f32.mrb[0].mxu0
        %v589 = vadd.f32 0.0, %v588
        %v590 = vpop.f32.mrb[0].mxu0
        %591 = vmatprep.mubr.f32.mxu0 0.0
        %592 = vmatmul.mubr.f32.gmra.mrb[0].mxu0 %v400
        %v593 = vpop.f32.mrb[0].mxu0
        %v594 = vadd.f32 0.0, %v593
        %v595 = vpop.f32.mrb[0].mxu0
        %596 = vmatprep.mubr.f32.mxu0 0.0
        %597 = vmatmul.mubr.f32.gmra.mrb[0].mxu0 %v403
        %v598 = vpop.f32.mrb[0].mxu0
        %v599 = vadd.f32 0.0, %v598
        %v600 = vpop.f32.mrb[0].mxu0
        %601 = vmatprep.mubr.f32.mxu0 0.0
        %602 = vmatmul.mubr.f32.gmra.mrb[0].mxu0 %v406
        %v603 = vpop.f32.mrb[0].mxu0
        %v604 = vadd.f32 0.0, %v603
        %v605 = vpop.f32.mrb[0].mxu0
        %606 = vmatprep.mubr.f32.mxu0 0.0
        %607 = vmatmul.mubr.f32.gmra.mrb[0].mxu0 %v409
        %v608 = vpop.f32.mrb[0].mxu0
        %v609 = vadd.f32 0.0, %v608
        %v610 = vpop.f32.mrb[0].mxu0
        %611 = vmatprep.mubr.f32.mxu0 0.0
        %612 = vmatmul.mubr.f32.gmra.mrb[0].mxu0 %v412
        %v613 = vpop.f32.mrb[0].mxu0
        %v614 = vadd.f32 0.0, %v613
        %v615 = vpop.f32.mrb[0].mxu0
        %616 = vmatprep.mubr.f32.mxu0 0.0
        %617 = vmatmul.mubr.f32.gmra.mrb[0].mxu0 %v415
        %v618 = vpop.f32.mrb[0].mxu0
        %v619 = vadd.f32 0.0, %v618
        %v620 = vpop.f32.mrb[0].mxu0
        %621 = vmatprep.mubr.f32.mxu0 0.0
        %622 = vmatmul.mubr.f32.gmra.mrb[0].mxu0 %v418
        %v623 = vpop.f32.mrb[0].mxu0
        %v624 = vadd.f32 0.0, %v623
        %v625 = vpop.f32.mrb[0].mxu0
        %626 = vmatprep.mubr.f32.mxu0 0.0
        %627 = vmatmul.mubr.f32.gmra.mrb[0].mxu0 %v421
        %v628 = vpop.f32.mrb[0].mxu0
        %v629 = vadd.f32 0.0, %v628
        %v630 = vpop.f32.mrb[0].mxu0
        %631 = vmatprep.mubr.f32.mxu0 0.0
        %632 = vmatmul.mubr.f32.gmra.mrb[0].mxu0 %v424
        %v633 = vpop.f32.mrb[0].mxu0
        %v634 = vadd.f32 0.0, %v633
        %v635 = vpop.f32.mrb[0].mxu0
        %636 = vmatprep.mubr.f32.mxu0 0.0
        %637 = vmatmul.mubr.f32.gmra.mrb[0].mxu0 %v427
        %v638 = vpop.f32.mrb[0].mxu0
        %v639 = vadd.f32 0.0, %v638
        %v640 = vpop.f32.mrb[0].mxu0
        %641 = vmatprep.mubr.f32.mxu0 0.0
        %642 = vmatmul.mubr.f32.gmra.mrb[0].mxu0 %v430
        %v643 = vpop.f32.mrb[0].mxu0
        %v644 = vadd.f32 0.0, %v643
        %v645 = vpop.f32.mrb[0].mxu0
        %646 = vmatprep.mubr.f32.mxu0 0.0
        %647 = vmatmul.mubr.f32.gmra.mrb[0].mxu0 %v433
        %v648 = vpop.f32.mrb[0].mxu0
        %v649 = vadd.f32 0.0, %v648
        %v650 = vpop.f32.mrb[0].mxu0
        %651 = vmatprep.mubr.f32.mxu0 0.0
        %652 = vmatmul.mubr.f32.gmra.mrb[0].mxu0 %v436
        %v653 = vpop.f32.mrb[0].mxu0
        %v654 = vadd.f32 0.0, %v653
        %v655 = vpop.f32.mrb[0].mxu0
        %656 = vmatprep.mubr.f32.mxu0 0.0
        %657 = vmatmul.mubr.f32.gmra.mrb[0].mxu0 %v439
        %v658 = vpop.f32.mrb[0].mxu0
        %v659 = vadd.f32 0.0, %v658
        %v660 = vpop.f32.mrb[0].mxu0
        %661 = vmatprep.mubr.f32.mxu0 0.0
        %662 = vmatmul.mubr.f32.gmra.mrb[0].mxu0 %v442
        %v663 = vpop.f32.mrb[0].mxu0
        %v664 = vadd.f32 0.0, %v663
        %v665 = vpop.f32.mrb[0].mxu0
        %666 = vmatprep.mubr.f32.mxu0 0.0
        %667 = vmatmul.mubr.f32.gmra.mrb[0].mxu0 %v445
        %v668 = vpop.f32.mrb[0].mxu0
        %v669 = vadd.f32 0.0, %v668
        %v670 = vpop.f32.mrb[0].mxu0
        %671 = vmatprep.mubr.f32.mxu0 0.0
        %672 = vmatmul.mubr.f32.gmra.mrb[0].mxu0 %v448
        %v673 = vpop.f32.mrb[0].mxu0
        %v674 = vadd.f32 0.0, %v673
        %v675 = vpop.f32.mrb[0].mxu0
        %676 = vmatprep.mubr.f32.mxu0 0.0
        %677 = vmatmul.mubr.f32.gmra.mrb[0].mxu0 %v451
        %v678 = vpop.f32.mrb[0].mxu0
        %v679 = vadd.f32 0.0, %v678
        %v680 = vpop.f32.mrb[0].mxu0
        %681 = vdwg.mxu0
        %v683 = vsel %vm169, %v290, 0
        %v686 = vsel %vm169, %v291, 0
        %v689 = vsel %vm169, %v292, 0
        %v692 = vsel %vm169, %v293, 0
        %v695 = vsel %vm169, %v294, 0
        %v698 = vsel %vm169, %v295, 0
        %v701 = vsel %vm169, %v296, 0
        %v704 = vsel %vm169, %v297, 0
        %v707 = vsel %vm169, %v298, 0
        %v710 = vsel %vm169, %v299, 0
        %v713 = vsel %vm169, %v300, 0
        %v716 = vsel %vm169, %v301, 0
        %v719 = vsel %vm169, %v302, 0
        %v722 = vsel %vm169, %v303, 0
        %v725 = vsel %vm169, %v304, 0
        %v728 = vsel %vm169, %v305, 0
        %v731 = vsel %vm169, %v306, 0
        %v734 = vsel %vm169, %v307, 0
        %v737 = vsel %vm169, %v308, 0
        %v740 = vsel %vm169, %v309, 0
        %v743 = vsel %vm169, %v310, 0
        %v746 = vsel %vm169, %v311, 0
        %v749 = vsel %vm169, %v312, 0
        %v752 = vsel %vm169, %v313, 0
        %v755 = vsel %vm169, %v314, 0
        %v758 = vsel %vm169, %v315, 0
        %v761 = vsel %vm169, %v316, 0
        %v764 = vsel %vm169, %v317, 0
        %v767 = vsel %vm169, %v318, 0
        %v770 = vsel %vm169, %v319, 0
        %v773 = vsel %vm169, %v320, 0
        %v776 = vsel %vm169, %v321, 0
        %v779 = vsel %vm453, %v322, 0
        %781 = vmatprep.subr.mxu0 0.0
        %782 = vmatpush1.msra.mxu0 %v779
        %783 = vmatprep.subr.mxu0 0.0
        %784 = vmatpush1.msra.mxu0 0.0
        %785 = vmatprep.subr.mxu0 0.0
        %786 = vmatpush1.msra.mxu0 0.0
        %787 = vmatprep.subr.mxu0 0.0
        %788 = vmatpush1.msra.mxu0 0.0
        %789 = vmatprep.subr.mxu0 0.0
        %790 = vmatpush1.msra.mxu0 0.0
        %791 = vmatprep.subr.mxu0 0.0
        %792 = vmatpush1.msra.mxu0 0.0
        %793 = vmatprep.subr.mxu0 0.0
        %794 = vmatpush1.msra.mxu0 0.0
        %795 = vmatprep.subr.mxu0 0.0
        %796 = vmatpush1.msra.mxu0 0.0
        %797 = vmatprep.subr.mxu0 0.0
        %798 = vmatpush1.msra.mxu0 0.0
        %799 = vmatprep.subr.mxu0 0.0
        %800 = vmatpush1.msra.mxu0 0.0
        %801 = vmatprep.subr.mxu0 0.0
        %802 = vmatpush1.msra.mxu0 0.0
        %803 = vmatprep.subr.mxu0 0.0
        %804 = vmatpush1.msra.mxu0 0.0
        %805 = vmatprep.subr.mxu0 0.0
        %806 = vmatpush1.msra.mxu0 0.0
        %807 = vmatprep.subr.mxu0 0.0
        %808 = vmatpush1.msra.mxu0 0.0
        %809 = vmatprep.subr.mxu0 0.0
        %810 = vmatpush1.msra.mxu0 0.0
        %811 = vmatprep.subr.mxu0 0.0
        %812 = vmatpush1.msra.mxu0 0.0
        %813 = vmatprep.subr.mxu0 0.0
        %814 = vmatpush1.msra.mxu0 0.0
        %815 = vmatprep.subr.mxu0 0.0
        %816 = vmatpush1.msra.mxu0 0.0
        %817 = vmatprep.subr.mxu0 0.0
        %818 = vmatpush1.msra.mxu0 0.0
        %819 = vmatprep.subr.mxu0 0.0
        %820 = vmatpush1.msra.mxu0 0.0
        %821 = vmatprep.subr.mxu0 0.0
        %822 = vmatpush1.msra.mxu0 0.0
        %823 = vmatprep.subr.mxu0 0.0
        %824 = vmatpush1.msra.mxu0 0.0
        %825 = vmatprep.subr.mxu0 0.0
        %826 = vmatpush1.msra.mxu0 0.0
        %827 = vmatprep.subr.mxu0 0.0
        %828 = vmatpush1.msra.mxu0 0.0
        %829 = vmatprep.subr.mxu0 0.0
        %830 = vmatpush1.msra.mxu0 0.0
        %831 = vmatprep.subr.mxu0 0.0
        %832 = vmatpush1.msra.mxu0 0.0
        %833 = vmatprep.subr.mxu0 0.0
        %834 = vmatpush1.msra.mxu0 0.0
        %835 = vmatprep.subr.mxu0 0.0
        %836 = vmatpush1.msra.mxu0 0.0
        %837 = vmatprep.subr.mxu0 0.0
        %838 = vmatpush1.msra.mxu0 0.0
        %839 = vmatprep.subr.mxu0 0.0
        %840 = vmatpush1.msra.mxu0 0.0
        %841 = vmatprep.subr.mxu0 0.0
        %842 = vmatpush1.msra.mxu0 0.0
        %843 = vmatprep.subr.mxu0 0.0
        %844 = vmatpush1.msra.mxu0 0.0
        %845 = vmatprep.mubr.f32.mxu0 0.0
        %846 = vmatmul.mubr.f32.gmra.mrb[0].mxu0 %v683
        %v847 = vpop.f32.mrb[0].mxu0
        %v848 = vadd.f32 %v524, %v847
        %v849 = vpop.f32.mrb[0].mxu0
        %850 = vmatprep.mubr.f32.mxu0 0.0
        %851 = vmatmul.mubr.f32.gmra.mrb[0].mxu0 %v686
        %v852 = vpop.f32.mrb[0].mxu0
        %v853 = vadd.f32 %v529, %v852
        %v854 = vpop.f32.mrb[0].mxu0
        %855 = vmatprep.mubr.f32.mxu0 0.0
        %856 = vmatmul.mubr.f32.gmra.mrb[0].mxu0 %v689
        %v857 = vpop.f32.mrb[0].mxu0
        %v858 = vadd.f32 %v534, %v857
        %v859 = vpop.f32.mrb[0].mxu0
        %860 = vmatprep.mubr.f32.mxu0 0.0
        %861 = vmatmul.mubr.f32.gmra.mrb[0].mxu0 %v692
        %v862 = vpop.f32.mrb[0].mxu0
        %v863 = vadd.f32 %v539, %v862
        %v864 = vpop.f32.mrb[0].mxu0
        %865 = vmatprep.mubr.f32.mxu0 0.0
        %866 = vmatmul.mubr.f32.gmra.mrb[0].mxu0 %v695
        %v867 = vpop.f32.mrb[0].mxu0
        %v868 = vadd.f32 %v544, %v867
        %v869 = vpop.f32.mrb[0].mxu0
        %870 = vmatprep.mubr.f32.mxu0 0.0
        %871 = vmatmul.mubr.f32.gmra.mrb[0].mxu0 %v698
        %v872 = vpop.f32.mrb[0].mxu0
        %v873 = vadd.f32 %v549, %v872
        %v874 = vpop.f32.mrb[0].mxu0
        %875 = vmatprep.mubr.f32.mxu0 0.0
        %876 = vmatmul.mubr.f32.gmra.mrb[0].mxu0 %v701
        %v877 = vpop.f32.mrb[0].mxu0
        %v878 = vadd.f32 %v554, %v877
        %v879 = vpop.f32.mrb[0].mxu0
        %880 = vmatprep.mubr.f32.mxu0 0.0
        %881 = vmatmul.mubr.f32.gmra.mrb[0].mxu0 %v704
        %v882 = vpop.f32.mrb[0].mxu0
        %v883 = vadd.f32 %v559, %v882
        %v884 = vpop.f32.mrb[0].mxu0
        %885 = vmatprep.mubr.f32.mxu0 0.0
        %886 = vmatmul.mubr.f32.gmra.mrb[0].mxu0 %v707
        %v887 = vpop.f32.mrb[0].mxu0
        %v888 = vadd.f32 %v564, %v887
        %v889 = vpop.f32.mrb[0].mxu0
        %890 = vmatprep.mubr.f32.mxu0 0.0
        %891 = vmatmul.mubr.f32.gmra.mrb[0].mxu0 %v710
        %v892 = vpop.f32.mrb[0].mxu0
        %v893 = vadd.f32 %v569, %v892
        %v894 = vpop.f32.mrb[0].mxu0
        %895 = vmatprep.mubr.f32.mxu0 0.0
        %896 = vmatmul.mubr.f32.gmra.mrb[0].mxu0 %v713
        %v897 = vpop.f32.mrb[0].mxu0
        %v898 = vadd.f32 %v574, %v897
        %v899 = vpop.f32.mrb[0].mxu0
        %900 = vmatprep.mubr.f32.mxu0 0.0
        %901 = vmatmul.mubr.f32.gmra.mrb[0].mxu0 %v716
        %v902 = vpop.f32.mrb[0].mxu0
        %v903 = vadd.f32 %v579, %v902
        %v904 = vpop.f32.mrb[0].mxu0
        %905 = vmatprep.mubr.f32.mxu0 0.0
        %906 = vmatmul.mubr.f32.gmra.mrb[0].mxu0 %v719
        %v907 = vpop.f32.mrb[0].mxu0
        %v908 = vadd.f32 %v584, %v907
        %v909 = vpop.f32.mrb[0].mxu0
        %910 = vmatprep.mubr.f32.mxu0 0.0
        %911 = vmatmul.mubr.f32.gmra.mrb[0].mxu0 %v722
        %v912 = vpop.f32.mrb[0].mxu0
        %v913 = vadd.f32 %v589, %v912
        %v914 = vpop.f32.mrb[0].mxu0
        %915 = vmatprep.mubr.f32.mxu0 0.0
        %916 = vmatmul.mubr.f32.gmra.mrb[0].mxu0 %v725
        %v917 = vpop.f32.mrb[0].mxu0
        %v918 = vadd.f32 %v594, %v917
        %v919 = vpop.f32.mrb[0].mxu0
        %920 = vmatprep.mubr.f32.mxu0 0.0
        %921 = vmatmul.mubr.f32.gmra.mrb[0].mxu0 %v728
        %v922 = vpop.f32.mrb[0].mxu0
        %v923 = vadd.f32 %v599, %v922
        %v924 = vpop.f32.mrb[0].mxu0
        %925 = vmatprep.mubr.f32.mxu0 0.0
        %926 = vmatmul.mubr.f32.gmra.mrb[0].mxu0 %v731
        %v927 = vpop.f32.mrb[0].mxu0
        %v928 = vadd.f32 %v604, %v927
        %v929 = vpop.f32.mrb[0].mxu0
        %930 = vmatprep.mubr.f32.mxu0 0.0
        %931 = vmatmul.mubr.f32.gmra.mrb[0].mxu0 %v734
        %v932 = vpop.f32.mrb[0].mxu0
        %v933 = vadd.f32 %v609, %v932
        %v934 = vpop.f32.mrb[0].mxu0
        %935 = vmatprep.mubr.f32.mxu0 0.0
        %936 = vmatmul.mubr.f32.gmra.mrb[0].mxu0 %v737
        %v937 = vpop.f32.mrb[0].mxu0
        %v938 = vadd.f32 %v614, %v937
        %v939 = vpop.f32.mrb[0].mxu0
        %940 = vmatprep.mubr.f32.mxu0 0.0
        %941 = vmatmul.mubr.f32.gmra.mrb[0].mxu0 %v740
        %v942 = vpop.f32.mrb[0].mxu0
        %v943 = vadd.f32 %v619, %v942
        %v944 = vpop.f32.mrb[0].mxu0
        %945 = vmatprep.mubr.f32.mxu0 0.0
        %946 = vmatmul.mubr.f32.gmra.mrb[0].mxu0 %v743
        %v947 = vpop.f32.mrb[0].mxu0
        %v948 = vadd.f32 %v624, %v947
        %v949 = vpop.f32.mrb[0].mxu0
        %950 = vmatprep.mubr.f32.mxu0 0.0
        %951 = vmatmul.mubr.f32.gmra.mrb[0].mxu0 %v746
        %v952 = vpop.f32.mrb[0].mxu0
        %v953 = vadd.f32 %v629, %v952
        %v954 = vpop.f32.mrb[0].mxu0
        %955 = vmatprep.mubr.f32.mxu0 0.0
        %956 = vmatmul.mubr.f32.gmra.mrb[0].mxu0 %v749
        %v957 = vpop.f32.mrb[0].mxu0
        %v958 = vadd.f32 %v634, %v957
        %v959 = vpop.f32.mrb[0].mxu0
        %960 = vmatprep.mubr.f32.mxu0 0.0
        %961 = vmatmul.mubr.f32.gmra.mrb[0].mxu0 %v752
        %v962 = vpop.f32.mrb[0].mxu0
        %v963 = vadd.f32 %v639, %v962
        %v964 = vpop.f32.mrb[0].mxu0
        %965 = vmatprep.mubr.f32.mxu0 0.0
        %966 = vmatmul.mubr.f32.gmra.mrb[0].mxu0 %v755
        %v967 = vpop.f32.mrb[0].mxu0
        %v968 = vadd.f32 %v644, %v967
        %v969 = vpop.f32.mrb[0].mxu0
        %970 = vmatprep.mubr.f32.mxu0 0.0
        %971 = vmatmul.mubr.f32.gmra.mrb[0].mxu0 %v758
        %v972 = vpop.f32.mrb[0].mxu0
        %v973 = vadd.f32 %v649, %v972
        %v974 = vpop.f32.mrb[0].mxu0
        %975 = vmatprep.mubr.f32.mxu0 0.0
        %976 = vmatmul.mubr.f32.gmra.mrb[0].mxu0 %v761
        %v977 = vpop.f32.mrb[0].mxu0
        %v978 = vadd.f32 %v654, %v977
        %v979 = vpop.f32.mrb[0].mxu0
        %980 = vmatprep.mubr.f32.mxu0 0.0
        %981 = vmatmul.mubr.f32.gmra.mrb[0].mxu0 %v764
        %v982 = vpop.f32.mrb[0].mxu0
        %v983 = vadd.f32 %v659, %v982
        %v984 = vpop.f32.mrb[0].mxu0
        %985 = vmatprep.mubr.f32.mxu0 0.0
        %986 = vmatmul.mubr.f32.gmra.mrb[0].mxu0 %v767
        %v987 = vpop.f32.mrb[0].mxu0
        %v988 = vadd.f32 %v664, %v987
        %v989 = vpop.f32.mrb[0].mxu0
        %990 = vmatprep.mubr.f32.mxu0 0.0
        %991 = vmatmul.mubr.f32.gmra.mrb[0].mxu0 %v770
        %v992 = vpop.f32.mrb[0].mxu0
        %v993 = vadd.f32 %v669, %v992
        %v994 = vpop.f32.mrb[0].mxu0
        %995 = vmatprep.mubr.f32.mxu0 0.0
        %996 = vmatmul.mubr.f32.gmra.mrb[0].mxu0 %v773
        %v997 = vpop.f32.mrb[0].mxu0
        %v998 = vadd.f32 %v674, %v997
        %v999 = vpop.f32.mrb[0].mxu0
        %1000 = vmatprep.mubr.f32.mxu0 0.0
        %1001 = vmatmul.mubr.f32.gmra.mrb[0].mxu0 %v776
        %v1002 = vpop.f32.mrb[0].mxu0
        %v1003 = vadd.f32 %v679, %v1002
        %v1004 = vpop.f32.mrb[0].mxu0
        %1005 = vdwg.mxu0
        %v1006 = vld [vmem:[#allocation2 + $0x2] sm:$0xff]
        %v1007 = vld [vmem:[#allocation2 + $0xa] sm:$0xff]
        %v1008 = vld [vmem:[#allocation2 + $0x1a] sm:$0xff]
        %v1009 = vld [vmem:[#allocation2 + $0x22] sm:$0xff]
        %v1010 = vld [vmem:[#allocation2 + $0x32] sm:$0xff]
        %v1011 = vld [vmem:[#allocation2 + $0x3a] sm:$0xff]
        %v1012 = vld [vmem:[#allocation2 + $0x4a] sm:$0xff]
        %v1013 = vld [vmem:[#allocation2 + $0x52] sm:$0xff]
        %v1014 = vld [vmem:[#allocation2 + $0x62] sm:$0xff]
        %v1015 = vld [vmem:[#allocation2 + $0x6a] sm:$0xff]
        %v1016 = vld [vmem:[#allocation2 + $0x7a] sm:$0xff]
        %v1017 = vld [vmem:[#allocation2 + $0x82] sm:$0xff]
        %v1018 = vld [vmem:[#allocation2 + $0x92] sm:$0xff]
        %v1019 = vld [vmem:[#allocation2 + $0x9a] sm:$0xff]
        %v1020 = vld [vmem:[#allocation2 + $0xaa] sm:$0xff]
        %v1021 = vld [vmem:[#allocation2 + $0xb2] sm:$0xff]
        %v1022 = vld [vmem:[#allocation2 + $0xc2] sm:$0xff]
        %v1023 = vld [vmem:[#allocation2 + $0xca] sm:$0xff]
        %v1024 = vld [vmem:[#allocation2 + $0xda] sm:$0xff]
        %v1025 = vld [vmem:[#allocation2 + $0xe2] sm:$0xff]
        %v1026 = vld [vmem:[#allocation2 + $0xf2] sm:$0xff]
        %v1027 = vld [vmem:[#allocation2 + $0xfa] sm:$0xff]
        %v1028 = vld [vmem:[#allocation2 + $0x10a] sm:$0xff]
        %v1029 = vld [vmem:[#allocation2 + $0x112] sm:$0xff]
        %v1030 = vld [vmem:[#allocation2 + $0x122] sm:$0xff]
        %v1031 = vld [vmem:[#allocation2 + $0x12a] sm:$0xff]
        %v1032 = vld [vmem:[#allocation2 + $0x13a] sm:$0xff]
        %v1033 = vld [vmem:[#allocation2 + $0x142] sm:$0xff]
        %v1034 = vld [vmem:[#allocation2 + $0x152] sm:$0xff]
        %v1035 = vld [vmem:[#allocation2 + $0x15a] sm:$0xff]
        %v1036 = vld [vmem:[#allocation2 + $0x16a] sm:$0xff]
        %v1037 = vld [vmem:[#allocation2 + $0x172] sm:$0xff]
        %s1038 = scalar_lea.vmem %s1, 8
        %v1039 = vld [vmem:[%s1038] sm:$0xf]
        %v1041 = vsel %vm169, %v1006, 0
        %v1044 = vsel %vm169, %v1007, 0
        %v1047 = vsel %vm169, %v1008, 0
        %v1050 = vsel %vm169, %v1009, 0
        %v1053 = vsel %vm169, %v1010, 0
        %v1056 = vsel %vm169, %v1011, 0
        %v1059 = vsel %vm169, %v1012, 0
        %v1062 = vsel %vm169, %v1013, 0
        %v1065 = vsel %vm169, %v1014, 0
        %v1068 = vsel %vm169, %v1015, 0
        %v1071 = vsel %vm169, %v1016, 0
        %v1074 = vsel %vm169, %v1017, 0
        %v1077 = vsel %vm169, %v1018, 0
        %v1080 = vsel %vm169, %v1019, 0
        %v1083 = vsel %vm169, %v1020, 0
        %v1086 = vsel %vm169, %v1021, 0
        %v1089 = vsel %vm169, %v1022, 0
        %v1092 = vsel %vm169, %v1023, 0
        %v1095 = vsel %vm169, %v1024, 0
        %v1098 = vsel %vm169, %v1025, 0
        %v1101 = vsel %vm169, %v1026, 0
        %v1104 = vsel %vm169, %v1027, 0
        %v1107 = vsel %vm169, %v1028, 0
        %v1110 = vsel %vm169, %v1029, 0
        %v1113 = vsel %vm169, %v1030, 0
        %v1116 = vsel %vm169, %v1031, 0
        %v1119 = vsel %vm169, %v1032, 0
        %v1122 = vsel %vm169, %v1033, 0
        %v1125 = vsel %vm169, %v1034, 0
        %v1128 = vsel %vm169, %v1035, 0
        %v1131 = vsel %vm169, %v1036, 0
        %v1134 = vsel %vm169, %v1037, 0
        %v1137 = vsel %vm453, %v1039, 0
        %1139 = vmatprep.subr.mxu0 0.0
        %1140 = vmatpush1.msra.mxu0 %v1137
        %1141 = vmatprep.subr.mxu0 0.0
        %1142 = vmatpush1.msra.mxu0 0.0
        %1143 = vmatprep.subr.mxu0 0.0
        %1144 = vmatpush1.msra.mxu0 0.0
        %1145 = vmatprep.subr.mxu0 0.0
        %1146 = vmatpush1.msra.mxu0 0.0
        %1147 = vmatprep.subr.mxu0 0.0
        %1148 = vmatpush1.msra.mxu0 0.0
        %1149 = vmatprep.subr.mxu0 0.0
        %1150 = vmatpush1.msra.mxu0 0.0
        %1151 = vmatprep.subr.mxu0 0.0
        %1152 = vmatpush1.msra.mxu0 0.0
        %1153 = vmatprep.subr.mxu0 0.0
        %1154 = vmatpush1.msra.mxu0 0.0
        %1155 = vmatprep.subr.mxu0 0.0
        %1156 = vmatpush1.msra.mxu0 0.0
        %1157 = vmatprep.subr.mxu0 0.0
        %1158 = vmatpush1.msra.mxu0 0.0
        %1159 = vmatprep.subr.mxu0 0.0
        %1160 = vmatpush1.msra.mxu0 0.0
        %1161 = vmatprep.subr.mxu0 0.0
        %1162 = vmatpush1.msra.mxu0 0.0
        %1163 = vmatprep.subr.mxu0 0.0
        %1164 = vmatpush1.msra.mxu0 0.0
        %1165 = vmatprep.subr.mxu0 0.0
        %1166 = vmatpush1.msra.mxu0 0.0
        %1167 = vmatprep.subr.mxu0 0.0
        %1168 = vmatpush1.msra.mxu0 0.0
        %1169 = vmatprep.subr.mxu0 0.0
        %1170 = vmatpush1.msra.mxu0 0.0
        %1171 = vmatprep.subr.mxu0 0.0
        %1172 = vmatpush1.msra.mxu0 0.0
        %1173 = vmatprep.subr.mxu0 0.0
        %1174 = vmatpush1.msra.mxu0 0.0
        %1175 = vmatprep.subr.mxu0 0.0
        %1176 = vmatpush1.msra.mxu0 0.0
        %1177 = vmatprep.subr.mxu0 0.0
        %1178 = vmatpush1.msra.mxu0 0.0
        %1179 = vmatprep.subr.mxu0 0.0
        %1180 = vmatpush1.msra.mxu0 0.0
        %1181 = vmatprep.subr.mxu0 0.0
        %1182 = vmatpush1.msra.mxu0 0.0
        %1183 = vmatprep.subr.mxu0 0.0
        %1184 = vmatpush1.msra.mxu0 0.0
        %1185 = vmatprep.subr.mxu0 0.0
        %1186 = vmatpush1.msra.mxu0 0.0
        %1187 = vmatprep.subr.mxu0 0.0
        %1188 = vmatpush1.msra.mxu0 0.0
        %1189 = vmatprep.subr.mxu0 0.0
        %1190 = vmatpush1.msra.mxu0 0.0
        %1191 = vmatprep.subr.mxu0 0.0
        %1192 = vmatpush1.msra.mxu0 0.0
        %1193 = vmatprep.subr.mxu0 0.0
        %1194 = vmatpush1.msra.mxu0 0.0
        %1195 = vmatprep.subr.mxu0 0.0
        %1196 = vmatpush1.msra.mxu0 0.0
        %1197 = vmatprep.subr.mxu0 0.0
        %1198 = vmatpush1.msra.mxu0 0.0
        %1199 = vmatprep.subr.mxu0 0.0
        %1200 = vmatpush1.msra.mxu0 0.0
        %1201 = vmatprep.subr.mxu0 0.0
        %1202 = vmatpush1.msra.mxu0 0.0
        %1203 = vmatprep.mubr.f32.mxu0 0.0
        %1204 = vmatmul.mubr.f32.gmra.mrb[0].mxu0 %v1041
        %v1205 = vpop.f32.mrb[0].mxu0
        %v1206 = vadd.f32 0.0, %v1205
        %v1207 = vpop.f32.mrb[0].mxu0
        %1208 = vmatprep.mubr.f32.mxu0 0.0
        %1209 = vmatmul.mubr.f32.gmra.mrb[0].mxu0 %v1044
        %v1210 = vpop.f32.mrb[0].mxu0
        %v1211 = vadd.f32 0.0, %v1210
        %v1212 = vpop.f32.mrb[0].mxu0
        %1213 = vmatprep.mubr.f32.mxu0 0.0
        %1214 = vmatmul.mubr.f32.gmra.mrb[0].mxu0 %v1047
        %v1215 = vpop.f32.mrb[0].mxu0
        %v1216 = vadd.f32 0.0, %v1215
        %v1217 = vpop.f32.mrb[0].mxu0
        %1218 = vmatprep.mubr.f32.mxu0 0.0
        %1219 = vmatmul.mubr.f32.gmra.mrb[0].mxu0 %v1050
        %v1220 = vpop.f32.mrb[0].mxu0
        %v1221 = vadd.f32 0.0, %v1220
        %v1222 = vpop.f32.mrb[0].mxu0
        %1223 = vmatprep.mubr.f32.mxu0 0.0
        %1224 = vmatmul.mubr.f32.gmra.mrb[0].mxu0 %v1053
        %v1225 = vpop.f32.mrb[0].mxu0
        %v1226 = vadd.f32 0.0, %v1225
        %v1227 = vpop.f32.mrb[0].mxu0
        %1228 = vmatprep.mubr.f32.mxu0 0.0
        %1229 = vmatmul.mubr.f32.gmra.mrb[0].mxu0 %v1056
        %v1230 = vpop.f32.mrb[0].mxu0
        %v1231 = vadd.f32 0.0, %v1230
        %v1232 = vpop.f32.mrb[0].mxu0
        %1233 = vmatprep.mubr.f32.mxu0 0.0
        %1234 = vmatmul.mubr.f32.gmra.mrb[0].mxu0 %v1059
        %v1235 = vpop.f32.mrb[0].mxu0
        %v1236 = vadd.f32 0.0, %v1235
        %v1237 = vpop.f32.mrb[0].mxu0
        %1238 = vmatprep.mubr.f32.mxu0 0.0
        %1239 = vmatmul.mubr.f32.gmra.mrb[0].mxu0 %v1062
        %v1240 = vpop.f32.mrb[0].mxu0
        %v1241 = vadd.f32 0.0, %v1240
        %v1242 = vpop.f32.mrb[0].mxu0
        %1243 = vmatprep.mubr.f32.mxu0 0.0
        %1244 = vmatmul.mubr.f32.gmra.mrb[0].mxu0 %v1065
        %v1245 = vpop.f32.mrb[0].mxu0
        %v1246 = vadd.f32 0.0, %v1245
        %v1247 = vpop.f32.mrb[0].mxu0
        %1248 = vmatprep.mubr.f32.mxu0 0.0
        %1249 = vmatmul.mubr.f32.gmra.mrb[0].mxu0 %v1068
        %v1250 = vpop.f32.mrb[0].mxu0
        %v1251 = vadd.f32 0.0, %v1250
        %v1252 = vpop.f32.mrb[0].mxu0
        %1253 = vmatprep.mubr.f32.mxu0 0.0
        %1254 = vmatmul.mubr.f32.gmra.mrb[0].mxu0 %v1071
        %v1255 = vpop.f32.mrb[0].mxu0
        %v1256 = vadd.f32 0.0, %v1255
        %v1257 = vpop.f32.mrb[0].mxu0
        %1258 = vmatprep.mubr.f32.mxu0 0.0
        %1259 = vmatmul.mubr.f32.gmra.mrb[0].mxu0 %v1074
        %v1260 = vpop.f32.mrb[0].mxu0
        %v1261 = vadd.f32 0.0, %v1260
        %v1262 = vpop.f32.mrb[0].mxu0
        %1263 = vmatprep.mubr.f32.mxu0 0.0
        %1264 = vmatmul.mubr.f32.gmra.mrb[0].mxu0 %v1077
        %v1265 = vpop.f32.mrb[0].mxu0
        %v1266 = vadd.f32 0.0, %v1265
        %v1267 = vpop.f32.mrb[0].mxu0
        %1268 = vmatprep.mubr.f32.mxu0 0.0
        %1269 = vmatmul.mubr.f32.gmra.mrb[0].mxu0 %v1080
        %v1270 = vpop.f32.mrb[0].mxu0
        %v1271 = vadd.f32 0.0, %v1270
        %v1272 = vpop.f32.mrb[0].mxu0
        %1273 = vmatprep.mubr.f32.mxu0 0.0
        %1274 = vmatmul.mubr.f32.gmra.mrb[0].mxu0 %v1083
        %v1275 = vpop.f32.mrb[0].mxu0
        %v1276 = vadd.f32 0.0, %v1275
        %v1277 = vpop.f32.mrb[0].mxu0
        %1278 = vmatprep.mubr.f32.mxu0 0.0
        %1279 = vmatmul.mubr.f32.gmra.mrb[0].mxu0 %v1086
        %v1280 = vpop.f32.mrb[0].mxu0
        %v1281 = vadd.f32 0.0, %v1280
        %v1282 = vpop.f32.mrb[0].mxu0
        %1283 = vmatprep.mubr.f32.mxu0 0.0
        %1284 = vmatmul.mubr.f32.gmra.mrb[0].mxu0 %v1089
        %v1285 = vpop.f32.mrb[0].mxu0
        %v1286 = vadd.f32 0.0, %v1285
        %v1287 = vpop.f32.mrb[0].mxu0
        %1288 = vmatprep.mubr.f32.mxu0 0.0
        %1289 = vmatmul.mubr.f32.gmra.mrb[0].mxu0 %v1092
        %v1290 = vpop.f32.mrb[0].mxu0
        %v1291 = vadd.f32 0.0, %v1290
        %v1292 = vpop.f32.mrb[0].mxu0
        %1293 = vmatprep.mubr.f32.mxu0 0.0
        %1294 = vmatmul.mubr.f32.gmra.mrb[0].mxu0 %v1095
        %v1295 = vpop.f32.mrb[0].mxu0
        %v1296 = vadd.f32 0.0, %v1295
        %v1297 = vpop.f32.mrb[0].mxu0
        %1298 = vmatprep.mubr.f32.mxu0 0.0
        %1299 = vmatmul.mubr.f32.gmra.mrb[0].mxu0 %v1098
        %v1300 = vpop.f32.mrb[0].mxu0
        %v1301 = vadd.f32 0.0, %v1300
        %v1302 = vpop.f32.mrb[0].mxu0
        %1303 = vmatprep.mubr.f32.mxu0 0.0
        %1304 = vmatmul.mubr.f32.gmra.mrb[0].mxu0 %v1101
        %v1305 = vpop.f32.mrb[0].mxu0
        %v1306 = vadd.f32 0.0, %v1305
        %v1307 = vpop.f32.mrb[0].mxu0
        %1308 = vmatprep.mubr.f32.mxu0 0.0
        %1309 = vmatmul.mubr.f32.gmra.mrb[0].mxu0 %v1104
        %v1310 = vpop.f32.mrb[0].mxu0
        %v1311 = vadd.f32 0.0, %v1310
        %v1312 = vpop.f32.mrb[0].mxu0
        %1313 = vmatprep.mubr.f32.mxu0 0.0
        %1314 = vmatmul.mubr.f32.gmra.mrb[0].mxu0 %v1107
        %v1315 = vpop.f32.mrb[0].mxu0
        %v1316 = vadd.f32 0.0, %v1315
        %v1317 = vpop.f32.mrb[0].mxu0
        %1318 = vmatprep.mubr.f32.mxu0 0.0
        %1319 = vmatmul.mubr.f32.gmra.mrb[0].mxu0 %v1110
        %v1320 = vpop.f32.mrb[0].mxu0
        %v1321 = vadd.f32 0.0, %v1320
        %v1322 = vpop.f32.mrb[0].mxu0
        %1323 = vmatprep.mubr.f32.mxu0 0.0
        %1324 = vmatmul.mubr.f32.gmra.mrb[0].mxu0 %v1113
        %v1325 = vpop.f32.mrb[0].mxu0
        %v1326 = vadd.f32 0.0, %v1325
        %v1327 = vpop.f32.mrb[0].mxu0
        %1328 = vmatprep.mubr.f32.mxu0 0.0
        %1329 = vmatmul.mubr.f32.gmra.mrb[0].mxu0 %v1116
        %v1330 = vpop.f32.mrb[0].mxu0
        %v1331 = vadd.f32 0.0, %v1330
        %v1332 = vpop.f32.mrb[0].mxu0
        %1333 = vmatprep.mubr.f32.mxu0 0.0
        %1334 = vmatmul.mubr.f32.gmra.mrb[0].mxu0 %v1119
        %v1335 = vpop.f32.mrb[0].mxu0
        %v1336 = vadd.f32 0.0, %v1335
        %v1337 = vpop.f32.mrb[0].mxu0
        %1338 = vmatprep.mubr.f32.mxu0 0.0
        %1339 = vmatmul.mubr.f32.gmra.mrb[0].mxu0 %v1122
        %v1340 = vpop.f32.mrb[0].mxu0
        %v1341 = vadd.f32 0.0, %v1340
        %v1342 = vpop.f32.mrb[0].mxu0
        %1343 = vmatprep.mubr.f32.mxu0 0.0
        %1344 = vmatmul.mubr.f32.gmra.mrb[0].mxu0 %v1125
        %v1345 = vpop.f32.mrb[0].mxu0
        %v1346 = vadd.f32 0.0, %v1345
        %v1347 = vpop.f32.mrb[0].mxu0
        %1348 = vmatprep.mubr.f32.mxu0 0.0
        %1349 = vmatmul.mubr.f32.gmra.mrb[0].mxu0 %v1128
        %v1350 = vpop.f32.mrb[0].mxu0
        %v1351 = vadd.f32 0.0, %v1350
        %v1352 = vpop.f32.mrb[0].mxu0
        %1353 = vmatprep.mubr.f32.mxu0 0.0
        %1354 = vmatmul.mubr.f32.gmra.mrb[0].mxu0 %v1131
        %v1355 = vpop.f32.mrb[0].mxu0
        %v1356 = vadd.f32 0.0, %v1355
        %v1357 = vpop.f32.mrb[0].mxu0
        %1358 = vmatprep.mubr.f32.mxu0 0.0
        %1359 = vmatmul.mubr.f32.gmra.mrb[0].mxu0 %v1134
        %v1360 = vpop.f32.mrb[0].mxu0
        %v1361 = vadd.f32 0.0, %v1360
        %v1362 = vpop.f32.mrb[0].mxu0
        %1363 = vdwg.mxu0
        %v1364 = vadd.f32 %v848, %v1206
        %v1365 = vadd.f32 %v853, %v1211
        %v1366 = vadd.f32 %v858, %v1216
        %v1367 = vadd.f32 %v863, %v1221
        %v1368 = vadd.f32 %v868, %v1226
        %v1369 = vadd.f32 %v873, %v1231
        %v1370 = vadd.f32 %v878, %v1236
        %v1371 = vadd.f32 %v883, %v1241
        %v1372 = vadd.f32 %v888, %v1246
        %v1373 = vadd.f32 %v893, %v1251
        %v1374 = vadd.f32 %v898, %v1256
        %v1375 = vadd.f32 %v903, %v1261
        %v1376 = vadd.f32 %v908, %v1266
        %v1377 = vadd.f32 %v913, %v1271
        %v1378 = vadd.f32 %v918, %v1276
        %v1379 = vadd.f32 %v923, %v1281
        %v1380 = vadd.f32 %v928, %v1286
        %v1381 = vadd.f32 %v933, %v1291
        %v1382 = vadd.f32 %v938, %v1296
        %v1383 = vadd.f32 %v943, %v1301
        %v1384 = vadd.f32 %v948, %v1306
        %v1385 = vadd.f32 %v953, %v1311
        %v1386 = vadd.f32 %v958, %v1316
        %v1387 = vadd.f32 %v963, %v1321
        %v1388 = vadd.f32 %v968, %v1326
        %v1389 = vadd.f32 %v973, %v1331
        %v1390 = vadd.f32 %v978, %v1336
        %v1391 = vadd.f32 %v983, %v1341
        %v1392 = vadd.f32 %v988, %v1346
        %v1393 = vadd.f32 %v993, %v1351
        %v1394 = vadd.f32 %v998, %v1356
        %v1395 = vadd.f32 %v1003, %v1361
        %v1396 = vld [vmem:[%s257] sm:$0xff]
        %v1397 = vld [vmem:[%s257 + $0x8] sm:$0xff]
        %v1398 = vld [vmem:[%s257 + $0x18] sm:$0xff]
        %v1399 = vld [vmem:[%s257 + $0x20] sm:$0xff]
        %v1400 = vld [vmem:[%s257 + $0x30] sm:$0xff]
        %v1401 = vld [vmem:[%s257 + $0x38] sm:$0xff]
        %v1402 = vld [vmem:[%s257 + $0x48] sm:$0xff]
        %v1403 = vld [vmem:[%s257 + $0x50] sm:$0xff]
        %v1404 = vld [vmem:[%s257 + $0x60] sm:$0xff]
        %v1405 = vld [vmem:[%s257 + $0x68] sm:$0xff]
        %v1406 = vld [vmem:[%s257 + $0x78] sm:$0xff]
        %v1407 = vld [vmem:[%s257 + $0x80] sm:$0xff]
        %v1408 = vld [vmem:[%s257 + $0x90] sm:$0xff]
        %v1409 = vld [vmem:[%s257 + $0x98] sm:$0xff]
        %v1410 = vld [vmem:[%s257 + $0xa8] sm:$0xff]
        %v1411 = vld [vmem:[%s257 + $0xb0] sm:$0xff]
        %v1412 = vld [vmem:[%s257 + $0xc0] sm:$0xff]
        %v1413 = vld [vmem:[%s257 + $0xc8] sm:$0xff]
        %v1414 = vld [vmem:[%s257 + $0xd8] sm:$0xff]
        %v1415 = vld [vmem:[%s257 + $0xe0] sm:$0xff]
        %v1416 = vld [vmem:[%s257 + $0xf0] sm:$0xff]
        %v1417 = vld [vmem:[%s257 + $0xf8] sm:$0xff]
        %v1418 = vld [vmem:[%s257 + $0x108] sm:$0xff]
        %v1419 = vld [vmem:[%s257 + $0x110] sm:$0xff]
        %v1420 = vld [vmem:[%s257 + $0x120] sm:$0xff]
        %v1421 = vld [vmem:[%s257 + $0x128] sm:$0xff]
        %v1422 = vld [vmem:[%s257 + $0x138] sm:$0xff]
        %v1423 = vld [vmem:[%s257 + $0x140] sm:$0xff]
        %v1424 = vld [vmem:[%s257 + $0x150] sm:$0xff]
        %v1425 = vld [vmem:[%s257 + $0x158] sm:$0xff]
        %v1426 = vld [vmem:[%s257 + $0x168] sm:$0xff]
        %v1427 = vld [vmem:[%s257 + $0x170] sm:$0xff]
        %s1428 = scalar_lea.vmem %s1, 12
        %v1429 = vld [vmem:[%s1428] sm:$0xf]
        %v1431 = vsel %vm169, %v1396, 0
        %v1434 = vsel %vm169, %v1397, 0
        %v1437 = vsel %vm169, %v1398, 0
        %v1440 = vsel %vm169, %v1399, 0
        %v1443 = vsel %vm169, %v1400, 0
        %v1446 = vsel %vm169, %v1401, 0
        %v1449 = vsel %vm169, %v1402, 0
        %v1452 = vsel %vm169, %v1403, 0
        %v1455 = vsel %vm169, %v1404, 0
        %v1458 = vsel %vm169, %v1405, 0
        %v1461 = vsel %vm169, %v1406, 0
        %v1464 = vsel %vm169, %v1407, 0
        %v1467 = vsel %vm169, %v1408, 0
        %v1470 = vsel %vm169, %v1409, 0
        %v1473 = vsel %vm169, %v1410, 0
        %v1476 = vsel %vm169, %v1411, 0
        %v1479 = vsel %vm169, %v1412, 0
        %v1482 = vsel %vm169, %v1413, 0
        %v1485 = vsel %vm169, %v1414, 0
        %v1488 = vsel %vm169, %v1415, 0
        %v1491 = vsel %vm169, %v1416, 0
        %v1494 = vsel %vm169, %v1417, 0
        %v1497 = vsel %vm169, %v1418, 0
        %v1500 = vsel %vm169, %v1419, 0
        %v1503 = vsel %vm169, %v1420, 0
        %v1506 = vsel %vm169, %v1421, 0
        %v1509 = vsel %vm169, %v1422, 0
        %v1512 = vsel %vm169, %v1423, 0
        %v1515 = vsel %vm169, %v1424, 0
        %v1518 = vsel %vm169, %v1425, 0
        %v1521 = vsel %vm169, %v1426, 0
        %v1524 = vsel %vm169, %v1427, 0
        %v1527 = vsel %vm453, %v1429, 0
        %1529 = vmatprep.subr.mxu0 0.0
        %1530 = vmatpush1.msra.mxu0 %v1527
        %1531 = vmatprep.subr.mxu0 0.0
        %1532 = vmatpush1.msra.mxu0 0.0
        %1533 = vmatprep.subr.mxu0 0.0
        %1534 = vmatpush1.msra.mxu0 0.0
        %1535 = vmatprep.subr.mxu0 0.0
        %1536 = vmatpush1.msra.mxu0 0.0
        %1537 = vmatprep.subr.mxu0 0.0
        %1538 = vmatpush1.msra.mxu0 0.0
        %1539 = vmatprep.subr.mxu0 0.0
        %1540 = vmatpush1.msra.mxu0 0.0
        %1541 = vmatprep.subr.mxu0 0.0
        %1542 = vmatpush1.msra.mxu0 0.0
        %1543 = vmatprep.subr.mxu0 0.0
        %1544 = vmatpush1.msra.mxu0 0.0
        %1545 = vmatprep.subr.mxu0 0.0
        %1546 = vmatpush1.msra.mxu0 0.0
        %1547 = vmatprep.subr.mxu0 0.0
        %1548 = vmatpush1.msra.mxu0 0.0
        %1549 = vmatprep.subr.mxu0 0.0
        %1550 = vmatpush1.msra.mxu0 0.0
        %1551 = vmatprep.subr.mxu0 0.0
        %1552 = vmatpush1.msra.mxu0 0.0
        %1553 = vmatprep.subr.mxu0 0.0
        %1554 = vmatpush1.msra.mxu0 0.0
        %1555 = vmatprep.subr.mxu0 0.0
        %1556 = vmatpush1.msra.mxu0 0.0
        %1557 = vmatprep.subr.mxu0 0.0
        %1558 = vmatpush1.msra.mxu0 0.0
        %1559 = vmatprep.subr.mxu0 0.0
        %1560 = vmatpush1.msra.mxu0 0.0
        %1561 = vmatprep.subr.mxu0 0.0
        %1562 = vmatpush1.msra.mxu0 0.0
        %1563 = vmatprep.subr.mxu0 0.0
        %1564 = vmatpush1.msra.mxu0 0.0
        %1565 = vmatprep.subr.mxu0 0.0
        %1566 = vmatpush1.msra.mxu0 0.0
        %1567 = vmatprep.subr.mxu0 0.0
        %1568 = vmatpush1.msra.mxu0 0.0
        %1569 = vmatprep.subr.mxu0 0.0
        %1570 = vmatpush1.msra.mxu0 0.0
        %1571 = vmatprep.subr.mxu0 0.0
        %1572 = vmatpush1.msra.mxu0 0.0
        %1573 = vmatprep.subr.mxu0 0.0
        %1574 = vmatpush1.msra.mxu0 0.0
        %1575 = vmatprep.subr.mxu0 0.0
        %1576 = vmatpush1.msra.mxu0 0.0
        %1577 = vmatprep.subr.mxu0 0.0
        %1578 = vmatpush1.msra.mxu0 0.0
        %1579 = vmatprep.subr.mxu0 0.0
        %1580 = vmatpush1.msra.mxu0 0.0
        %1581 = vmatprep.subr.mxu0 0.0
        %1582 = vmatpush1.msra.mxu0 0.0
        %1583 = vmatprep.subr.mxu0 0.0
        %1584 = vmatpush1.msra.mxu0 0.0
        %1585 = vmatprep.subr.mxu0 0.0
        %1586 = vmatpush1.msra.mxu0 0.0
        %1587 = vmatprep.subr.mxu0 0.0
        %1588 = vmatpush1.msra.mxu0 0.0
        %1589 = vmatprep.subr.mxu0 0.0
        %1590 = vmatpush1.msra.mxu0 0.0
        %1591 = vmatprep.subr.mxu0 0.0
        %1592 = vmatpush1.msra.mxu0 0.0
        %1593 = vmatprep.mubr.f32.mxu0 0.0
        %1594 = vmatmul.mubr.f32.gmra.mrb[0].mxu0 %v1431
        %v1595 = vpop.f32.mrb[0].mxu0
        %v1596 = vadd.f32 0.0, %v1595
        %v1597 = vpop.f32.mrb[0].mxu0
        %1598 = vmatprep.mubr.f32.mxu0 0.0
        %1599 = vmatmul.mubr.f32.gmra.mrb[0].mxu0 %v1434
        %v1600 = vpop.f32.mrb[0].mxu0
        %v1601 = vadd.f32 0.0, %v1600
        %v1602 = vpop.f32.mrb[0].mxu0
        %1603 = vmatprep.mubr.f32.mxu0 0.0
        %1604 = vmatmul.mubr.f32.gmra.mrb[0].mxu0 %v1437
        %v1605 = vpop.f32.mrb[0].mxu0
        %v1606 = vadd.f32 0.0, %v1605
        %v1607 = vpop.f32.mrb[0].mxu0
        %1608 = vmatprep.mubr.f32.mxu0 0.0
        %1609 = vmatmul.mubr.f32.gmra.mrb[0].mxu0 %v1440
        %v1610 = vpop.f32.mrb[0].mxu0
        %v1611 = vadd.f32 0.0, %v1610
        %v1612 = vpop.f32.mrb[0].mxu0
        %1613 = vmatprep.mubr.f32.mxu0 0.0
        %1614 = vmatmul.mubr.f32.gmra.mrb[0].mxu0 %v1443
        %v1615 = vpop.f32.mrb[0].mxu0
        %v1616 = vadd.f32 0.0, %v1615
        %v1617 = vpop.f32.mrb[0].mxu0
        %1618 = vmatprep.mubr.f32.mxu0 0.0
        %1619 = vmatmul.mubr.f32.gmra.mrb[0].mxu0 %v1446
        %v1620 = vpop.f32.mrb[0].mxu0
        %v1621 = vadd.f32 0.0, %v1620
        %v1622 = vpop.f32.mrb[0].mxu0
        %1623 = vmatprep.mubr.f32.mxu0 0.0
        %1624 = vmatmul.mubr.f32.gmra.mrb[0].mxu0 %v1449
        %v1625 = vpop.f32.mrb[0].mxu0
        %v1626 = vadd.f32 0.0, %v1625
        %v1627 = vpop.f32.mrb[0].mxu0
        %1628 = vmatprep.mubr.f32.mxu0 0.0
        %1629 = vmatmul.mubr.f32.gmra.mrb[0].mxu0 %v1452
        %v1630 = vpop.f32.mrb[0].mxu0
        %v1631 = vadd.f32 0.0, %v1630
        %v1632 = vpop.f32.mrb[0].mxu0
        %1633 = vmatprep.mubr.f32.mxu0 0.0
        %1634 = vmatmul.mubr.f32.gmra.mrb[0].mxu0 %v1455
        %v1635 = vpop.f32.mrb[0].mxu0
        %v1636 = vadd.f32 0.0, %v1635
        %v1637 = vpop.f32.mrb[0].mxu0
        %1638 = vmatprep.mubr.f32.mxu0 0.0
        %1639 = vmatmul.mubr.f32.gmra.mrb[0].mxu0 %v1458
        %v1640 = vpop.f32.mrb[0].mxu0
        %v1641 = vadd.f32 0.0, %v1640
        %v1642 = vpop.f32.mrb[0].mxu0
        %1643 = vmatprep.mubr.f32.mxu0 0.0
        %1644 = vmatmul.mubr.f32.gmra.mrb[0].mxu0 %v1461
        %v1645 = vpop.f32.mrb[0].mxu0
        %v1646 = vadd.f32 0.0, %v1645
        %v1647 = vpop.f32.mrb[0].mxu0
        %1648 = vmatprep.mubr.f32.mxu0 0.0
        %1649 = vmatmul.mubr.f32.gmra.mrb[0].mxu0 %v1464
        %v1650 = vpop.f32.mrb[0].mxu0
        %v1651 = vadd.f32 0.0, %v1650
        %v1652 = vpop.f32.mrb[0].mxu0
        %1653 = vmatprep.mubr.f32.mxu0 0.0
        %1654 = vmatmul.mubr.f32.gmra.mrb[0].mxu0 %v1467
        %v1655 = vpop.f32.mrb[0].mxu0
        %v1656 = vadd.f32 0.0, %v1655
        %v1657 = vpop.f32.mrb[0].mxu0
        %1658 = vmatprep.mubr.f32.mxu0 0.0
        %1659 = vmatmul.mubr.f32.gmra.mrb[0].mxu0 %v1470
        %v1660 = vpop.f32.mrb[0].mxu0
        %v1661 = vadd.f32 0.0, %v1660
        %v1662 = vpop.f32.mrb[0].mxu0
        %1663 = vmatprep.mubr.f32.mxu0 0.0
        %1664 = vmatmul.mubr.f32.gmra.mrb[0].mxu0 %v1473
        %v1665 = vpop.f32.mrb[0].mxu0
        %v1666 = vadd.f32 0.0, %v1665
        %v1667 = vpop.f32.mrb[0].mxu0
        %1668 = vmatprep.mubr.f32.mxu0 0.0
        %1669 = vmatmul.mubr.f32.gmra.mrb[0].mxu0 %v1476
        %v1670 = vpop.f32.mrb[0].mxu0
        %v1671 = vadd.f32 0.0, %v1670
        %v1672 = vpop.f32.mrb[0].mxu0
        %1673 = vmatprep.mubr.f32.mxu0 0.0
        %1674 = vmatmul.mubr.f32.gmra.mrb[0].mxu0 %v1479
        %v1675 = vpop.f32.mrb[0].mxu0
        %v1676 = vadd.f32 0.0, %v1675
        %v1677 = vpop.f32.mrb[0].mxu0
        %1678 = vmatprep.mubr.f32.mxu0 0.0
        %1679 = vmatmul.mubr.f32.gmra.mrb[0].mxu0 %v1482
        %v1680 = vpop.f32.mrb[0].mxu0
        %v1681 = vadd.f32 0.0, %v1680
        %v1682 = vpop.f32.mrb[0].mxu0
        %1683 = vmatprep.mubr.f32.mxu0 0.0
        %1684 = vmatmul.mubr.f32.gmra.mrb[0].mxu0 %v1485
        %v1685 = vpop.f32.mrb[0].mxu0
        %v1686 = vadd.f32 0.0, %v1685
        %v1687 = vpop.f32.mrb[0].mxu0
        %1688 = vmatprep.mubr.f32.mxu0 0.0
        %1689 = vmatmul.mubr.f32.gmra.mrb[0].mxu0 %v1488
        %v1690 = vpop.f32.mrb[0].mxu0
        %v1691 = vadd.f32 0.0, %v1690
        %v1692 = vpop.f32.mrb[0].mxu0
        %1693 = vmatprep.mubr.f32.mxu0 0.0
        %1694 = vmatmul.mubr.f32.gmra.mrb[0].mxu0 %v1491
        %v1695 = vpop.f32.mrb[0].mxu0
        %v1696 = vadd.f32 0.0, %v1695
        %v1697 = vpop.f32.mrb[0].mxu0
        %1698 = vmatprep.mubr.f32.mxu0 0.0
        %1699 = vmatmul.mubr.f32.gmra.mrb[0].mxu0 %v1494
        %v1700 = vpop.f32.mrb[0].mxu0
        %v1701 = vadd.f32 0.0, %v1700
        %v1702 = vpop.f32.mrb[0].mxu0
        %1703 = vmatprep.mubr.f32.mxu0 0.0
        %1704 = vmatmul.mubr.f32.gmra.mrb[0].mxu0 %v1497
        %v1705 = vpop.f32.mrb[0].mxu0
        %v1706 = vadd.f32 0.0, %v1705
        %v1707 = vpop.f32.mrb[0].mxu0
        %1708 = vmatprep.mubr.f32.mxu0 0.0
        %1709 = vmatmul.mubr.f32.gmra.mrb[0].mxu0 %v1500
        %v1710 = vpop.f32.mrb[0].mxu0
        %v1711 = vadd.f32 0.0, %v1710
        %v1712 = vpop.f32.mrb[0].mxu0
        %1713 = vmatprep.mubr.f32.mxu0 0.0
        %1714 = vmatmul.mubr.f32.gmra.mrb[0].mxu0 %v1503
        %v1715 = vpop.f32.mrb[0].mxu0
        %v1716 = vadd.f32 0.0, %v1715
        %v1717 = vpop.f32.mrb[0].mxu0
        %1718 = vmatprep.mubr.f32.mxu0 0.0
        %1719 = vmatmul.mubr.f32.gmra.mrb[0].mxu0 %v1506
        %v1720 = vpop.f32.mrb[0].mxu0
        %v1721 = vadd.f32 0.0, %v1720
        %v1722 = vpop.f32.mrb[0].mxu0
        %1723 = vmatprep.mubr.f32.mxu0 0.0
        %1724 = vmatmul.mubr.f32.gmra.mrb[0].mxu0 %v1509
        %v1725 = vpop.f32.mrb[0].mxu0
        %v1726 = vadd.f32 0.0, %v1725
        %v1727 = vpop.f32.mrb[0].mxu0
        %1728 = vmatprep.mubr.f32.mxu0 0.0
        %1729 = vmatmul.mubr.f32.gmra.mrb[0].mxu0 %v1512
        %v1730 = vpop.f32.mrb[0].mxu0
        %v1731 = vadd.f32 0.0, %v1730
        %v1732 = vpop.f32.mrb[0].mxu0
        %1733 = vmatprep.mubr.f32.mxu0 0.0
        %1734 = vmatmul.mubr.f32.gmra.mrb[0].mxu0 %v1515
        %v1735 = vpop.f32.mrb[0].mxu0
        %v1736 = vadd.f32 0.0, %v1735
        %v1737 = vpop.f32.mrb[0].mxu0
        %1738 = vmatprep.mubr.f32.mxu0 0.0
        %1739 = vmatmul.mubr.f32.gmra.mrb[0].mxu0 %v1518
        %v1740 = vpop.f32.mrb[0].mxu0
        %v1741 = vadd.f32 0.0, %v1740
        %v1742 = vpop.f32.mrb[0].mxu0
        %1743 = vmatprep.mubr.f32.mxu0 0.0
        %1744 = vmatmul.mubr.f32.gmra.mrb[0].mxu0 %v1521
        %v1745 = vpop.f32.mrb[0].mxu0
        %v1746 = vadd.f32 0.0, %v1745
        %v1747 = vpop.f32.mrb[0].mxu0
        %1748 = vmatprep.mubr.f32.mxu0 0.0
        %1749 = vmatmul.mubr.f32.gmra.mrb[0].mxu0 %v1524
        %v1750 = vpop.f32.mrb[0].mxu0
        %v1751 = vadd.f32 0.0, %v1750
        %v1752 = vpop.f32.mrb[0].mxu0
        %1753 = vdwg.mxu0
        %v1754 = vadd.f32 %v1364, %v1596
        %v1755 = vadd.f32 %v1365, %v1601
        %v1756 = vadd.f32 %v1366, %v1606
        %v1757 = vadd.f32 %v1367, %v1611
        %v1758 = vadd.f32 %v1368, %v1616
        %v1759 = vadd.f32 %v1369, %v1621
        %v1760 = vadd.f32 %v1370, %v1626
        %v1761 = vadd.f32 %v1371, %v1631
        %v1762 = vadd.f32 %v1372, %v1636
        %v1763 = vadd.f32 %v1373, %v1641
        %v1764 = vadd.f32 %v1374, %v1646
        %v1765 = vadd.f32 %v1375, %v1651
        %v1766 = vadd.f32 %v1376, %v1656
        %v1767 = vadd.f32 %v1377, %v1661
        %v1768 = vadd.f32 %v1378, %v1666
        %v1769 = vadd.f32 %v1379, %v1671
        %v1770 = vadd.f32 %v1380, %v1676
        %v1771 = vadd.f32 %v1381, %v1681
        %v1772 = vadd.f32 %v1382, %v1686
        %v1773 = vadd.f32 %v1383, %v1691
        %v1774 = vadd.f32 %v1384, %v1696
        %v1775 = vadd.f32 %v1385, %v1701
        %v1776 = vadd.f32 %v1386, %v1706
        %v1777 = vadd.f32 %v1387, %v1711
        %v1778 = vadd.f32 %v1388, %v1716
        %v1779 = vadd.f32 %v1389, %v1721
        %v1780 = vadd.f32 %v1390, %v1726
        %v1781 = vadd.f32 %v1391, %v1731
        %v1782 = vadd.f32 %v1392, %v1736
        %v1783 = vadd.f32 %v1393, %v1741
        %v1784 = vadd.f32 %v1394, %v1746
        %v1785 = vadd.f32 %v1395, %v1751
        %v1786 = vld [vmem:[%s257 + $0x1] sm:$0xff]
        %v1787 = vld [vmem:[%s257 + $0x9] sm:$0xff]
        %v1788 = vld [vmem:[%s257 + $0x19] sm:$0xff]
        %v1789 = vld [vmem:[%s257 + $0x21] sm:$0xff]
        %v1790 = vld [vmem:[%s257 + $0x31] sm:$0xff]
        %v1791 = vld [vmem:[%s257 + $0x39] sm:$0xff]
        %v1792 = vld [vmem:[%s257 + $0x49] sm:$0xff]
        %v1793 = vld [vmem:[%s257 + $0x51] sm:$0xff]
        %v1794 = vld [vmem:[%s257 + $0x61] sm:$0xff]
        %v1795 = vld [vmem:[%s257 + $0x69] sm:$0xff]
        %v1796 = vld [vmem:[%s257 + $0x79] sm:$0xff]
        %v1797 = vld [vmem:[%s257 + $0x81] sm:$0xff]
        %v1798 = vld [vmem:[%s257 + $0x91] sm:$0xff]
        %v1799 = vld [vmem:[%s257 + $0x99] sm:$0xff]
        %v1800 = vld [vmem:[%s257 + $0xa9] sm:$0xff]
        %v1801 = vld [vmem:[%s257 + $0xb1] sm:$0xff]
        %v1802 = vld [vmem:[%s257 + $0xc1] sm:$0xff]
        %v1803 = vld [vmem:[%s257 + $0xc9] sm:$0xff]
        %v1804 = vld [vmem:[%s257 + $0xd9] sm:$0xff]
        %v1805 = vld [vmem:[%s257 + $0xe1] sm:$0xff]
        %v1806 = vld [vmem:[%s257 + $0xf1] sm:$0xff]
        %v1807 = vld [vmem:[%s257 + $0xf9] sm:$0xff]
        %v1808 = vld [vmem:[%s257 + $0x109] sm:$0xff]
        %v1809 = vld [vmem:[%s257 + $0x111] sm:$0xff]
        %v1810 = vld [vmem:[%s257 + $0x121] sm:$0xff]
        %v1811 = vld [vmem:[%s257 + $0x129] sm:$0xff]
        %v1812 = vld [vmem:[%s257 + $0x139] sm:$0xff]
        %v1813 = vld [vmem:[%s257 + $0x141] sm:$0xff]
        %v1814 = vld [vmem:[%s257 + $0x151] sm:$0xff]
        %v1815 = vld [vmem:[%s257 + $0x159] sm:$0xff]
        %v1816 = vld [vmem:[%s257 + $0x169] sm:$0xff]
        %v1817 = vld [vmem:[%s257 + $0x171] sm:$0xff]
        %s1818 = scalar_lea.vmem %s1, 16
        %v1819 = vld [vmem:[%s1818] sm:$0xf]
        %v1821 = vsel %vm169, %v1786, 0
        %v1824 = vsel %vm169, %v1787, 0
        %v1827 = vsel %vm169, %v1788, 0
        %v1830 = vsel %vm169, %v1789, 0
        %v1833 = vsel %vm169, %v1790, 0
        %v1836 = vsel %vm169, %v1791, 0
        %v1839 = vsel %vm169, %v1792, 0
        %v1842 = vsel %vm169, %v1793, 0
        %v1845 = vsel %vm169, %v1794, 0
        %v1848 = vsel %vm169, %v1795, 0
        %v1851 = vsel %vm169, %v1796, 0
        %v1854 = vsel %vm169, %v1797, 0
        %v1857 = vsel %vm169, %v1798, 0
        %v1860 = vsel %vm169, %v1799, 0
        %v1863 = vsel %vm169, %v1800, 0
        %v1866 = vsel %vm169, %v1801, 0
        %v1869 = vsel %vm169, %v1802, 0
        %v1872 = vsel %vm169, %v1803, 0
        %v1875 = vsel %vm169, %v1804, 0
        %v1878 = vsel %vm169, %v1805, 0
        %v1881 = vsel %vm169, %v1806, 0
        %v1884 = vsel %vm169, %v1807, 0
        %v1887 = vsel %vm169, %v1808, 0
        %v1890 = vsel %vm169, %v1809, 0
        %v1893 = vsel %vm169, %v1810, 0
        %v1896 = vsel %vm169, %v1811, 0
        %v1899 = vsel %vm169, %v1812, 0
        %v1902 = vsel %vm169, %v1813, 0
        %v1905 = vsel %vm169, %v1814, 0
        %v1908 = vsel %vm169, %v1815, 0
        %v1911 = vsel %vm169, %v1816, 0
        %v1914 = vsel %vm169, %v1817, 0
        %v1917 = vsel %vm453, %v1819, 0
        %1919 = vmatprep.subr.mxu0 0.0
        %1920 = vmatpush1.msra.mxu0 %v1917
        %1921 = vmatprep.subr.mxu0 0.0
        %1922 = vmatpush1.msra.mxu0 0.0
        %1923 = vmatprep.subr.mxu0 0.0
        %1924 = vmatpush1.msra.mxu0 0.0
        %1925 = vmatprep.subr.mxu0 0.0
        %1926 = vmatpush1.msra.mxu0 0.0
        %1927 = vmatprep.subr.mxu0 0.0
        %1928 = vmatpush1.msra.mxu0 0.0
        %1929 = vmatprep.subr.mxu0 0.0
        %1930 = vmatpush1.msra.mxu0 0.0
        %1931 = vmatprep.subr.mxu0 0.0
        %1932 = vmatpush1.msra.mxu0 0.0
        %1933 = vmatprep.subr.mxu0 0.0
        %1934 = vmatpush1.msra.mxu0 0.0
        %1935 = vmatprep.subr.mxu0 0.0
        %1936 = vmatpush1.msra.mxu0 0.0
        %1937 = vmatprep.subr.mxu0 0.0
        %1938 = vmatpush1.msra.mxu0 0.0
        %1939 = vmatprep.subr.mxu0 0.0
        %1940 = vmatpush1.msra.mxu0 0.0
        %1941 = vmatprep.subr.mxu0 0.0
        %1942 = vmatpush1.msra.mxu0 0.0
        %1943 = vmatprep.subr.mxu0 0.0
        %1944 = vmatpush1.msra.mxu0 0.0
        %1945 = vmatprep.subr.mxu0 0.0
        %1946 = vmatpush1.msra.mxu0 0.0
        %1947 = vmatprep.subr.mxu0 0.0
        %1948 = vmatpush1.msra.mxu0 0.0
        %1949 = vmatprep.subr.mxu0 0.0
        %1950 = vmatpush1.msra.mxu0 0.0
        %1951 = vmatprep.subr.mxu0 0.0
        %1952 = vmatpush1.msra.mxu0 0.0
        %1953 = vmatprep.subr.mxu0 0.0
        %1954 = vmatpush1.msra.mxu0 0.0
        %1955 = vmatprep.subr.mxu0 0.0
        %1956 = vmatpush1.msra.mxu0 0.0
        %1957 = vmatprep.subr.mxu0 0.0
        %1958 = vmatpush1.msra.mxu0 0.0
        %1959 = vmatprep.subr.mxu0 0.0
        %1960 = vmatpush1.msra.mxu0 0.0
        %1961 = vmatprep.subr.mxu0 0.0
        %1962 = vmatpush1.msra.mxu0 0.0
        %1963 = vmatprep.subr.mxu0 0.0
        %1964 = vmatpush1.msra.mxu0 0.0
        %1965 = vmatprep.subr.mxu0 0.0
        %1966 = vmatpush1.msra.mxu0 0.0
        %1967 = vmatprep.subr.mxu0 0.0
        %1968 = vmatpush1.msra.mxu0 0.0
        %1969 = vmatprep.subr.mxu0 0.0
        %1970 = vmatpush1.msra.mxu0 0.0
        %1971 = vmatprep.subr.mxu0 0.0
        %1972 = vmatpush1.msra.mxu0 0.0
        %1973 = vmatprep.subr.mxu0 0.0
        %1974 = vmatpush1.msra.mxu0 0.0
        %1975 = vmatprep.subr.mxu0 0.0
        %1976 = vmatpush1.msra.mxu0 0.0
        %1977 = vmatprep.subr.mxu0 0.0
        %1978 = vmatpush1.msra.mxu0 0.0
        %1979 = vmatprep.subr.mxu0 0.0
        %1980 = vmatpush1.msra.mxu0 0.0
        %1981 = vmatprep.subr.mxu0 0.0
        %1982 = vmatpush1.msra.mxu0 0.0
        %1983 = vmatprep.mubr.f32.mxu0 0.0
        %1984 = vmatmul.mubr.f32.gmra.mrb[0].mxu0 %v1821
        %v1985 = vpop.f32.mrb[0].mxu0
        %v1986 = vadd.f32 0.0, %v1985
        %v1987 = vpop.f32.mrb[0].mxu0
        %1988 = vmatprep.mubr.f32.mxu0 0.0
        %1989 = vmatmul.mubr.f32.gmra.mrb[0].mxu0 %v1824
        %v1990 = vpop.f32.mrb[0].mxu0
        %v1991 = vadd.f32 0.0, %v1990
        %v1992 = vpop.f32.mrb[0].mxu0
        %1993 = vmatprep.mubr.f32.mxu0 0.0
        %1994 = vmatmul.mubr.f32.gmra.mrb[0].mxu0 %v1827
        %v1995 = vpop.f32.mrb[0].mxu0
        %v1996 = vadd.f32 0.0, %v1995
        %v1997 = vpop.f32.mrb[0].mxu0
        %1998 = vmatprep.mubr.f32.mxu0 0.0
        %1999 = vmatmul.mubr.f32.gmra.mrb[0].mxu0 %v1830
        %v2000 = vpop.f32.mrb[0].mxu0
        %v2001 = vadd.f32 0.0, %v2000
        %v2002 = vpop.f32.mrb[0].mxu0
        %2003 = vmatprep.mubr.f32.mxu0 0.0
        %2004 = vmatmul.mubr.f32.gmra.mrb[0].mxu0 %v1833
        %v2005 = vpop.f32.mrb[0].mxu0
        %v2006 = vadd.f32 0.0, %v2005
        %v2007 = vpop.f32.mrb[0].mxu0
        %2008 = vmatprep.mubr.f32.mxu0 0.0
        %2009 = vmatmul.mubr.f32.gmra.mrb[0].mxu0 %v1836
        %v2010 = vpop.f32.mrb[0].mxu0
        %v2011 = vadd.f32 0.0, %v2010
        %v2012 = vpop.f32.mrb[0].mxu0
        %2013 = vmatprep.mubr.f32.mxu0 0.0
        %2014 = vmatmul.mubr.f32.gmra.mrb[0].mxu0 %v1839
        %v2015 = vpop.f32.mrb[0].mxu0
        %v2016 = vadd.f32 0.0, %v2015
        %v2017 = vpop.f32.mrb[0].mxu0
        %2018 = vmatprep.mubr.f32.mxu0 0.0
        %2019 = vmatmul.mubr.f32.gmra.mrb[0].mxu0 %v1842
        %v2020 = vpop.f32.mrb[0].mxu0
        %v2021 = vadd.f32 0.0, %v2020
        %v2022 = vpop.f32.mrb[0].mxu0
        %2023 = vmatprep.mubr.f32.mxu0 0.0
        %2024 = vmatmul.mubr.f32.gmra.mrb[0].mxu0 %v1845
        %v2025 = vpop.f32.mrb[0].mxu0
        %v2026 = vadd.f32 0.0, %v2025
        %v2027 = vpop.f32.mrb[0].mxu0
        %2028 = vmatprep.mubr.f32.mxu0 0.0
        %2029 = vmatmul.mubr.f32.gmra.mrb[0].mxu0 %v1848
        %v2030 = vpop.f32.mrb[0].mxu0
        %v2031 = vadd.f32 0.0, %v2030
        %v2032 = vpop.f32.mrb[0].mxu0
        %2033 = vmatprep.mubr.f32.mxu0 0.0
        %2034 = vmatmul.mubr.f32.gmra.mrb[0].mxu0 %v1851
        %v2035 = vpop.f32.mrb[0].mxu0
        %v2036 = vadd.f32 0.0, %v2035
        %v2037 = vpop.f32.mrb[0].mxu0
        %2038 = vmatprep.mubr.f32.mxu0 0.0
        %2039 = vmatmul.mubr.f32.gmra.mrb[0].mxu0 %v1854
        %v2040 = vpop.f32.mrb[0].mxu0
        %v2041 = vadd.f32 0.0, %v2040
        %v2042 = vpop.f32.mrb[0].mxu0
        %2043 = vmatprep.mubr.f32.mxu0 0.0
        %2044 = vmatmul.mubr.f32.gmra.mrb[0].mxu0 %v1857
        %v2045 = vpop.f32.mrb[0].mxu0
        %v2046 = vadd.f32 0.0, %v2045
        %v2047 = vpop.f32.mrb[0].mxu0
        %2048 = vmatprep.mubr.f32.mxu0 0.0
        %2049 = vmatmul.mubr.f32.gmra.mrb[0].mxu0 %v1860
        %v2050 = vpop.f32.mrb[0].mxu0
        %v2051 = vadd.f32 0.0, %v2050
        %v2052 = vpop.f32.mrb[0].mxu0
        %2053 = vmatprep.mubr.f32.mxu0 0.0
        %2054 = vmatmul.mubr.f32.gmra.mrb[0].mxu0 %v1863
        %v2055 = vpop.f32.mrb[0].mxu0
        %v2056 = vadd.f32 0.0, %v2055
        %v2057 = vpop.f32.mrb[0].mxu0
        %2058 = vmatprep.mubr.f32.mxu0 0.0
        %2059 = vmatmul.mubr.f32.gmra.mrb[0].mxu0 %v1866
        %v2060 = vpop.f32.mrb[0].mxu0
        %v2061 = vadd.f32 0.0, %v2060
        %v2062 = vpop.f32.mrb[0].mxu0
        %2063 = vmatprep.mubr.f32.mxu0 0.0
        %2064 = vmatmul.mubr.f32.gmra.mrb[0].mxu0 %v1869
        %v2065 = vpop.f32.mrb[0].mxu0
        %v2066 = vadd.f32 0.0, %v2065
        %v2067 = vpop.f32.mrb[0].mxu0
        %2068 = vmatprep.mubr.f32.mxu0 0.0
        %2069 = vmatmul.mubr.f32.gmra.mrb[0].mxu0 %v1872
        %v2070 = vpop.f32.mrb[0].mxu0
        %v2071 = vadd.f32 0.0, %v2070
        %v2072 = vpop.f32.mrb[0].mxu0
        %2073 = vmatprep.mubr.f32.mxu0 0.0
        %2074 = vmatmul.mubr.f32.gmra.mrb[0].mxu0 %v1875
        %v2075 = vpop.f32.mrb[0].mxu0
        %v2076 = vadd.f32 0.0, %v2075
        %v2077 = vpop.f32.mrb[0].mxu0
        %2078 = vmatprep.mubr.f32.mxu0 0.0
        %2079 = vmatmul.mubr.f32.gmra.mrb[0].mxu0 %v1878
        %v2080 = vpop.f32.mrb[0].mxu0
        %v2081 = vadd.f32 0.0, %v2080
        %v2082 = vpop.f32.mrb[0].mxu0
        %2083 = vmatprep.mubr.f32.mxu0 0.0
        %2084 = vmatmul.mubr.f32.gmra.mrb[0].mxu0 %v1881
        %v2085 = vpop.f32.mrb[0].mxu0
        %v2086 = vadd.f32 0.0, %v2085
        %v2087 = vpop.f32.mrb[0].mxu0
        %2088 = vmatprep.mubr.f32.mxu0 0.0
        %2089 = vmatmul.mubr.f32.gmra.mrb[0].mxu0 %v1884
        %v2090 = vpop.f32.mrb[0].mxu0
        %v2091 = vadd.f32 0.0, %v2090
        %v2092 = vpop.f32.mrb[0].mxu0
        %2093 = vmatprep.mubr.f32.mxu0 0.0
        %2094 = vmatmul.mubr.f32.gmra.mrb[0].mxu0 %v1887
        %v2095 = vpop.f32.mrb[0].mxu0
        %v2096 = vadd.f32 0.0, %v2095
        %v2097 = vpop.f32.mrb[0].mxu0
        %2098 = vmatprep.mubr.f32.mxu0 0.0
        %2099 = vmatmul.mubr.f32.gmra.mrb[0].mxu0 %v1890
        %v2100 = vpop.f32.mrb[0].mxu0
        %v2101 = vadd.f32 0.0, %v2100
        %v2102 = vpop.f32.mrb[0].mxu0
        %2103 = vmatprep.mubr.f32.mxu0 0.0
        %2104 = vmatmul.mubr.f32.gmra.mrb[0].mxu0 %v1893
        %v2105 = vpop.f32.mrb[0].mxu0
        %v2106 = vadd.f32 0.0, %v2105
        %v2107 = vpop.f32.mrb[0].mxu0
        %2108 = vmatprep.mubr.f32.mxu0 0.0
        %2109 = vmatmul.mubr.f32.gmra.mrb[0].mxu0 %v1896
        %v2110 = vpop.f32.mrb[0].mxu0
        %v2111 = vadd.f32 0.0, %v2110
        %v2112 = vpop.f32.mrb[0].mxu0
        %2113 = vmatprep.mubr.f32.mxu0 0.0
        %2114 = vmatmul.mubr.f32.gmra.mrb[0].mxu0 %v1899
        %v2115 = vpop.f32.mrb[0].mxu0
        %v2116 = vadd.f32 0.0, %v2115
        %v2117 = vpop.f32.mrb[0].mxu0
        %2118 = vmatprep.mubr.f32.mxu0 0.0
        %2119 = vmatmul.mubr.f32.gmra.mrb[0].mxu0 %v1902
        %v2120 = vpop.f32.mrb[0].mxu0
        %v2121 = vadd.f32 0.0, %v2120
        %v2122 = vpop.f32.mrb[0].mxu0
        %2123 = vmatprep.mubr.f32.mxu0 0.0
        %2124 = vmatmul.mubr.f32.gmra.mrb[0].mxu0 %v1905
        %v2125 = vpop.f32.mrb[0].mxu0
        %v2126 = vadd.f32 0.0, %v2125
        %v2127 = vpop.f32.mrb[0].mxu0
        %2128 = vmatprep.mubr.f32.mxu0 0.0
        %2129 = vmatmul.mubr.f32.gmra.mrb[0].mxu0 %v1908
        %v2130 = vpop.f32.mrb[0].mxu0
        %v2131 = vadd.f32 0.0, %v2130
        %v2132 = vpop.f32.mrb[0].mxu0
        %2133 = vmatprep.mubr.f32.mxu0 0.0
        %2134 = vmatmul.mubr.f32.gmra.mrb[0].mxu0 %v1911
        %v2135 = vpop.f32.mrb[0].mxu0
        %v2136 = vadd.f32 0.0, %v2135
        %v2137 = vpop.f32.mrb[0].mxu0
        %2138 = vmatprep.mubr.f32.mxu0 0.0
        %2139 = vmatmul.mubr.f32.gmra.mrb[0].mxu0 %v1914
        %v2140 = vpop.f32.mrb[0].mxu0
        %v2141 = vadd.f32 0.0, %v2140
        %v2142 = vpop.f32.mrb[0].mxu0
        %2143 = vdwg.mxu0
        %v2144 = vadd.f32 %v1754, %v1986
        %v2145 = vadd.f32 %v1755, %v1991
        %v2146 = vadd.f32 %v1756, %v1996
        %v2147 = vadd.f32 %v1757, %v2001
        %v2148 = vadd.f32 %v1758, %v2006
        %v2149 = vadd.f32 %v1759, %v2011
        %v2150 = vadd.f32 %v1760, %v2016
        %v2151 = vadd.f32 %v1761, %v2021
        %v2152 = vadd.f32 %v1762, %v2026
        %v2153 = vadd.f32 %v1763, %v2031
        %v2154 = vadd.f32 %v1764, %v2036
        %v2155 = vadd.f32 %v1765, %v2041
        %v2156 = vadd.f32 %v1766, %v2046
        %v2157 = vadd.f32 %v1767, %v2051
        %v2158 = vadd.f32 %v1768, %v2056
        %v2159 = vadd.f32 %v1769, %v2061
        %v2160 = vadd.f32 %v1770, %v2066
        %v2161 = vadd.f32 %v1771, %v2071
        %v2162 = vadd.f32 %v1772, %v2076
        %v2163 = vadd.f32 %v1773, %v2081
        %v2164 = vadd.f32 %v1774, %v2086
        %v2165 = vadd.f32 %v1775, %v2091
        %v2166 = vadd.f32 %v1776, %v2096
        %v2167 = vadd.f32 %v1777, %v2101
        %v2168 = vadd.f32 %v1778, %v2106
        %v2169 = vadd.f32 %v1779, %v2111
        %v2170 = vadd.f32 %v1780, %v2116
        %v2171 = vadd.f32 %v1781, %v2121
        %v2172 = vadd.f32 %v1782, %v2126
        %v2173 = vadd.f32 %v1783, %v2131
        %v2174 = vadd.f32 %v1784, %v2136
        %v2175 = vadd.f32 %v1785, %v2141
        %v2176 = vld [vmem:[%s257 + $0x2] sm:$0xff]
        %v2177 = vld [vmem:[%s257 + $0xa] sm:$0xff]
        %v2178 = vld [vmem:[%s257 + $0x1a] sm:$0xff]
        %v2179 = vld [vmem:[%s257 + $0x22] sm:$0xff]
        %v2180 = vld [vmem:[%s257 + $0x32] sm:$0xff]
        %v2181 = vld [vmem:[%s257 + $0x3a] sm:$0xff]
        %v2182 = vld [vmem:[%s257 + $0x4a] sm:$0xff]
        %v2183 = vld [vmem:[%s257 + $0x52] sm:$0xff]
        %v2184 = vld [vmem:[%s257 + $0x62] sm:$0xff]
        %v2185 = vld [vmem:[%s257 + $0x6a] sm:$0xff]
        %v2186 = vld [vmem:[%s257 + $0x7a] sm:$0xff]
        %v2187 = vld [vmem:[%s257 + $0x82] sm:$0xff]
        %v2188 = vld [vmem:[%s257 + $0x92] sm:$0xff]
        %v2189 = vld [vmem:[%s257 + $0x9a] sm:$0xff]
        %v2190 = vld [vmem:[%s257 + $0xaa] sm:$0xff]
        %v2191 = vld [vmem:[%s257 + $0xb2] sm:$0xff]
        %v2192 = vld [vmem:[%s257 + $0xc2] sm:$0xff]
        %v2193 = vld [vmem:[%s257 + $0xca] sm:$0xff]
        %v2194 = vld [vmem:[%s257 + $0xda] sm:$0xff]
        %v2195 = vld [vmem:[%s257 + $0xe2] sm:$0xff]
        %v2196 = vld [vmem:[%s257 + $0xf2] sm:$0xff]
        %v2197 = vld [vmem:[%s257 + $0xfa] sm:$0xff]
        %v2198 = vld [vmem:[%s257 + $0x10a] sm:$0xff]
        %v2199 = vld [vmem:[%s257 + $0x112] sm:$0xff]
        %v2200 = vld [vmem:[%s257 + $0x122] sm:$0xff]
        %v2201 = vld [vmem:[%s257 + $0x12a] sm:$0xff]
        %v2202 = vld [vmem:[%s257 + $0x13a] sm:$0xff]
        %v2203 = vld [vmem:[%s257 + $0x142] sm:$0xff]
        %v2204 = vld [vmem:[%s257 + $0x152] sm:$0xff]
        %v2205 = vld [vmem:[%s257 + $0x15a] sm:$0xff]
        %v2206 = vld [vmem:[%s257 + $0x16a] sm:$0xff]
        %v2207 = vld [vmem:[%s257 + $0x172] sm:$0xff]
        %s2208 = scalar_lea.vmem %s1, 20
        %v2209 = vld [vmem:[%s2208] sm:$0xf]
        %v2211 = vsel %vm169, %v2176, 0
        %v2214 = vsel %vm169, %v2177, 0
        %v2217 = vsel %vm169, %v2178, 0
        %v2220 = vsel %vm169, %v2179, 0
        %v2223 = vsel %vm169, %v2180, 0
        %v2226 = vsel %vm169, %v2181, 0
        %v2229 = vsel %vm169, %v2182, 0
        %v2232 = vsel %vm169, %v2183, 0
        %v2235 = vsel %vm169, %v2184, 0
        %v2238 = vsel %vm169, %v2185, 0
        %v2241 = vsel %vm169, %v2186, 0
        %v2244 = vsel %vm169, %v2187, 0
        %v2247 = vsel %vm169, %v2188, 0
        %v2250 = vsel %vm169, %v2189, 0
        %v2253 = vsel %vm169, %v2190, 0
        %v2256 = vsel %vm169, %v2191, 0
        %v2259 = vsel %vm169, %v2192, 0
        %v2262 = vsel %vm169, %v2193, 0
        %v2265 = vsel %vm169, %v2194, 0
        %v2268 = vsel %vm169, %v2195, 0
        %v2271 = vsel %vm169, %v2196, 0
        %v2274 = vsel %vm169, %v2197, 0
        %v2277 = vsel %vm169, %v2198, 0
        %v2280 = vsel %vm169, %v2199, 0
        %v2283 = vsel %vm169, %v2200, 0
        %v2286 = vsel %vm169, %v2201, 0
        %v2289 = vsel %vm169, %v2202, 0
        %v2292 = vsel %vm169, %v2203, 0
        %v2295 = vsel %vm169, %v2204, 0
        %v2298 = vsel %vm169, %v2205, 0
        %v2301 = vsel %vm169, %v2206, 0
        %v2304 = vsel %vm169, %v2207, 0
        %v2307 = vsel %vm453, %v2209, 0
        %2309 = vmatprep.subr.mxu0 0.0
        %2310 = vmatpush1.msra.mxu0 %v2307
        %2311 = vmatprep.subr.mxu0 0.0
        %2312 = vmatpush1.msra.mxu0 0.0
        %2313 = vmatprep.subr.mxu0 0.0
        %2314 = vmatpush1.msra.mxu0 0.0
        %2315 = vmatprep.subr.mxu0 0.0
        %2316 = vmatpush1.msra.mxu0 0.0
        %2317 = vmatprep.subr.mxu0 0.0
        %2318 = vmatpush1.msra.mxu0 0.0
        %2319 = vmatprep.subr.mxu0 0.0
        %2320 = vmatpush1.msra.mxu0 0.0
        %2321 = vmatprep.subr.mxu0 0.0
        %2322 = vmatpush1.msra.mxu0 0.0
        %2323 = vmatprep.subr.mxu0 0.0
        %2324 = vmatpush1.msra.mxu0 0.0
        %2325 = vmatprep.subr.mxu0 0.0
        %2326 = vmatpush1.msra.mxu0 0.0
        %2327 = vmatprep.subr.mxu0 0.0
        %2328 = vmatpush1.msra.mxu0 0.0
        %2329 = vmatprep.subr.mxu0 0.0
        %2330 = vmatpush1.msra.mxu0 0.0
        %2331 = vmatprep.subr.mxu0 0.0
        %2332 = vmatpush1.msra.mxu0 0.0
        %2333 = vmatprep.subr.mxu0 0.0
        %2334 = vmatpush1.msra.mxu0 0.0
        %2335 = vmatprep.subr.mxu0 0.0
        %2336 = vmatpush1.msra.mxu0 0.0
        %2337 = vmatprep.subr.mxu0 0.0
        %2338 = vmatpush1.msra.mxu0 0.0
        %2339 = vmatprep.subr.mxu0 0.0
        %2340 = vmatpush1.msra.mxu0 0.0
        %2341 = vmatprep.subr.mxu0 0.0
        %2342 = vmatpush1.msra.mxu0 0.0
        %2343 = vmatprep.subr.mxu0 0.0
        %2344 = vmatpush1.msra.mxu0 0.0
        %2345 = vmatprep.subr.mxu0 0.0
        %2346 = vmatpush1.msra.mxu0 0.0
        %2347 = vmatprep.subr.mxu0 0.0
        %2348 = vmatpush1.msra.mxu0 0.0
        %2349 = vmatprep.subr.mxu0 0.0
        %2350 = vmatpush1.msra.mxu0 0.0
        %2351 = vmatprep.subr.mxu0 0.0
        %2352 = vmatpush1.msra.mxu0 0.0
        %2353 = vmatprep.subr.mxu0 0.0
        %2354 = vmatpush1.msra.mxu0 0.0
        %2355 = vmatprep.subr.mxu0 0.0
        %2356 = vmatpush1.msra.mxu0 0.0
        %2357 = vmatprep.subr.mxu0 0.0
        %2358 = vmatpush1.msra.mxu0 0.0
        %2359 = vmatprep.subr.mxu0 0.0
        %2360 = vmatpush1.msra.mxu0 0.0
        %2361 = vmatprep.subr.mxu0 0.0
        %2362 = vmatpush1.msra.mxu0 0.0
        %2363 = vmatprep.subr.mxu0 0.0
        %2364 = vmatpush1.msra.mxu0 0.0
        %2365 = vmatprep.subr.mxu0 0.0
        %2366 = vmatpush1.msra.mxu0 0.0
        %2367 = vmatprep.subr.mxu0 0.0
        %2368 = vmatpush1.msra.mxu0 0.0
        %2369 = vmatprep.subr.mxu0 0.0
        %2370 = vmatpush1.msra.mxu0 0.0
        %2371 = vmatprep.subr.mxu0 0.0
        %2372 = vmatpush1.msra.mxu0 0.0
        %2373 = vmatprep.mubr.f32.mxu0 0.0
        %2374 = vmatmul.mubr.f32.gmra.mrb[0].mxu0 %v2211
        %v2375 = vpop.f32.mrb[0].mxu0
        %v2376 = vadd.f32 0.0, %v2375
        %v2377 = vpop.f32.mrb[0].mxu0
        %2378 = vmatprep.mubr.f32.mxu0 0.0
        %2379 = vmatmul.mubr.f32.gmra.mrb[0].mxu0 %v2214
        %v2380 = vpop.f32.mrb[0].mxu0
        %v2381 = vadd.f32 0.0, %v2380
        %v2382 = vpop.f32.mrb[0].mxu0
        %2383 = vmatprep.mubr.f32.mxu0 0.0
        %2384 = vmatmul.mubr.f32.gmra.mrb[0].mxu0 %v2217
        %v2385 = vpop.f32.mrb[0].mxu0
        %v2386 = vadd.f32 0.0, %v2385
        %v2387 = vpop.f32.mrb[0].mxu0
        %2388 = vmatprep.mubr.f32.mxu0 0.0
        %2389 = vmatmul.mubr.f32.gmra.mrb[0].mxu0 %v2220
        %v2390 = vpop.f32.mrb[0].mxu0
        %v2391 = vadd.f32 0.0, %v2390
        %v2392 = vpop.f32.mrb[0].mxu0
        %2393 = vmatprep.mubr.f32.mxu0 0.0
        %2394 = vmatmul.mubr.f32.gmra.mrb[0].mxu0 %v2223
        %v2395 = vpop.f32.mrb[0].mxu0
        %v2396 = vadd.f32 0.0, %v2395
        %v2397 = vpop.f32.mrb[0].mxu0
        %2398 = vmatprep.mubr.f32.mxu0 0.0
        %2399 = vmatmul.mubr.f32.gmra.mrb[0].mxu0 %v2226
        %v2400 = vpop.f32.mrb[0].mxu0
        %v2401 = vadd.f32 0.0, %v2400
        %v2402 = vpop.f32.mrb[0].mxu0
        %2403 = vmatprep.mubr.f32.mxu0 0.0
        %2404 = vmatmul.mubr.f32.gmra.mrb[0].mxu0 %v2229
        %v2405 = vpop.f32.mrb[0].mxu0
        %v2406 = vadd.f32 0.0, %v2405
        %v2407 = vpop.f32.mrb[0].mxu0
        %2408 = vmatprep.mubr.f32.mxu0 0.0
        %2409 = vmatmul.mubr.f32.gmra.mrb[0].mxu0 %v2232
        %v2410 = vpop.f32.mrb[0].mxu0
        %v2411 = vadd.f32 0.0, %v2410
        %v2412 = vpop.f32.mrb[0].mxu0
        %2413 = vmatprep.mubr.f32.mxu0 0.0
        %2414 = vmatmul.mubr.f32.gmra.mrb[0].mxu0 %v2235
        %v2415 = vpop.f32.mrb[0].mxu0
        %v2416 = vadd.f32 0.0, %v2415
        %v2417 = vpop.f32.mrb[0].mxu0
        %2418 = vmatprep.mubr.f32.mxu0 0.0
        %2419 = vmatmul.mubr.f32.gmra.mrb[0].mxu0 %v2238
        %v2420 = vpop.f32.mrb[0].mxu0
        %v2421 = vadd.f32 0.0, %v2420
        %v2422 = vpop.f32.mrb[0].mxu0
        %2423 = vmatprep.mubr.f32.mxu0 0.0
        %2424 = vmatmul.mubr.f32.gmra.mrb[0].mxu0 %v2241
        %v2425 = vpop.f32.mrb[0].mxu0
        %v2426 = vadd.f32 0.0, %v2425
        %v2427 = vpop.f32.mrb[0].mxu0
        %2428 = vmatprep.mubr.f32.mxu0 0.0
        %2429 = vmatmul.mubr.f32.gmra.mrb[0].mxu0 %v2244
        %v2430 = vpop.f32.mrb[0].mxu0
        %v2431 = vadd.f32 0.0, %v2430
        %v2432 = vpop.f32.mrb[0].mxu0
        %2433 = vmatprep.mubr.f32.mxu0 0.0
        %2434 = vmatmul.mubr.f32.gmra.mrb[0].mxu0 %v2247
        %v2435 = vpop.f32.mrb[0].mxu0
        %v2436 = vadd.f32 0.0, %v2435
        %v2437 = vpop.f32.mrb[0].mxu0
        %2438 = vmatprep.mubr.f32.mxu0 0.0
        %2439 = vmatmul.mubr.f32.gmra.mrb[0].mxu0 %v2250
        %v2440 = vpop.f32.mrb[0].mxu0
        %v2441 = vadd.f32 0.0, %v2440
        %v2442 = vpop.f32.mrb[0].mxu0
        %2443 = vmatprep.mubr.f32.mxu0 0.0
        %2444 = vmatmul.mubr.f32.gmra.mrb[0].mxu0 %v2253
        %v2445 = vpop.f32.mrb[0].mxu0
        %v2446 = vadd.f32 0.0, %v2445
        %v2447 = vpop.f32.mrb[0].mxu0
        %2448 = vmatprep.mubr.f32.mxu0 0.0
        %2449 = vmatmul.mubr.f32.gmra.mrb[0].mxu0 %v2256
        %v2450 = vpop.f32.mrb[0].mxu0
        %v2451 = vadd.f32 0.0, %v2450
        %v2452 = vpop.f32.mrb[0].mxu0
        %2453 = vmatprep.mubr.f32.mxu0 0.0
        %2454 = vmatmul.mubr.f32.gmra.mrb[0].mxu0 %v2259
        %v2455 = vpop.f32.mrb[0].mxu0
        %v2456 = vadd.f32 0.0, %v2455
        %v2457 = vpop.f32.mrb[0].mxu0
        %2458 = vmatprep.mubr.f32.mxu0 0.0
        %2459 = vmatmul.mubr.f32.gmra.mrb[0].mxu0 %v2262
        %v2460 = vpop.f32.mrb[0].mxu0
        %v2461 = vadd.f32 0.0, %v2460
        %v2462 = vpop.f32.mrb[0].mxu0
        %2463 = vmatprep.mubr.f32.mxu0 0.0
        %2464 = vmatmul.mubr.f32.gmra.mrb[0].mxu0 %v2265
        %v2465 = vpop.f32.mrb[0].mxu0
        %v2466 = vadd.f32 0.0, %v2465
        %v2467 = vpop.f32.mrb[0].mxu0
        %2468 = vmatprep.mubr.f32.mxu0 0.0
        %2469 = vmatmul.mubr.f32.gmra.mrb[0].mxu0 %v2268
        %v2470 = vpop.f32.mrb[0].mxu0
        %v2471 = vadd.f32 0.0, %v2470
        %v2472 = vpop.f32.mrb[0].mxu0
        %2473 = vmatprep.mubr.f32.mxu0 0.0
        %2474 = vmatmul.mubr.f32.gmra.mrb[0].mxu0 %v2271
        %v2475 = vpop.f32.mrb[0].mxu0
        %v2476 = vadd.f32 0.0, %v2475
        %v2477 = vpop.f32.mrb[0].mxu0
        %2478 = vmatprep.mubr.f32.mxu0 0.0
        %2479 = vmatmul.mubr.f32.gmra.mrb[0].mxu0 %v2274
        %v2480 = vpop.f32.mrb[0].mxu0
        %v2481 = vadd.f32 0.0, %v2480
        %v2482 = vpop.f32.mrb[0].mxu0
        %2483 = vmatprep.mubr.f32.mxu0 0.0
        %2484 = vmatmul.mubr.f32.gmra.mrb[0].mxu0 %v2277
        %v2485 = vpop.f32.mrb[0].mxu0
        %v2486 = vadd.f32 0.0, %v2485
        %v2487 = vpop.f32.mrb[0].mxu0
        %2488 = vmatprep.mubr.f32.mxu0 0.0
        %2489 = vmatmul.mubr.f32.gmra.mrb[0].mxu0 %v2280
        %v2490 = vpop.f32.mrb[0].mxu0
        %v2491 = vadd.f32 0.0, %v2490
        %v2492 = vpop.f32.mrb[0].mxu0
        %2493 = vmatprep.mubr.f32.mxu0 0.0
        %2494 = vmatmul.mubr.f32.gmra.mrb[0].mxu0 %v2283
        %v2495 = vpop.f32.mrb[0].mxu0
        %v2496 = vadd.f32 0.0, %v2495
        %v2497 = vpop.f32.mrb[0].mxu0
        %2498 = vmatprep.mubr.f32.mxu0 0.0
        %2499 = vmatmul.mubr.f32.gmra.mrb[0].mxu0 %v2286
        %v2500 = vpop.f32.mrb[0].mxu0
        %v2501 = vadd.f32 0.0, %v2500
        %v2502 = vpop.f32.mrb[0].mxu0
        %2503 = vmatprep.mubr.f32.mxu0 0.0
        %2504 = vmatmul.mubr.f32.gmra.mrb[0].mxu0 %v2289
        %v2505 = vpop.f32.mrb[0].mxu0
        %v2506 = vadd.f32 0.0, %v2505
        %v2507 = vpop.f32.mrb[0].mxu0
        %2508 = vmatprep.mubr.f32.mxu0 0.0
        %2509 = vmatmul.mubr.f32.gmra.mrb[0].mxu0 %v2292
        %v2510 = vpop.f32.mrb[0].mxu0
        %v2511 = vadd.f32 0.0, %v2510
        %v2512 = vpop.f32.mrb[0].mxu0
        %2513 = vmatprep.mubr.f32.mxu0 0.0
        %2514 = vmatmul.mubr.f32.gmra.mrb[0].mxu0 %v2295
        %v2515 = vpop.f32.mrb[0].mxu0
        %v2516 = vadd.f32 0.0, %v2515
        %v2517 = vpop.f32.mrb[0].mxu0
        %2518 = vmatprep.mubr.f32.mxu0 0.0
        %2519 = vmatmul.mubr.f32.gmra.mrb[0].mxu0 %v2298
        %v2520 = vpop.f32.mrb[0].mxu0
        %v2521 = vadd.f32 0.0, %v2520
        %v2522 = vpop.f32.mrb[0].mxu0
        %2523 = vmatprep.mubr.f32.mxu0 0.0
        %2524 = vmatmul.mubr.f32.gmra.mrb[0].mxu0 %v2301
        %v2525 = vpop.f32.mrb[0].mxu0
        %v2526 = vadd.f32 0.0, %v2525
        %v2527 = vpop.f32.mrb[0].mxu0
        %2528 = vmatprep.mubr.f32.mxu0 0.0
        %2529 = vmatmul.mubr.f32.gmra.mrb[0].mxu0 %v2304
        %v2530 = vpop.f32.mrb[0].mxu0
        %v2531 = vadd.f32 0.0, %v2530
        %v2532 = vpop.f32.mrb[0].mxu0
        %2533 = vdwg.mxu0
        %v2534 = vadd.f32 %v2144, %v2376
        %v2535 = vadd.f32 %v2145, %v2381
        %v2536 = vadd.f32 %v2146, %v2386
        %v2537 = vadd.f32 %v2147, %v2391
        %v2538 = vadd.f32 %v2148, %v2396
        %v2539 = vadd.f32 %v2149, %v2401
        %v2540 = vadd.f32 %v2150, %v2406
        %v2541 = vadd.f32 %v2151, %v2411
        %v2542 = vadd.f32 %v2152, %v2416
        %v2543 = vadd.f32 %v2153, %v2421
        %v2544 = vadd.f32 %v2154, %v2426
        %v2545 = vadd.f32 %v2155, %v2431
        %v2546 = vadd.f32 %v2156, %v2436
        %v2547 = vadd.f32 %v2157, %v2441
        %v2548 = vadd.f32 %v2158, %v2446
        %v2549 = vadd.f32 %v2159, %v2451
        %v2550 = vadd.f32 %v2160, %v2456
        %v2551 = vadd.f32 %v2161, %v2461
        %v2552 = vadd.f32 %v2162, %v2466
        %v2553 = vadd.f32 %v2163, %v2471
        %v2554 = vadd.f32 %v2164, %v2476
        %v2555 = vadd.f32 %v2165, %v2481
        %v2556 = vadd.f32 %v2166, %v2486
        %v2557 = vadd.f32 %v2167, %v2491
        %v2558 = vadd.f32 %v2168, %v2496
        %v2559 = vadd.f32 %v2169, %v2501
        %v2560 = vadd.f32 %v2170, %v2506
        %v2561 = vadd.f32 %v2171, %v2511
        %v2562 = vadd.f32 %v2172, %v2516
        %v2563 = vadd.f32 %v2173, %v2521
        %v2564 = vadd.f32 %v2174, %v2526
        %v2565 = vadd.f32 %v2175, %v2531
        %s2566 = scalar_lea.vmem [#allocation2], 48
        %v2567 = vld [vmem:[%s2566] sm:$0xff]
        %v2568 = vld [vmem:[%s2566 + $0x8] sm:$0xff]
        %v2569 = vld [vmem:[%s2566 + $0x18] sm:$0xff]
        %v2570 = vld [vmem:[%s2566 + $0x20] sm:$0xff]
        %v2571 = vld [vmem:[%s2566 + $0x30] sm:$0xff]
        %v2572 = vld [vmem:[%s2566 + $0x38] sm:$0xff]
        %v2573 = vld [vmem:[%s2566 + $0x48] sm:$0xff]
        %v2574 = vld [vmem:[%s2566 + $0x50] sm:$0xff]
        %v2575 = vld [vmem:[%s2566 + $0x60] sm:$0xff]
        %v2576 = vld [vmem:[%s2566 + $0x68] sm:$0xff]
        %v2577 = vld [vmem:[%s2566 + $0x78] sm:$0xff]
        %v2578 = vld [vmem:[%s2566 + $0x80] sm:$0xff]
        %v2579 = vld [vmem:[%s2566 + $0x90] sm:$0xff]
        %v2580 = vld [vmem:[%s2566 + $0x98] sm:$0xff]
        %v2581 = vld [vmem:[%s2566 + $0xa8] sm:$0xff]
        %v2582 = vld [vmem:[%s2566 + $0xb0] sm:$0xff]
        %v2583 = vld [vmem:[%s2566 + $0xc0] sm:$0xff]
        %v2584 = vld [vmem:[%s2566 + $0xc8] sm:$0xff]
        %v2585 = vld [vmem:[%s2566 + $0xd8] sm:$0xff]
        %v2586 = vld [vmem:[%s2566 + $0xe0] sm:$0xff]
        %v2587 = vld [vmem:[%s2566 + $0xf0] sm:$0xff]
        %v2588 = vld [vmem:[%s2566 + $0xf8] sm:$0xff]
        %v2589 = vld [vmem:[%s2566 + $0x108] sm:$0xff]
        %v2590 = vld [vmem:[%s2566 + $0x110] sm:$0xff]
        %v2591 = vld [vmem:[%s2566 + $0x120] sm:$0xff]
        %v2592 = vld [vmem:[%s2566 + $0x128] sm:$0xff]
        %v2593 = vld [vmem:[%s2566 + $0x138] sm:$0xff]
        %v2594 = vld [vmem:[%s2566 + $0x140] sm:$0xff]
        %v2595 = vld [vmem:[%s2566 + $0x150] sm:$0xff]
        %v2596 = vld [vmem:[%s2566 + $0x158] sm:$0xff]
        %v2597 = vld [vmem:[%s2566 + $0x168] sm:$0xff]
        %v2598 = vld [vmem:[%s2566 + $0x170] sm:$0xff]
        %s2599 = scalar_lea.vmem %s1, 24
        %v2600 = vld [vmem:[%s2599] sm:$0xf]
        %v2602 = vsel %vm169, %v2567, 0
        %v2605 = vsel %vm169, %v2568, 0
        %v2608 = vsel %vm169, %v2569, 0
        %v2611 = vsel %vm169, %v2570, 0
        %v2614 = vsel %vm169, %v2571, 0
        %v2617 = vsel %vm169, %v2572, 0
        %v2620 = vsel %vm169, %v2573, 0
        %v2623 = vsel %vm169, %v2574, 0
        %v2626 = vsel %vm169, %v2575, 0
        %v2629 = vsel %vm169, %v2576, 0
        %v2632 = vsel %vm169, %v2577, 0
        %v2635 = vsel %vm169, %v2578, 0
        %v2638 = vsel %vm169, %v2579, 0
        %v2641 = vsel %vm169, %v2580, 0
        %v2644 = vsel %vm169, %v2581, 0
        %v2647 = vsel %vm169, %v2582, 0
        %v2650 = vsel %vm169, %v2583, 0
        %v2653 = vsel %vm169, %v2584, 0
        %v2656 = vsel %vm169, %v2585, 0
        %v2659 = vsel %vm169, %v2586, 0
        %v2662 = vsel %vm169, %v2587, 0
        %v2665 = vsel %vm169, %v2588, 0
        %v2668 = vsel %vm169, %v2589, 0
        %v2671 = vsel %vm169, %v2590, 0
        %v2674 = vsel %vm169, %v2591, 0
        %v2677 = vsel %vm169, %v2592, 0
        %v2680 = vsel %vm169, %v2593, 0
        %v2683 = vsel %vm169, %v2594, 0
        %v2686 = vsel %vm169, %v2595, 0
        %v2689 = vsel %vm169, %v2596, 0
        %v2692 = vsel %vm169, %v2597, 0
        %v2695 = vsel %vm169, %v2598, 0
        %v2698 = vsel %vm453, %v2600, 0
        %2700 = vmatprep.subr.mxu0 0.0
        %2701 = vmatpush1.msra.mxu0 %v2698
        %2702 = vmatprep.subr.mxu0 0.0
        %2703 = vmatpush1.msra.mxu0 0.0
        %2704 = vmatprep.subr.mxu0 0.0
        %2705 = vmatpush1.msra.mxu0 0.0
        %2706 = vmatprep.subr.mxu0 0.0
        %2707 = vmatpush1.msra.mxu0 0.0
        %2708 = vmatprep.subr.mxu0 0.0
        %2709 = vmatpush1.msra.mxu0 0.0
        %2710 = vmatprep.subr.mxu0 0.0
        %2711 = vmatpush1.msra.mxu0 0.0
        %2712 = vmatprep.subr.mxu0 0.0
        %2713 = vmatpush1.msra.mxu0 0.0
        %2714 = vmatprep.subr.mxu0 0.0
        %2715 = vmatpush1.msra.mxu0 0.0
        %2716 = vmatprep.subr.mxu0 0.0
        %2717 = vmatpush1.msra.mxu0 0.0
        %2718 = vmatprep.subr.mxu0 0.0
        %2719 = vmatpush1.msra.mxu0 0.0
        %2720 = vmatprep.subr.mxu0 0.0
        %2721 = vmatpush1.msra.mxu0 0.0
        %2722 = vmatprep.subr.mxu0 0.0
        %2723 = vmatpush1.msra.mxu0 0.0
        %2724 = vmatprep.subr.mxu0 0.0
        %2725 = vmatpush1.msra.mxu0 0.0
        %2726 = vmatprep.subr.mxu0 0.0
        %2727 = vmatpush1.msra.mxu0 0.0
        %2728 = vmatprep.subr.mxu0 0.0
        %2729 = vmatpush1.msra.mxu0 0.0
        %2730 = vmatprep.subr.mxu0 0.0
        %2731 = vmatpush1.msra.mxu0 0.0
        %2732 = vmatprep.subr.mxu0 0.0
        %2733 = vmatpush1.msra.mxu0 0.0
        %2734 = vmatprep.subr.mxu0 0.0
        %2735 = vmatpush1.msra.mxu0 0.0
        %2736 = vmatprep.subr.mxu0 0.0
        %2737 = vmatpush1.msra.mxu0 0.0
        %2738 = vmatprep.subr.mxu0 0.0
        %2739 = vmatpush1.msra.mxu0 0.0
        %2740 = vmatprep.subr.mxu0 0.0
        %2741 = vmatpush1.msra.mxu0 0.0
        %2742 = vmatprep.subr.mxu0 0.0
        %2743 = vmatpush1.msra.mxu0 0.0
        %2744 = vmatprep.subr.mxu0 0.0
        %2745 = vmatpush1.msra.mxu0 0.0
        %2746 = vmatprep.subr.mxu0 0.0
        %2747 = vmatpush1.msra.mxu0 0.0
        %2748 = vmatprep.subr.mxu0 0.0
        %2749 = vmatpush1.msra.mxu0 0.0
        %2750 = vmatprep.subr.mxu0 0.0
        %2751 = vmatpush1.msra.mxu0 0.0
        %2752 = vmatprep.subr.mxu0 0.0
        %2753 = vmatpush1.msra.mxu0 0.0
        %2754 = vmatprep.subr.mxu0 0.0
        %2755 = vmatpush1.msra.mxu0 0.0
        %2756 = vmatprep.subr.mxu0 0.0
        %2757 = vmatpush1.msra.mxu0 0.0
        %2758 = vmatprep.subr.mxu0 0.0
        %2759 = vmatpush1.msra.mxu0 0.0
        %2760 = vmatprep.subr.mxu0 0.0
        %2761 = vmatpush1.msra.mxu0 0.0
        %2762 = vmatprep.subr.mxu0 0.0
        %2763 = vmatpush1.msra.mxu0 0.0
        %2764 = vmatprep.mubr.f32.mxu0 0.0
        %2765 = vmatmul.mubr.f32.gmra.mrb[0].mxu0 %v2602
        %v2766 = vpop.f32.mrb[0].mxu0
        %v2767 = vadd.f32 0.0, %v2766
        %v2768 = vpop.f32.mrb[0].mxu0
        %2769 = vmatprep.mubr.f32.mxu0 0.0
        %2770 = vmatmul.mubr.f32.gmra.mrb[0].mxu0 %v2605
        %v2771 = vpop.f32.mrb[0].mxu0
        %v2772 = vadd.f32 0.0, %v2771
        %v2773 = vpop.f32.mrb[0].mxu0
        %2774 = vmatprep.mubr.f32.mxu0 0.0
        %2775 = vmatmul.mubr.f32.gmra.mrb[0].mxu0 %v2608
        %v2776 = vpop.f32.mrb[0].mxu0
        %v2777 = vadd.f32 0.0, %v2776
        %v2778 = vpop.f32.mrb[0].mxu0
        %2779 = vmatprep.mubr.f32.mxu0 0.0
        %2780 = vmatmul.mubr.f32.gmra.mrb[0].mxu0 %v2611
        %v2781 = vpop.f32.mrb[0].mxu0
        %v2782 = vadd.f32 0.0, %v2781
        %v2783 = vpop.f32.mrb[0].mxu0
        %2784 = vmatprep.mubr.f32.mxu0 0.0
        %2785 = vmatmul.mubr.f32.gmra.mrb[0].mxu0 %v2614
        %v2786 = vpop.f32.mrb[0].mxu0
        %v2787 = vadd.f32 0.0, %v2786
        %v2788 = vpop.f32.mrb[0].mxu0
        %2789 = vmatprep.mubr.f32.mxu0 0.0
        %2790 = vmatmul.mubr.f32.gmra.mrb[0].mxu0 %v2617
        %v2791 = vpop.f32.mrb[0].mxu0
        %v2792 = vadd.f32 0.0, %v2791
        %v2793 = vpop.f32.mrb[0].mxu0
        %2794 = vmatprep.mubr.f32.mxu0 0.0
        %2795 = vmatmul.mubr.f32.gmra.mrb[0].mxu0 %v2620
        %v2796 = vpop.f32.mrb[0].mxu0
        %v2797 = vadd.f32 0.0, %v2796
        %v2798 = vpop.f32.mrb[0].mxu0
        %2799 = vmatprep.mubr.f32.mxu0 0.0
        %2800 = vmatmul.mubr.f32.gmra.mrb[0].mxu0 %v2623
        %v2801 = vpop.f32.mrb[0].mxu0
        %v2802 = vadd.f32 0.0, %v2801
        %v2803 = vpop.f32.mrb[0].mxu0
        %2804 = vmatprep.mubr.f32.mxu0 0.0
        %2805 = vmatmul.mubr.f32.gmra.mrb[0].mxu0 %v2626
        %v2806 = vpop.f32.mrb[0].mxu0
        %v2807 = vadd.f32 0.0, %v2806
        %v2808 = vpop.f32.mrb[0].mxu0
        %2809 = vmatprep.mubr.f32.mxu0 0.0
        %2810 = vmatmul.mubr.f32.gmra.mrb[0].mxu0 %v2629
        %v2811 = vpop.f32.mrb[0].mxu0
        %v2812 = vadd.f32 0.0, %v2811
        %v2813 = vpop.f32.mrb[0].mxu0
        %2814 = vmatprep.mubr.f32.mxu0 0.0
        %2815 = vmatmul.mubr.f32.gmra.mrb[0].mxu0 %v2632
        %v2816 = vpop.f32.mrb[0].mxu0
        %v2817 = vadd.f32 0.0, %v2816
        %v2818 = vpop.f32.mrb[0].mxu0
        %2819 = vmatprep.mubr.f32.mxu0 0.0
        %2820 = vmatmul.mubr.f32.gmra.mrb[0].mxu0 %v2635
        %v2821 = vpop.f32.mrb[0].mxu0
        %v2822 = vadd.f32 0.0, %v2821
        %v2823 = vpop.f32.mrb[0].mxu0
        %2824 = vmatprep.mubr.f32.mxu0 0.0
        %2825 = vmatmul.mubr.f32.gmra.mrb[0].mxu0 %v2638
        %v2826 = vpop.f32.mrb[0].mxu0
        %v2827 = vadd.f32 0.0, %v2826
        %v2828 = vpop.f32.mrb[0].mxu0
        %2829 = vmatprep.mubr.f32.mxu0 0.0
        %2830 = vmatmul.mubr.f32.gmra.mrb[0].mxu0 %v2641
        %v2831 = vpop.f32.mrb[0].mxu0
        %v2832 = vadd.f32 0.0, %v2831
        %v2833 = vpop.f32.mrb[0].mxu0
        %2834 = vmatprep.mubr.f32.mxu0 0.0
        %2835 = vmatmul.mubr.f32.gmra.mrb[0].mxu0 %v2644
        %v2836 = vpop.f32.mrb[0].mxu0
        %v2837 = vadd.f32 0.0, %v2836
        %v2838 = vpop.f32.mrb[0].mxu0
        %2839 = vmatprep.mubr.f32.mxu0 0.0
        %2840 = vmatmul.mubr.f32.gmra.mrb[0].mxu0 %v2647
        %v2841 = vpop.f32.mrb[0].mxu0
        %v2842 = vadd.f32 0.0, %v2841
        %v2843 = vpop.f32.mrb[0].mxu0
        %2844 = vmatprep.mubr.f32.mxu0 0.0
        %2845 = vmatmul.mubr.f32.gmra.mrb[0].mxu0 %v2650
        %v2846 = vpop.f32.mrb[0].mxu0
        %v2847 = vadd.f32 0.0, %v2846
        %v2848 = vpop.f32.mrb[0].mxu0
        %2849 = vmatprep.mubr.f32.mxu0 0.0
        %2850 = vmatmul.mubr.f32.gmra.mrb[0].mxu0 %v2653
        %v2851 = vpop.f32.mrb[0].mxu0
        %v2852 = vadd.f32 0.0, %v2851
        %v2853 = vpop.f32.mrb[0].mxu0
        %2854 = vmatprep.mubr.f32.mxu0 0.0
        %2855 = vmatmul.mubr.f32.gmra.mrb[0].mxu0 %v2656
        %v2856 = vpop.f32.mrb[0].mxu0
        %v2857 = vadd.f32 0.0, %v2856
        %v2858 = vpop.f32.mrb[0].mxu0
        %2859 = vmatprep.mubr.f32.mxu0 0.0
        %2860 = vmatmul.mubr.f32.gmra.mrb[0].mxu0 %v2659
        %v2861 = vpop.f32.mrb[0].mxu0
        %v2862 = vadd.f32 0.0, %v2861
        %v2863 = vpop.f32.mrb[0].mxu0
        %2864 = vmatprep.mubr.f32.mxu0 0.0
        %2865 = vmatmul.mubr.f32.gmra.mrb[0].mxu0 %v2662
        %v2866 = vpop.f32.mrb[0].mxu0
        %v2867 = vadd.f32 0.0, %v2866
        %v2868 = vpop.f32.mrb[0].mxu0
        %2869 = vmatprep.mubr.f32.mxu0 0.0
        %2870 = vmatmul.mubr.f32.gmra.mrb[0].mxu0 %v2665
        %v2871 = vpop.f32.mrb[0].mxu0
        %v2872 = vadd.f32 0.0, %v2871
        %v2873 = vpop.f32.mrb[0].mxu0
        %2874 = vmatprep.mubr.f32.mxu0 0.0
        %2875 = vmatmul.mubr.f32.gmra.mrb[0].mxu0 %v2668
        %v2876 = vpop.f32.mrb[0].mxu0
        %v2877 = vadd.f32 0.0, %v2876
        %v2878 = vpop.f32.mrb[0].mxu0
        %2879 = vmatprep.mubr.f32.mxu0 0.0
        %2880 = vmatmul.mubr.f32.gmra.mrb[0].mxu0 %v2671
        %v2881 = vpop.f32.mrb[0].mxu0
        %v2882 = vadd.f32 0.0, %v2881
        %v2883 = vpop.f32.mrb[0].mxu0
        %2884 = vmatprep.mubr.f32.mxu0 0.0
        %2885 = vmatmul.mubr.f32.gmra.mrb[0].mxu0 %v2674
        %v2886 = vpop.f32.mrb[0].mxu0
        %v2887 = vadd.f32 0.0, %v2886
        %v2888 = vpop.f32.mrb[0].mxu0
        %2889 = vmatprep.mubr.f32.mxu0 0.0
        %2890 = vmatmul.mubr.f32.gmra.mrb[0].mxu0 %v2677
        %v2891 = vpop.f32.mrb[0].mxu0
        %v2892 = vadd.f32 0.0, %v2891
        %v2893 = vpop.f32.mrb[0].mxu0
        %2894 = vmatprep.mubr.f32.mxu0 0.0
        %2895 = vmatmul.mubr.f32.gmra.mrb[0].mxu0 %v2680
        %v2896 = vpop.f32.mrb[0].mxu0
        %v2897 = vadd.f32 0.0, %v2896
        %v2898 = vpop.f32.mrb[0].mxu0
        %2899 = vmatprep.mubr.f32.mxu0 0.0
        %2900 = vmatmul.mubr.f32.gmra.mrb[0].mxu0 %v2683
        %v2901 = vpop.f32.mrb[0].mxu0
        %v2902 = vadd.f32 0.0, %v2901
        %v2903 = vpop.f32.mrb[0].mxu0
        %2904 = vmatprep.mubr.f32.mxu0 0.0
        %2905 = vmatmul.mubr.f32.gmra.mrb[0].mxu0 %v2686
        %v2906 = vpop.f32.mrb[0].mxu0
        %v2907 = vadd.f32 0.0, %v2906
        %v2908 = vpop.f32.mrb[0].mxu0
        %2909 = vmatprep.mubr.f32.mxu0 0.0
        %2910 = vmatmul.mubr.f32.gmra.mrb[0].mxu0 %v2689
        %v2911 = vpop.f32.mrb[0].mxu0
        %v2912 = vadd.f32 0.0, %v2911
        %v2913 = vpop.f32.mrb[0].mxu0
        %2914 = vmatprep.mubr.f32.mxu0 0.0
        %2915 = vmatmul.mubr.f32.gmra.mrb[0].mxu0 %v2692
        %v2916 = vpop.f32.mrb[0].mxu0
        %v2917 = vadd.f32 0.0, %v2916
        %v2918 = vpop.f32.mrb[0].mxu0
        %2919 = vmatprep.mubr.f32.mxu0 0.0
        %2920 = vmatmul.mubr.f32.gmra.mrb[0].mxu0 %v2695
        %v2921 = vpop.f32.mrb[0].mxu0
        %v2922 = vadd.f32 0.0, %v2921
        %v2923 = vpop.f32.mrb[0].mxu0
        %2924 = vdwg.mxu0
        %v2925 = vadd.f32 %v2534, %v2767
        %v2926 = vadd.f32 %v2535, %v2772
        %v2927 = vadd.f32 %v2536, %v2777
        %v2928 = vadd.f32 %v2537, %v2782
        %v2929 = vadd.f32 %v2538, %v2787
        %v2930 = vadd.f32 %v2539, %v2792
        %v2931 = vadd.f32 %v2540, %v2797
        %v2932 = vadd.f32 %v2541, %v2802
        %v2933 = vadd.f32 %v2542, %v2807
        %v2934 = vadd.f32 %v2543, %v2812
        %v2935 = vadd.f32 %v2544, %v2817
        %v2936 = vadd.f32 %v2545, %v2822
        %v2937 = vadd.f32 %v2546, %v2827
        %v2938 = vadd.f32 %v2547, %v2832
        %v2939 = vadd.f32 %v2548, %v2837
        %v2940 = vadd.f32 %v2549, %v2842
        %v2941 = vadd.f32 %v2550, %v2847
        %v2942 = vadd.f32 %v2551, %v2852
        %v2943 = vadd.f32 %v2552, %v2857
        %v2944 = vadd.f32 %v2553, %v2862
        %v2945 = vadd.f32 %v2554, %v2867
        %v2946 = vadd.f32 %v2555, %v2872
        %v2947 = vadd.f32 %v2556, %v2877
        %v2948 = vadd.f32 %v2557, %v2882
        %v2949 = vadd.f32 %v2558, %v2887
        %v2950 = vadd.f32 %v2559, %v2892
        %v2951 = vadd.f32 %v2560, %v2897
        %v2952 = vadd.f32 %v2561, %v2902
        %v2953 = vadd.f32 %v2562, %v2907
        %v2954 = vadd.f32 %v2563, %v2912
        %v2955 = vadd.f32 %v2564, %v2917
        %v2956 = vadd.f32 %v2565, %v2922
        %v2957 = vld [vmem:[%s2566 + $0x1] sm:$0xff]
        %v2958 = vld [vmem:[%s2566 + $0x9] sm:$0xff]
        %v2959 = vld [vmem:[%s2566 + $0x19] sm:$0xff]
        %v2960 = vld [vmem:[%s2566 + $0x21] sm:$0xff]
        %v2961 = vld [vmem:[%s2566 + $0x31] sm:$0xff]
        %v2962 = vld [vmem:[%s2566 + $0x39] sm:$0xff]
        %v2963 = vld [vmem:[%s2566 + $0x49] sm:$0xff]
        %v2964 = vld [vmem:[%s2566 + $0x51] sm:$0xff]
        %v2965 = vld [vmem:[%s2566 + $0x61] sm:$0xff]
        %v2966 = vld [vmem:[%s2566 + $0x69] sm:$0xff]
        %v2967 = vld [vmem:[%s2566 + $0x79] sm:$0xff]
        %v2968 = vld [vmem:[%s2566 + $0x81] sm:$0xff]
        %v2969 = vld [vmem:[%s2566 + $0x91] sm:$0xff]
        %v2970 = vld [vmem:[%s2566 + $0x99] sm:$0xff]
        %v2971 = vld [vmem:[%s2566 + $0xa9] sm:$0xff]
        %v2972 = vld [vmem:[%s2566 + $0xb1] sm:$0xff]
        %v2973 = vld [vmem:[%s2566 + $0xc1] sm:$0xff]
        %v2974 = vld [vmem:[%s2566 + $0xc9] sm:$0xff]
        %v2975 = vld [vmem:[%s2566 + $0xd9] sm:$0xff]
        %v2976 = vld [vmem:[%s2566 + $0xe1] sm:$0xff]
        %v2977 = vld [vmem:[%s2566 + $0xf1] sm:$0xff]
        %v2978 = vld [vmem:[%s2566 + $0xf9] sm:$0xff]
        %v2979 = vld [vmem:[%s2566 + $0x109] sm:$0xff]
        %v2980 = vld [vmem:[%s2566 + $0x111] sm:$0xff]
        %v2981 = vld [vmem:[%s2566 + $0x121] sm:$0xff]
        %v2982 = vld [vmem:[%s2566 + $0x129] sm:$0xff]
        %v2983 = vld [vmem:[%s2566 + $0x139] sm:$0xff]
        %v2984 = vld [vmem:[%s2566 + $0x141] sm:$0xff]
        %v2985 = vld [vmem:[%s2566 + $0x151] sm:$0xff]
        %v2986 = vld [vmem:[%s2566 + $0x159] sm:$0xff]
        %v2987 = vld [vmem:[%s2566 + $0x169] sm:$0xff]
        %v2988 = vld [vmem:[%s2566 + $0x171] sm:$0xff]
        %s2989 = scalar_lea.vmem %s1, 28
        %v2990 = vld [vmem:[%s2989] sm:$0xf]
        %v2992 = vsel %vm169, %v2957, 0
        %v2995 = vsel %vm169, %v2958, 0
        %v2998 = vsel %vm169, %v2959, 0
        %v3001 = vsel %vm169, %v2960, 0
        %v3004 = vsel %vm169, %v2961, 0
        %v3007 = vsel %vm169, %v2962, 0
        %v3010 = vsel %vm169, %v2963, 0
        %v3013 = vsel %vm169, %v2964, 0
        %v3016 = vsel %vm169, %v2965, 0
        %v3019 = vsel %vm169, %v2966, 0
        %v3022 = vsel %vm169, %v2967, 0
        %v3025 = vsel %vm169, %v2968, 0
        %v3028 = vsel %vm169, %v2969, 0
        %v3031 = vsel %vm169, %v2970, 0
        %v3034 = vsel %vm169, %v2971, 0
        %v3037 = vsel %vm169, %v2972, 0
        %v3040 = vsel %vm169, %v2973, 0
        %v3043 = vsel %vm169, %v2974, 0
        %v3046 = vsel %vm169, %v2975, 0
        %v3049 = vsel %vm169, %v2976, 0
        %v3052 = vsel %vm169, %v2977, 0
        %v3055 = vsel %vm169, %v2978, 0
        %v3058 = vsel %vm169, %v2979, 0
        %v3061 = vsel %vm169, %v2980, 0
        %v3064 = vsel %vm169, %v2981, 0
        %v3067 = vsel %vm169, %v2982, 0
        %v3070 = vsel %vm169, %v2983, 0
        %v3073 = vsel %vm169, %v2984, 0
        %v3076 = vsel %vm169, %v2985, 0
        %v3079 = vsel %vm169, %v2986, 0
        %v3082 = vsel %vm169, %v2987, 0
        %v3085 = vsel %vm169, %v2988, 0
        %v3088 = vsel %vm453, %v2990, 0
        %3090 = vmatprep.subr.mxu0 0.0
        %3091 = vmatpush1.msra.mxu0 %v3088
        %3092 = vmatprep.subr.mxu0 0.0
        %3093 = vmatpush1.msra.mxu0 0.0
        %3094 = vmatprep.subr.mxu0 0.0
        %3095 = vmatpush1.msra.mxu0 0.0
        %3096 = vmatprep.subr.mxu0 0.0
        %3097 = vmatpush1.msra.mxu0 0.0
        %3098 = vmatprep.subr.mxu0 0.0
        %3099 = vmatpush1.msra.mxu0 0.0
        %3100 = vmatprep.subr.mxu0 0.0
        %3101 = vmatpush1.msra.mxu0 0.0
        %3102 = vmatprep.subr.mxu0 0.0
        %3103 = vmatpush1.msra.mxu0 0.0
        %3104 = vmatprep.subr.mxu0 0.0
        %3105 = vmatpush1.msra.mxu0 0.0
        %3106 = vmatprep.subr.mxu0 0.0
        %3107 = vmatpush1.msra.mxu0 0.0
        %3108 = vmatprep.subr.mxu0 0.0
        %3109 = vmatpush1.msra.mxu0 0.0
        %3110 = vmatprep.subr.mxu0 0.0
        %3111 = vmatpush1.msra.mxu0 0.0
        %3112 = vmatprep.subr.mxu0 0.0
        %3113 = vmatpush1.msra.mxu0 0.0
        %3114 = vmatprep.subr.mxu0 0.0
        %3115 = vmatpush1.msra.mxu0 0.0
        %3116 = vmatprep.subr.mxu0 0.0
        %3117 = vmatpush1.msra.mxu0 0.0
        %3118 = vmatprep.subr.mxu0 0.0
        %3119 = vmatpush1.msra.mxu0 0.0
        %3120 = vmatprep.subr.mxu0 0.0
        %3121 = vmatpush1.msra.mxu0 0.0
        %3122 = vmatprep.subr.mxu0 0.0
        %3123 = vmatpush1.msra.mxu0 0.0
        %3124 = vmatprep.subr.mxu0 0.0
        %3125 = vmatpush1.msra.mxu0 0.0
        %3126 = vmatprep.subr.mxu0 0.0
        %3127 = vmatpush1.msra.mxu0 0.0
        %3128 = vmatprep.subr.mxu0 0.0
        %3129 = vmatpush1.msra.mxu0 0.0
        %3130 = vmatprep.subr.mxu0 0.0
        %3131 = vmatpush1.msra.mxu0 0.0
        %3132 = vmatprep.subr.mxu0 0.0
        %3133 = vmatpush1.msra.mxu0 0.0
        %3134 = vmatprep.subr.mxu0 0.0
        %3135 = vmatpush1.msra.mxu0 0.0
        %3136 = vmatprep.subr.mxu0 0.0
        %3137 = vmatpush1.msra.mxu0 0.0
        %3138 = vmatprep.subr.mxu0 0.0
        %3139 = vmatpush1.msra.mxu0 0.0
        %3140 = vmatprep.subr.mxu0 0.0
        %3141 = vmatpush1.msra.mxu0 0.0
        %3142 = vmatprep.subr.mxu0 0.0
        %3143 = vmatpush1.msra.mxu0 0.0
        %3144 = vmatprep.subr.mxu0 0.0
        %3145 = vmatpush1.msra.mxu0 0.0
        %3146 = vmatprep.subr.mxu0 0.0
        %3147 = vmatpush1.msra.mxu0 0.0
        %3148 = vmatprep.subr.mxu0 0.0
        %3149 = vmatpush1.msra.mxu0 0.0
        %3150 = vmatprep.subr.mxu0 0.0
        %3151 = vmatpush1.msra.mxu0 0.0
        %3152 = vmatprep.subr.mxu0 0.0
        %3153 = vmatpush1.msra.mxu0 0.0
        %3154 = vmatprep.mubr.f32.mxu0 0.0
        %3155 = vmatmul.mubr.f32.gmra.mrb[0].mxu0 %v2992
        %v3156 = vpop.f32.mrb[0].mxu0
        %v3157 = vadd.f32 0.0, %v3156
        %v3158 = vpop.f32.mrb[0].mxu0
        %3159 = vmatprep.mubr.f32.mxu0 0.0
        %3160 = vmatmul.mubr.f32.gmra.mrb[0].mxu0 %v2995
        %v3161 = vpop.f32.mrb[0].mxu0
        %v3162 = vadd.f32 0.0, %v3161
        %v3163 = vpop.f32.mrb[0].mxu0
        %3164 = vmatprep.mubr.f32.mxu0 0.0
        %3165 = vmatmul.mubr.f32.gmra.mrb[0].mxu0 %v2998
        %v3166 = vpop.f32.mrb[0].mxu0
        %v3167 = vadd.f32 0.0, %v3166
        %v3168 = vpop.f32.mrb[0].mxu0
        %3169 = vmatprep.mubr.f32.mxu0 0.0
        %3170 = vmatmul.mubr.f32.gmra.mrb[0].mxu0 %v3001
        %v3171 = vpop.f32.mrb[0].mxu0
        %v3172 = vadd.f32 0.0, %v3171
        %v3173 = vpop.f32.mrb[0].mxu0
        %3174 = vmatprep.mubr.f32.mxu0 0.0
        %3175 = vmatmul.mubr.f32.gmra.mrb[0].mxu0 %v3004
        %v3176 = vpop.f32.mrb[0].mxu0
        %v3177 = vadd.f32 0.0, %v3176
        %v3178 = vpop.f32.mrb[0].mxu0
        %3179 = vmatprep.mubr.f32.mxu0 0.0
        %3180 = vmatmul.mubr.f32.gmra.mrb[0].mxu0 %v3007
        %v3181 = vpop.f32.mrb[0].mxu0
        %v3182 = vadd.f32 0.0, %v3181
        %v3183 = vpop.f32.mrb[0].mxu0
        %3184 = vmatprep.mubr.f32.mxu0 0.0
        %3185 = vmatmul.mubr.f32.gmra.mrb[0].mxu0 %v3010
        %v3186 = vpop.f32.mrb[0].mxu0
        %v3187 = vadd.f32 0.0, %v3186
        %v3188 = vpop.f32.mrb[0].mxu0
        %3189 = vmatprep.mubr.f32.mxu0 0.0
        %3190 = vmatmul.mubr.f32.gmra.mrb[0].mxu0 %v3013
        %v3191 = vpop.f32.mrb[0].mxu0
        %v3192 = vadd.f32 0.0, %v3191
        %v3193 = vpop.f32.mrb[0].mxu0
        %3194 = vmatprep.mubr.f32.mxu0 0.0
        %3195 = vmatmul.mubr.f32.gmra.mrb[0].mxu0 %v3016
        %v3196 = vpop.f32.mrb[0].mxu0
        %v3197 = vadd.f32 0.0, %v3196
        %v3198 = vpop.f32.mrb[0].mxu0
        %3199 = vmatprep.mubr.f32.mxu0 0.0
        %3200 = vmatmul.mubr.f32.gmra.mrb[0].mxu0 %v3019
        %v3201 = vpop.f32.mrb[0].mxu0
        %v3202 = vadd.f32 0.0, %v3201
        %v3203 = vpop.f32.mrb[0].mxu0
        %3204 = vmatprep.mubr.f32.mxu0 0.0
        %3205 = vmatmul.mubr.f32.gmra.mrb[0].mxu0 %v3022
        %v3206 = vpop.f32.mrb[0].mxu0
        %v3207 = vadd.f32 0.0, %v3206
        %v3208 = vpop.f32.mrb[0].mxu0
        %3209 = vmatprep.mubr.f32.mxu0 0.0
        %3210 = vmatmul.mubr.f32.gmra.mrb[0].mxu0 %v3025
        %v3211 = vpop.f32.mrb[0].mxu0
        %v3212 = vadd.f32 0.0, %v3211
        %v3213 = vpop.f32.mrb[0].mxu0
        %3214 = vmatprep.mubr.f32.mxu0 0.0
        %3215 = vmatmul.mubr.f32.gmra.mrb[0].mxu0 %v3028
        %v3216 = vpop.f32.mrb[0].mxu0
        %v3217 = vadd.f32 0.0, %v3216
        %v3218 = vpop.f32.mrb[0].mxu0
        %3219 = vmatprep.mubr.f32.mxu0 0.0
        %3220 = vmatmul.mubr.f32.gmra.mrb[0].mxu0 %v3031
        %v3221 = vpop.f32.mrb[0].mxu0
        %v3222 = vadd.f32 0.0, %v3221
        %v3223 = vpop.f32.mrb[0].mxu0
        %3224 = vmatprep.mubr.f32.mxu0 0.0
        %3225 = vmatmul.mubr.f32.gmra.mrb[0].mxu0 %v3034
        %v3226 = vpop.f32.mrb[0].mxu0
        %v3227 = vadd.f32 0.0, %v3226
        %v3228 = vpop.f32.mrb[0].mxu0
        %3229 = vmatprep.mubr.f32.mxu0 0.0
        %3230 = vmatmul.mubr.f32.gmra.mrb[0].mxu0 %v3037
        %v3231 = vpop.f32.mrb[0].mxu0
        %v3232 = vadd.f32 0.0, %v3231
        %v3233 = vpop.f32.mrb[0].mxu0
        %3234 = vmatprep.mubr.f32.mxu0 0.0
        %3235 = vmatmul.mubr.f32.gmra.mrb[0].mxu0 %v3040
        %v3236 = vpop.f32.mrb[0].mxu0
        %v3237 = vadd.f32 0.0, %v3236
        %v3238 = vpop.f32.mrb[0].mxu0
        %3239 = vmatprep.mubr.f32.mxu0 0.0
        %3240 = vmatmul.mubr.f32.gmra.mrb[0].mxu0 %v3043
        %v3241 = vpop.f32.mrb[0].mxu0
        %v3242 = vadd.f32 0.0, %v3241
        %v3243 = vpop.f32.mrb[0].mxu0
        %3244 = vmatprep.mubr.f32.mxu0 0.0
        %3245 = vmatmul.mubr.f32.gmra.mrb[0].mxu0 %v3046
        %v3246 = vpop.f32.mrb[0].mxu0
        %v3247 = vadd.f32 0.0, %v3246
        %v3248 = vpop.f32.mrb[0].mxu0
        %3249 = vmatprep.mubr.f32.mxu0 0.0
        %3250 = vmatmul.mubr.f32.gmra.mrb[0].mxu0 %v3049
        %v3251 = vpop.f32.mrb[0].mxu0
        %v3252 = vadd.f32 0.0, %v3251
        %v3253 = vpop.f32.mrb[0].mxu0
        %3254 = vmatprep.mubr.f32.mxu0 0.0
        %3255 = vmatmul.mubr.f32.gmra.mrb[0].mxu0 %v3052
        %v3256 = vpop.f32.mrb[0].mxu0
        %v3257 = vadd.f32 0.0, %v3256
        %v3258 = vpop.f32.mrb[0].mxu0
        %3259 = vmatprep.mubr.f32.mxu0 0.0
        %3260 = vmatmul.mubr.f32.gmra.mrb[0].mxu0 %v3055
        %v3261 = vpop.f32.mrb[0].mxu0
        %v3262 = vadd.f32 0.0, %v3261
        %v3263 = vpop.f32.mrb[0].mxu0
        %3264 = vmatprep.mubr.f32.mxu0 0.0
        %3265 = vmatmul.mubr.f32.gmra.mrb[0].mxu0 %v3058
        %v3266 = vpop.f32.mrb[0].mxu0
        %v3267 = vadd.f32 0.0, %v3266
        %v3268 = vpop.f32.mrb[0].mxu0
        %3269 = vmatprep.mubr.f32.mxu0 0.0
        %3270 = vmatmul.mubr.f32.gmra.mrb[0].mxu0 %v3061
        %v3271 = vpop.f32.mrb[0].mxu0
        %v3272 = vadd.f32 0.0, %v3271
        %v3273 = vpop.f32.mrb[0].mxu0
        %3274 = vmatprep.mubr.f32.mxu0 0.0
        %3275 = vmatmul.mubr.f32.gmra.mrb[0].mxu0 %v3064
        %v3276 = vpop.f32.mrb[0].mxu0
        %v3277 = vadd.f32 0.0, %v3276
        %v3278 = vpop.f32.mrb[0].mxu0
        %3279 = vmatprep.mubr.f32.mxu0 0.0
        %3280 = vmatmul.mubr.f32.gmra.mrb[0].mxu0 %v3067
        %v3281 = vpop.f32.mrb[0].mxu0
        %v3282 = vadd.f32 0.0, %v3281
        %v3283 = vpop.f32.mrb[0].mxu0
        %3284 = vmatprep.mubr.f32.mxu0 0.0
        %3285 = vmatmul.mubr.f32.gmra.mrb[0].mxu0 %v3070
        %v3286 = vpop.f32.mrb[0].mxu0
        %v3287 = vadd.f32 0.0, %v3286
        %v3288 = vpop.f32.mrb[0].mxu0
        %3289 = vmatprep.mubr.f32.mxu0 0.0
        %3290 = vmatmul.mubr.f32.gmra.mrb[0].mxu0 %v3073
        %v3291 = vpop.f32.mrb[0].mxu0
        %v3292 = vadd.f32 0.0, %v3291
        %v3293 = vpop.f32.mrb[0].mxu0
        %3294 = vmatprep.mubr.f32.mxu0 0.0
        %3295 = vmatmul.mubr.f32.gmra.mrb[0].mxu0 %v3076
        %v3296 = vpop.f32.mrb[0].mxu0
        %v3297 = vadd.f32 0.0, %v3296
        %v3298 = vpop.f32.mrb[0].mxu0
        %3299 = vmatprep.mubr.f32.mxu0 0.0
        %3300 = vmatmul.mubr.f32.gmra.mrb[0].mxu0 %v3079
        %v3301 = vpop.f32.mrb[0].mxu0
        %v3302 = vadd.f32 0.0, %v3301
        %v3303 = vpop.f32.mrb[0].mxu0
        %3304 = vmatprep.mubr.f32.mxu0 0.0
        %3305 = vmatmul.mubr.f32.gmra.mrb[0].mxu0 %v3082
        %v3306 = vpop.f32.mrb[0].mxu0
        %v3307 = vadd.f32 0.0, %v3306
        %v3308 = vpop.f32.mrb[0].mxu0
        %3309 = vmatprep.mubr.f32.mxu0 0.0
        %3310 = vmatmul.mubr.f32.gmra.mrb[0].mxu0 %v3085
        %v3311 = vpop.f32.mrb[0].mxu0
        %v3312 = vadd.f32 0.0, %v3311
        %v3313 = vpop.f32.mrb[0].mxu0
        %3314 = vdwg.mxu0
        %v3315 = vadd.f32 %v2925, %v3157
        %v3316 = vadd.f32 %v2926, %v3162
        %v3317 = vadd.f32 %v2927, %v3167
        %v3318 = vadd.f32 %v2928, %v3172
        %v3319 = vadd.f32 %v2929, %v3177
        %v3320 = vadd.f32 %v2930, %v3182
        %v3321 = vadd.f32 %v2931, %v3187
        %v3322 = vadd.f32 %v2932, %v3192
        %v3323 = vadd.f32 %v2933, %v3197
        %v3324 = vadd.f32 %v2934, %v3202
        %v3325 = vadd.f32 %v2935, %v3207
        %v3326 = vadd.f32 %v2936, %v3212
        %v3327 = vadd.f32 %v2937, %v3217
        %v3328 = vadd.f32 %v2938, %v3222
        %v3329 = vadd.f32 %v2939, %v3227
        %v3330 = vadd.f32 %v2940, %v3232
        %v3331 = vadd.f32 %v2941, %v3237
        %v3332 = vadd.f32 %v2942, %v3242
        %v3333 = vadd.f32 %v2943, %v3247
        %v3334 = vadd.f32 %v2944, %v3252
        %v3335 = vadd.f32 %v2945, %v3257
        %v3336 = vadd.f32 %v2946, %v3262
        %v3337 = vadd.f32 %v2947, %v3267
        %v3338 = vadd.f32 %v2948, %v3272
        %v3339 = vadd.f32 %v2949, %v3277
        %v3340 = vadd.f32 %v2950, %v3282
        %v3341 = vadd.f32 %v2951, %v3287
        %v3342 = vadd.f32 %v2952, %v3292
        %v3343 = vadd.f32 %v2953, %v3297
        %v3344 = vadd.f32 %v2954, %v3302
        %v3345 = vadd.f32 %v2955, %v3307
        %v3346 = vadd.f32 %v2956, %v3312
        %v3347 = vld [vmem:[%s2566 + $0x2] sm:$0xff]
        %v3348 = vld [vmem:[%s2566 + $0xa] sm:$0xff]
        %v3349 = vld [vmem:[%s2566 + $0x1a] sm:$0xff]
        %v3350 = vld [vmem:[%s2566 + $0x22] sm:$0xff]
        %v3351 = vld [vmem:[%s2566 + $0x32] sm:$0xff]
        %v3352 = vld [vmem:[%s2566 + $0x3a] sm:$0xff]
        %v3353 = vld [vmem:[%s2566 + $0x4a] sm:$0xff]
        %v3354 = vld [vmem:[%s2566 + $0x52] sm:$0xff]
        %v3355 = vld [vmem:[%s2566 + $0x62] sm:$0xff]
        %v3356 = vld [vmem:[%s2566 + $0x6a] sm:$0xff]
        %v3357 = vld [vmem:[%s2566 + $0x7a] sm:$0xff]
        %v3358 = vld [vmem:[%s2566 + $0x82] sm:$0xff]
        %v3359 = vld [vmem:[%s2566 + $0x92] sm:$0xff]
        %v3360 = vld [vmem:[%s2566 + $0x9a] sm:$0xff]
        %v3361 = vld [vmem:[%s2566 + $0xaa] sm:$0xff]
        %v3362 = vld [vmem:[%s2566 + $0xb2] sm:$0xff]
        %v3363 = vld [vmem:[%s2566 + $0xc2] sm:$0xff]
        %v3364 = vld [vmem:[%s2566 + $0xca] sm:$0xff]
        %v3365 = vld [vmem:[%s2566 + $0xda] sm:$0xff]
        %v3366 = vld [vmem:[%s2566 + $0xe2] sm:$0xff]
        %v3367 = vld [vmem:[%s2566 + $0xf2] sm:$0xff]
        %v3368 = vld [vmem:[%s2566 + $0xfa] sm:$0xff]
        %v3369 = vld [vmem:[%s2566 + $0x10a] sm:$0xff]
        %v3370 = vld [vmem:[%s2566 + $0x112] sm:$0xff]
        %v3371 = vld [vmem:[%s2566 + $0x122] sm:$0xff]
        %v3372 = vld [vmem:[%s2566 + $0x12a] sm:$0xff]
        %v3373 = vld [vmem:[%s2566 + $0x13a] sm:$0xff]
        %v3374 = vld [vmem:[%s2566 + $0x142] sm:$0xff]
        %v3375 = vld [vmem:[%s2566 + $0x152] sm:$0xff]
        %v3376 = vld [vmem:[%s2566 + $0x15a] sm:$0xff]
        %v3377 = vld [vmem:[%s2566 + $0x16a] sm:$0xff]
        %v3378 = vld [vmem:[%s2566 + $0x172] sm:$0xff]
        %s3379 = scalar_lea.vmem %s1, 32
        %v3380 = vld [vmem:[%s3379] sm:$0xf]
        %v3382 = vsel %vm169, %v3347, 0
        %v3385 = vsel %vm169, %v3348, 0
        %v3388 = vsel %vm169, %v3349, 0
        %v3391 = vsel %vm169, %v3350, 0
        %v3394 = vsel %vm169, %v3351, 0
        %v3397 = vsel %vm169, %v3352, 0
        %v3400 = vsel %vm169, %v3353, 0
        %v3403 = vsel %vm169, %v3354, 0
        %v3406 = vsel %vm169, %v3355, 0
        %v3409 = vsel %vm169, %v3356, 0
        %v3412 = vsel %vm169, %v3357, 0
        %v3415 = vsel %vm169, %v3358, 0
        %v3418 = vsel %vm169, %v3359, 0
        %v3421 = vsel %vm169, %v3360, 0
        %v3424 = vsel %vm169, %v3361, 0
        %v3427 = vsel %vm169, %v3362, 0
        %v3430 = vsel %vm169, %v3363, 0
        %v3433 = vsel %vm169, %v3364, 0
        %v3436 = vsel %vm169, %v3365, 0
        %v3439 = vsel %vm169, %v3366, 0
        %v3442 = vsel %vm169, %v3367, 0
        %v3445 = vsel %vm169, %v3368, 0
        %v3448 = vsel %vm169, %v3369, 0
        %v3451 = vsel %vm169, %v3370, 0
        %v3454 = vsel %vm169, %v3371, 0
        %v3457 = vsel %vm169, %v3372, 0
        %v3460 = vsel %vm169, %v3373, 0
        %v3463 = vsel %vm169, %v3374, 0
        %v3466 = vsel %vm169, %v3375, 0
        %v3469 = vsel %vm169, %v3376, 0
        %v3472 = vsel %vm169, %v3377, 0
        %v3475 = vsel %vm169, %v3378, 0
        %v3478 = vsel %vm453, %v3380, 0
        %3480 = vmatprep.subr.mxu0 0.0
        %3481 = vmatpush1.msra.mxu0 %v3478
        %3482 = vmatprep.subr.mxu0 0.0
        %3483 = vmatpush1.msra.mxu0 0.0
        %3484 = vmatprep.subr.mxu0 0.0
        %3485 = vmatpush1.msra.mxu0 0.0
        %3486 = vmatprep.subr.mxu0 0.0
        %3487 = vmatpush1.msra.mxu0 0.0
        %3488 = vmatprep.subr.mxu0 0.0
        %3489 = vmatpush1.msra.mxu0 0.0
        %3490 = vmatprep.subr.mxu0 0.0
        %3491 = vmatpush1.msra.mxu0 0.0
        %3492 = vmatprep.subr.mxu0 0.0
        %3493 = vmatpush1.msra.mxu0 0.0
        %3494 = vmatprep.subr.mxu0 0.0
        %3495 = vmatpush1.msra.mxu0 0.0
        %3496 = vmatprep.subr.mxu0 0.0
        %3497 = vmatpush1.msra.mxu0 0.0
        %3498 = vmatprep.subr.mxu0 0.0
        %3499 = vmatpush1.msra.mxu0 0.0
        %3500 = vmatprep.subr.mxu0 0.0
        %3501 = vmatpush1.msra.mxu0 0.0
        %3502 = vmatprep.subr.mxu0 0.0
        %3503 = vmatpush1.msra.mxu0 0.0
        %3504 = vmatprep.subr.mxu0 0.0
        %3505 = vmatpush1.msra.mxu0 0.0
        %3506 = vmatprep.subr.mxu0 0.0
        %3507 = vmatpush1.msra.mxu0 0.0
        %3508 = vmatprep.subr.mxu0 0.0
        %3509 = vmatpush1.msra.mxu0 0.0
        %3510 = vmatprep.subr.mxu0 0.0
        %3511 = vmatpush1.msra.mxu0 0.0
        %3512 = vmatprep.subr.mxu0 0.0
        %3513 = vmatpush1.msra.mxu0 0.0
        %3514 = vmatprep.subr.mxu0 0.0
        %3515 = vmatpush1.msra.mxu0 0.0
        %3516 = vmatprep.subr.mxu0 0.0
        %3517 = vmatpush1.msra.mxu0 0.0
        %3518 = vmatprep.subr.mxu0 0.0
        %3519 = vmatpush1.msra.mxu0 0.0
        %3520 = vmatprep.subr.mxu0 0.0
        %3521 = vmatpush1.msra.mxu0 0.0
        %3522 = vmatprep.subr.mxu0 0.0
        %3523 = vmatpush1.msra.mxu0 0.0
        %3524 = vmatprep.subr.mxu0 0.0
        %3525 = vmatpush1.msra.mxu0 0.0
        %3526 = vmatprep.subr.mxu0 0.0
        %3527 = vmatpush1.msra.mxu0 0.0
        %3528 = vmatprep.subr.mxu0 0.0
        %3529 = vmatpush1.msra.mxu0 0.0
        %3530 = vmatprep.subr.mxu0 0.0
        %3531 = vmatpush1.msra.mxu0 0.0
        %3532 = vmatprep.subr.mxu0 0.0
        %3533 = vmatpush1.msra.mxu0 0.0
        %3534 = vmatprep.subr.mxu0 0.0
        %3535 = vmatpush1.msra.mxu0 0.0
        %3536 = vmatprep.subr.mxu0 0.0
        %3537 = vmatpush1.msra.mxu0 0.0
        %3538 = vmatprep.subr.mxu0 0.0
        %3539 = vmatpush1.msra.mxu0 0.0
        %3540 = vmatprep.subr.mxu0 0.0
        %3541 = vmatpush1.msra.mxu0 0.0
        %3542 = vmatprep.subr.mxu0 0.0
        %3543 = vmatpush1.msra.mxu0 0.0
        %3544 = vmatprep.mubr.f32.mxu0 0.0
        %3545 = vmatmul.mubr.f32.gmra.mrb[0].mxu0 %v3382
        %v3546 = vpop.f32.mrb[0].mxu0
        %v3547 = vadd.f32 0.0, %v3546
        %v3548 = vpop.f32.mrb[0].mxu0
        %3549 = vmatprep.mubr.f32.mxu0 0.0
        %3550 = vmatmul.mubr.f32.gmra.mrb[0].mxu0 %v3385
        %v3551 = vpop.f32.mrb[0].mxu0
        %v3552 = vadd.f32 0.0, %v3551
        %v3553 = vpop.f32.mrb[0].mxu0
        %3554 = vmatprep.mubr.f32.mxu0 0.0
        %3555 = vmatmul.mubr.f32.gmra.mrb[0].mxu0 %v3388
        %v3556 = vpop.f32.mrb[0].mxu0
        %v3557 = vadd.f32 0.0, %v3556
        %v3558 = vpop.f32.mrb[0].mxu0
        %3559 = vmatprep.mubr.f32.mxu0 0.0
        %3560 = vmatmul.mubr.f32.gmra.mrb[0].mxu0 %v3391
        %v3561 = vpop.f32.mrb[0].mxu0
        %v3562 = vadd.f32 0.0, %v3561
        %v3563 = vpop.f32.mrb[0].mxu0
        %3564 = vmatprep.mubr.f32.mxu0 0.0
        %3565 = vmatmul.mubr.f32.gmra.mrb[0].mxu0 %v3394
        %v3566 = vpop.f32.mrb[0].mxu0
        %v3567 = vadd.f32 0.0, %v3566
        %v3568 = vpop.f32.mrb[0].mxu0
        %3569 = vmatprep.mubr.f32.mxu0 0.0
        %3570 = vmatmul.mubr.f32.gmra.mrb[0].mxu0 %v3397
        %v3571 = vpop.f32.mrb[0].mxu0
        %v3572 = vadd.f32 0.0, %v3571
        %v3573 = vpop.f32.mrb[0].mxu0
        %3574 = vmatprep.mubr.f32.mxu0 0.0
        %3575 = vmatmul.mubr.f32.gmra.mrb[0].mxu0 %v3400
        %v3576 = vpop.f32.mrb[0].mxu0
        %v3577 = vadd.f32 0.0, %v3576
        %v3578 = vpop.f32.mrb[0].mxu0
        %3579 = vmatprep.mubr.f32.mxu0 0.0
        %3580 = vmatmul.mubr.f32.gmra.mrb[0].mxu0 %v3403
        %v3581 = vpop.f32.mrb[0].mxu0
        %v3582 = vadd.f32 0.0, %v3581
        %v3583 = vpop.f32.mrb[0].mxu0
        %3584 = vmatprep.mubr.f32.mxu0 0.0
        %3585 = vmatmul.mubr.f32.gmra.mrb[0].mxu0 %v3406
        %v3586 = vpop.f32.mrb[0].mxu0
        %v3587 = vadd.f32 0.0, %v3586
        %v3588 = vpop.f32.mrb[0].mxu0
        %3589 = vmatprep.mubr.f32.mxu0 0.0
        %3590 = vmatmul.mubr.f32.gmra.mrb[0].mxu0 %v3409
        %v3591 = vpop.f32.mrb[0].mxu0
        %v3592 = vadd.f32 0.0, %v3591
        %v3593 = vpop.f32.mrb[0].mxu0
        %3594 = vmatprep.mubr.f32.mxu0 0.0
        %3595 = vmatmul.mubr.f32.gmra.mrb[0].mxu0 %v3412
        %v3596 = vpop.f32.mrb[0].mxu0
        %v3597 = vadd.f32 0.0, %v3596
        %v3598 = vpop.f32.mrb[0].mxu0
        %3599 = vmatprep.mubr.f32.mxu0 0.0
        %3600 = vmatmul.mubr.f32.gmra.mrb[0].mxu0 %v3415
        %v3601 = vpop.f32.mrb[0].mxu0
        %v3602 = vadd.f32 0.0, %v3601
        %v3603 = vpop.f32.mrb[0].mxu0
        %3604 = vmatprep.mubr.f32.mxu0 0.0
        %3605 = vmatmul.mubr.f32.gmra.mrb[0].mxu0 %v3418
        %v3606 = vpop.f32.mrb[0].mxu0
        %v3607 = vadd.f32 0.0, %v3606
        %v3608 = vpop.f32.mrb[0].mxu0
        %3609 = vmatprep.mubr.f32.mxu0 0.0
        %3610 = vmatmul.mubr.f32.gmra.mrb[0].mxu0 %v3421
        %v3611 = vpop.f32.mrb[0].mxu0
        %v3612 = vadd.f32 0.0, %v3611
        %v3613 = vpop.f32.mrb[0].mxu0
        %3614 = vmatprep.mubr.f32.mxu0 0.0
        %3615 = vmatmul.mubr.f32.gmra.mrb[0].mxu0 %v3424
        %v3616 = vpop.f32.mrb[0].mxu0
        %v3617 = vadd.f32 0.0, %v3616
        %v3618 = vpop.f32.mrb[0].mxu0
        %3619 = vmatprep.mubr.f32.mxu0 0.0
        %3620 = vmatmul.mubr.f32.gmra.mrb[0].mxu0 %v3427
        %v3621 = vpop.f32.mrb[0].mxu0
        %v3622 = vadd.f32 0.0, %v3621
        %v3623 = vpop.f32.mrb[0].mxu0
        %3624 = vmatprep.mubr.f32.mxu0 0.0
        %3625 = vmatmul.mubr.f32.gmra.mrb[0].mxu0 %v3430
        %v3626 = vpop.f32.mrb[0].mxu0
        %v3627 = vadd.f32 0.0, %v3626
        %v3628 = vpop.f32.mrb[0].mxu0
        %3629 = vmatprep.mubr.f32.mxu0 0.0
        %3630 = vmatmul.mubr.f32.gmra.mrb[0].mxu0 %v3433
        %v3631 = vpop.f32.mrb[0].mxu0
        %v3632 = vadd.f32 0.0, %v3631
        %v3633 = vpop.f32.mrb[0].mxu0
        %3634 = vmatprep.mubr.f32.mxu0 0.0
        %3635 = vmatmul.mubr.f32.gmra.mrb[0].mxu0 %v3436
        %v3636 = vpop.f32.mrb[0].mxu0
        %v3637 = vadd.f32 0.0, %v3636
        %v3638 = vpop.f32.mrb[0].mxu0
        %3639 = vmatprep.mubr.f32.mxu0 0.0
        %3640 = vmatmul.mubr.f32.gmra.mrb[0].mxu0 %v3439
        %v3641 = vpop.f32.mrb[0].mxu0
        %v3642 = vadd.f32 0.0, %v3641
        %v3643 = vpop.f32.mrb[0].mxu0
        %3644 = vmatprep.mubr.f32.mxu0 0.0
        %3645 = vmatmul.mubr.f32.gmra.mrb[0].mxu0 %v3442
        %v3646 = vpop.f32.mrb[0].mxu0
        %v3647 = vadd.f32 0.0, %v3646
        %v3648 = vpop.f32.mrb[0].mxu0
        %3649 = vmatprep.mubr.f32.mxu0 0.0
        %3650 = vmatmul.mubr.f32.gmra.mrb[0].mxu0 %v3445
        %v3651 = vpop.f32.mrb[0].mxu0
        %v3652 = vadd.f32 0.0, %v3651
        %v3653 = vpop.f32.mrb[0].mxu0
        %3654 = vmatprep.mubr.f32.mxu0 0.0
        %3655 = vmatmul.mubr.f32.gmra.mrb[0].mxu0 %v3448
        %v3656 = vpop.f32.mrb[0].mxu0
        %v3657 = vadd.f32 0.0, %v3656
        %v3658 = vpop.f32.mrb[0].mxu0
        %3659 = vmatprep.mubr.f32.mxu0 0.0
        %3660 = vmatmul.mubr.f32.gmra.mrb[0].mxu0 %v3451
        %v3661 = vpop.f32.mrb[0].mxu0
        %v3662 = vadd.f32 0.0, %v3661
        %v3663 = vpop.f32.mrb[0].mxu0
        %3664 = vmatprep.mubr.f32.mxu0 0.0
        %3665 = vmatmul.mubr.f32.gmra.mrb[0].mxu0 %v3454
        %v3666 = vpop.f32.mrb[0].mxu0
        %v3667 = vadd.f32 0.0, %v3666
        %v3668 = vpop.f32.mrb[0].mxu0
        %3669 = vmatprep.mubr.f32.mxu0 0.0
        %3670 = vmatmul.mubr.f32.gmra.mrb[0].mxu0 %v3457
        %v3671 = vpop.f32.mrb[0].mxu0
        %v3672 = vadd.f32 0.0, %v3671
        %v3673 = vpop.f32.mrb[0].mxu0
        %3674 = vmatprep.mubr.f32.mxu0 0.0
        %3675 = vmatmul.mubr.f32.gmra.mrb[0].mxu0 %v3460
        %v3676 = vpop.f32.mrb[0].mxu0
        %v3677 = vadd.f32 0.0, %v3676
        %v3678 = vpop.f32.mrb[0].mxu0
        %3679 = vmatprep.mubr.f32.mxu0 0.0
        %3680 = vmatmul.mubr.f32.gmra.mrb[0].mxu0 %v3463
        %v3681 = vpop.f32.mrb[0].mxu0
        %v3682 = vadd.f32 0.0, %v3681
        %v3683 = vpop.f32.mrb[0].mxu0
        %3684 = vmatprep.mubr.f32.mxu0 0.0
        %3685 = vmatmul.mubr.f32.gmra.mrb[0].mxu0 %v3466
        %v3686 = vpop.f32.mrb[0].mxu0
        %v3687 = vadd.f32 0.0, %v3686
        %v3688 = vpop.f32.mrb[0].mxu0
        %3689 = vmatprep.mubr.f32.mxu0 0.0
        %3690 = vmatmul.mubr.f32.gmra.mrb[0].mxu0 %v3469
        %v3691 = vpop.f32.mrb[0].mxu0
        %v3692 = vadd.f32 0.0, %v3691
        %v3693 = vpop.f32.mrb[0].mxu0
        %3694 = vmatprep.mubr.f32.mxu0 0.0
        %3695 = vmatmul.mubr.f32.gmra.mrb[0].mxu0 %v3472
        %v3696 = vpop.f32.mrb[0].mxu0
        %v3697 = vadd.f32 0.0, %v3696
        %v3698 = vpop.f32.mrb[0].mxu0
        %3699 = vmatprep.mubr.f32.mxu0 0.0
        %3700 = vmatmul.mubr.f32.gmra.mrb[0].mxu0 %v3475
        %v3701 = vpop.f32.mrb[0].mxu0
        %v3702 = vadd.f32 0.0, %v3701
        %v3703 = vpop.f32.mrb[0].mxu0
        %3704 = vdwg.mxu0
        %v3705 = vadd.f32 %v3315, %v3547
        %v3706 = vadd.f32 %v3316, %v3552
        %v3707 = vadd.f32 %v3317, %v3557
        %v3708 = vadd.f32 %v3318, %v3562
        %v3709 = vadd.f32 %v3319, %v3567
        %v3710 = vadd.f32 %v3320, %v3572
        %v3711 = vadd.f32 %v3321, %v3577
        %v3712 = vadd.f32 %v3322, %v3582
        %v3713 = vadd.f32 %v3323, %v3587
        %v3714 = vadd.f32 %v3324, %v3592
        %v3715 = vadd.f32 %v3325, %v3597
        %v3716 = vadd.f32 %v3326, %v3602
        %v3717 = vadd.f32 %v3327, %v3607
        %v3718 = vadd.f32 %v3328, %v3612
        %v3719 = vadd.f32 %v3329, %v3617
        %v3720 = vadd.f32 %v3330, %v3622
        %v3721 = vadd.f32 %v3331, %v3627
        %v3722 = vadd.f32 %v3332, %v3632
        %v3723 = vadd.f32 %v3333, %v3637
        %v3724 = vadd.f32 %v3334, %v3642
        %v3725 = vadd.f32 %v3335, %v3647
        %v3726 = vadd.f32 %v3336, %v3652
        %v3727 = vadd.f32 %v3337, %v3657
        %v3728 = vadd.f32 %v3338, %v3662
        %v3729 = vadd.f32 %v3339, %v3667
        %v3730 = vadd.f32 %v3340, %v3672
        %v3731 = vadd.f32 %v3341, %v3677
        %v3732 = vadd.f32 %v3342, %v3682
        %v3733 = vadd.f32 %v3343, %v3687
        %v3734 = vadd.f32 %v3344, %v3692
        %v3735 = vadd.f32 %v3345, %v3697
        %v3736 = vadd.f32 %v3346, %v3702
        %vm3737 = vcmask 64512
        %v3738 = vsel %vm3737, %v3705, -inf
        %v3739 = vsel %vm3737, %v3707, -inf
        %v3740 = vmax.f32 %v3738, %v3739
        %v3741 = vsel %vm3737, %v3706, -inf
        %v3742 = vsel %vm3737, %v3708, -inf
        %v3743 = vmax.f32 %v3741, %v3742
        %v3744 = vsel %vm3737, %v3709, -inf
        %v3745 = vsel %vm3737, %v3711, -inf
        %v3746 = vmax.f32 %v3744, %v3745
        %v3747 = vsel %vm3737, %v3710, -inf
        %v3748 = vsel %vm3737, %v3712, -inf
        %v3749 = vmax.f32 %v3747, %v3748
        %v3750 = vsel %vm3737, %v3713, -inf
        %v3751 = vsel %vm3737, %v3715, -inf
        %v3752 = vmax.f32 %v3750, %v3751
        %v3753 = vsel %vm3737, %v3714, -inf
        %v3754 = vsel %vm3737, %v3716, -inf
        %v3755 = vmax.f32 %v3753, %v3754
        %v3756 = vsel %vm3737, %v3717, -inf
        %v3757 = vsel %vm3737, %v3719, -inf
        %v3758 = vmax.f32 %v3756, %v3757
        %v3759 = vsel %vm3737, %v3718, -inf
        %v3760 = vsel %vm3737, %v3720, -inf
        %v3761 = vmax.f32 %v3759, %v3760
        %v3762 = vsel %vm3737, %v3721, -inf
        %v3763 = vsel %vm3737, %v3723, -inf
        %v3764 = vmax.f32 %v3762, %v3763
        %v3765 = vsel %vm3737, %v3722, -inf
        %v3766 = vsel %vm3737, %v3724, -inf
        %v3767 = vmax.f32 %v3765, %v3766
        %v3768 = vsel %vm3737, %v3725, -inf
        %v3769 = vsel %vm3737, %v3727, -inf
        %v3770 = vmax.f32 %v3768, %v3769
        %v3771 = vsel %vm3737, %v3726, -inf
        %v3772 = vsel %vm3737, %v3728, -inf
        %v3773 = vmax.f32 %v3771, %v3772
        %v3774 = vsel %vm3737, %v3729, -inf
        %v3775 = vsel %vm3737, %v3731, -inf
        %v3776 = vmax.f32 %v3774, %v3775
        %v3777 = vsel %vm3737, %v3730, -inf
        %v3778 = vsel %vm3737, %v3732, -inf
        %v3779 = vmax.f32 %v3777, %v3778
        %v3780 = vsel %vm3737, %v3733, -inf
        %v3781 = vsel %vm3737, %v3735, -inf
        %v3782 = vmax.f32 %v3780, %v3781
        %v3783 = vsel %vm3737, %v3734, -inf
        %v3784 = vsel %vm3737, %v3736, -inf
        %v3785 = vmax.f32 %v3783, %v3784
        %v3802 = vcombine.high %v3740, %v3740
        %v3804 = vunpack.c.l.s4 1983009808
        %v3805 = vunpack.c.0.s8 %v3804
        %v3806 = vlaneseq
        %v3807 = vshrl.u32 %v3806, 7
        %v3808 = vsub.s32 %v3805, %v3807
        %v3809 = vrot.slane %v3740, %v3808
        %v3811 = vunpack.c.l.s4 1983009808
        %v3812 = vunpack.c.0.s8 %v3811
        %v3813 = vlaneseq
        %v3814 = vshrl.u32 %v3813, 7
        %v3815 = vsub.s32 %v3812, %v3814
        %v3816 = vrot.slane %v3802, %v3815
        %v3817 = vcombine.high %v3809, %v3809
        %v3818 = vcombine.high %v3816, %v3816
        %v3819 = vcombine.high %v3743, %v3743
        %v3821 = vunpack.c.l.s4 1983009808
        %v3822 = vunpack.c.0.s8 %v3821
        %v3823 = vlaneseq
        %v3824 = vshrl.u32 %v3823, 7
        %v3825 = vsub.s32 %v3822, %v3824
        %v3826 = vrot.slane %v3743, %v3825
        %v3828 = vunpack.c.l.s4 1983009808
        %v3829 = vunpack.c.0.s8 %v3828
        %v3830 = vlaneseq
        %v3831 = vshrl.u32 %v3830, 7
        %v3832 = vsub.s32 %v3829, %v3831
        %v3833 = vrot.slane %v3819, %v3832
        %v3834 = vcombine.high %v3826, %v3826
        %v3835 = vcombine.high %v3833, %v3833
        %v3836 = vcombine.high %v3746, %v3746
        %v3838 = vunpack.c.l.s4 1983009808
        %v3839 = vunpack.c.0.s8 %v3838
        %v3840 = vlaneseq
        %v3841 = vshrl.u32 %v3840, 7
        %v3842 = vsub.s32 %v3839, %v3841
        %v3843 = vrot.slane %v3746, %v3842
        %v3845 = vunpack.c.l.s4 1983009808
        %v3846 = vunpack.c.0.s8 %v3845
        %v3847 = vlaneseq
        %v3848 = vshrl.u32 %v3847, 7
        %v3849 = vsub.s32 %v3846, %v3848
        %v3850 = vrot.slane %v3836, %v3849
        %v3851 = vcombine.high %v3843, %v3843
        %v3852 = vcombine.high %v3850, %v3850
        %v3853 = vcombine.high %v3749, %v3749
        %v3855 = vunpack.c.l.s4 1983009808
        %v3856 = vunpack.c.0.s8 %v3855
        %v3857 = vlaneseq
        %v3858 = vshrl.u32 %v3857, 7
        %v3859 = vsub.s32 %v3856, %v3858
        %v3860 = vrot.slane %v3749, %v3859
        %v3862 = vunpack.c.l.s4 1983009808
        %v3863 = vunpack.c.0.s8 %v3862
        %v3864 = vlaneseq
        %v3865 = vshrl.u32 %v3864, 7
        %v3866 = vsub.s32 %v3863, %v3865
        %v3867 = vrot.slane %v3853, %v3866
        %v3868 = vcombine.high %v3860, %v3860
        %v3869 = vcombine.high %v3867, %v3867
        %v3870 = vcombine.high %v3752, %v3752
        %v3872 = vunpack.c.l.s4 1983009808
        %v3873 = vunpack.c.0.s8 %v3872
        %v3874 = vlaneseq
        %v3875 = vshrl.u32 %v3874, 7
        %v3876 = vsub.s32 %v3873, %v3875
        %v3877 = vrot.slane %v3752, %v3876
        %v3879 = vunpack.c.l.s4 1983009808
        %v3880 = vunpack.c.0.s8 %v3879
        %v3881 = vlaneseq
        %v3882 = vshrl.u32 %v3881, 7
        %v3883 = vsub.s32 %v3880, %v3882
        %v3884 = vrot.slane %v3870, %v3883
        %v3885 = vcombine.high %v3877, %v3877
        %v3886 = vcombine.high %v3884, %v3884
        %v3887 = vcombine.high %v3755, %v3755
        %v3889 = vunpack.c.l.s4 1983009808
        %v3890 = vunpack.c.0.s8 %v3889
        %v3891 = vlaneseq
        %v3892 = vshrl.u32 %v3891, 7
        %v3893 = vsub.s32 %v3890, %v3892
        %v3894 = vrot.slane %v3755, %v3893
        %v3896 = vunpack.c.l.s4 1983009808
        %v3897 = vunpack.c.0.s8 %v3896
        %v3898 = vlaneseq
        %v3899 = vshrl.u32 %v3898, 7
        %v3900 = vsub.s32 %v3897, %v3899
        %v3901 = vrot.slane %v3887, %v3900
        %v3902 = vcombine.high %v3894, %v3894
        %v3903 = vcombine.high %v3901, %v3901
        %v3904 = vcombine.high %v3758, %v3758
        %v3906 = vunpack.c.l.s4 1983009808
        %v3907 = vunpack.c.0.s8 %v3906
        %v3908 = vlaneseq
        %v3909 = vshrl.u32 %v3908, 7
        %v3910 = vsub.s32 %v3907, %v3909
        %v3911 = vrot.slane %v3758, %v3910
        %v3913 = vunpack.c.l.s4 1983009808
        %v3914 = vunpack.c.0.s8 %v3913
        %v3915 = vlaneseq
        %v3916 = vshrl.u32 %v3915, 7
        %v3917 = vsub.s32 %v3914, %v3916
        %v3918 = vrot.slane %v3904, %v3917
        %v3919 = vcombine.high %v3911, %v3911
        %v3920 = vcombine.high %v3918, %v3918
        %v3921 = vcombine.high %v3761, %v3761
        %v3923 = vunpack.c.l.s4 1983009808
        %v3924 = vunpack.c.0.s8 %v3923
        %v3925 = vlaneseq
        %v3926 = vshrl.u32 %v3925, 7
        %v3927 = vsub.s32 %v3924, %v3926
        %v3928 = vrot.slane %v3761, %v3927
        %v3930 = vunpack.c.l.s4 1983009808
        %v3931 = vunpack.c.0.s8 %v3930
        %v3932 = vlaneseq
        %v3933 = vshrl.u32 %v3932, 7
        %v3934 = vsub.s32 %v3931, %v3933
        %v3935 = vrot.slane %v3921, %v3934
        %v3936 = vcombine.high %v3928, %v3928
        %v3937 = vcombine.high %v3935, %v3935
        %v3938 = vcombine.high %v3764, %v3764
        %v3940 = vunpack.c.l.s4 1983009808
        %v3941 = vunpack.c.0.s8 %v3940
        %v3942 = vlaneseq
        %v3943 = vshrl.u32 %v3942, 7
        %v3944 = vsub.s32 %v3941, %v3943
        %v3945 = vrot.slane %v3764, %v3944
        %v3947 = vunpack.c.l.s4 1983009808
        %v3948 = vunpack.c.0.s8 %v3947
        %v3949 = vlaneseq
        %v3950 = vshrl.u32 %v3949, 7
        %v3951 = vsub.s32 %v3948, %v3950
        %v3952 = vrot.slane %v3938, %v3951
        %v3953 = vcombine.high %v3945, %v3945
        %v3954 = vcombine.high %v3952, %v3952
        %v3955 = vcombine.high %v3767, %v3767
        %v3957 = vunpack.c.l.s4 1983009808
        %v3958 = vunpack.c.0.s8 %v3957
        %v3959 = vlaneseq
        %v3960 = vshrl.u32 %v3959, 7
        %v3961 = vsub.s32 %v3958, %v3960
        %v3962 = vrot.slane %v3767, %v3961
        %v3964 = vunpack.c.l.s4 1983009808
        %v3965 = vunpack.c.0.s8 %v3964
        %v3966 = vlaneseq
        %v3967 = vshrl.u32 %v3966, 7
        %v3968 = vsub.s32 %v3965, %v3967
        %v3969 = vrot.slane %v3955, %v3968
        %v3970 = vcombine.high %v3962, %v3962
        %v3971 = vcombine.high %v3969, %v3969
        %v3972 = vcombine.high %v3770, %v3770
        %v3974 = vunpack.c.l.s4 1983009808
        %v3975 = vunpack.c.0.s8 %v3974
        %v3976 = vlaneseq
        %v3977 = vshrl.u32 %v3976, 7
        %v3978 = vsub.s32 %v3975, %v3977
        %v3979 = vrot.slane %v3770, %v3978
        %v3981 = vunpack.c.l.s4 1983009808
        %v3982 = vunpack.c.0.s8 %v3981
        %v3983 = vlaneseq
        %v3984 = vshrl.u32 %v3983, 7
        %v3985 = vsub.s32 %v3982, %v3984
        %v3986 = vrot.slane %v3972, %v3985
        %v3987 = vcombine.high %v3979, %v3979
        %v3988 = vcombine.high %v3986, %v3986
        %v3989 = vcombine.high %v3773, %v3773
        %v3991 = vunpack.c.l.s4 1983009808
        %v3992 = vunpack.c.0.s8 %v3991
        %v3993 = vlaneseq
        %v3994 = vshrl.u32 %v3993, 7
        %v3995 = vsub.s32 %v3992, %v3994
        %v3996 = vrot.slane %v3773, %v3995
        %v3998 = vunpack.c.l.s4 1983009808
        %v3999 = vunpack.c.0.s8 %v3998
        %v4000 = vlaneseq
        %v4001 = vshrl.u32 %v4000, 7
        %v4002 = vsub.s32 %v3999, %v4001
        %v4003 = vrot.slane %v3989, %v4002
        %v4004 = vcombine.high %v3996, %v3996
        %v4005 = vcombine.high %v4003, %v4003
        %v4006 = vcombine.high %v3776, %v3776
        %v4008 = vunpack.c.l.s4 1983009808
        %v4009 = vunpack.c.0.s8 %v4008
        %v4010 = vlaneseq
        %v4011 = vshrl.u32 %v4010, 7
        %v4012 = vsub.s32 %v4009, %v4011
        %v4013 = vrot.slane %v3776, %v4012
        %v4015 = vunpack.c.l.s4 1983009808
        %v4016 = vunpack.c.0.s8 %v4015
        %v4017 = vlaneseq
        %v4018 = vshrl.u32 %v4017, 7
        %v4019 = vsub.s32 %v4016, %v4018
        %v4020 = vrot.slane %v4006, %v4019
        %v4021 = vcombine.high %v4013, %v4013
        %v4022 = vcombine.high %v4020, %v4020
        %v4023 = vcombine.high %v3779, %v3779
        %v4025 = vunpack.c.l.s4 1983009808
        %v4026 = vunpack.c.0.s8 %v4025
        %v4027 = vlaneseq
        %v4028 = vshrl.u32 %v4027, 7
        %v4029 = vsub.s32 %v4026, %v4028
        %v4030 = vrot.slane %v3779, %v4029
        %v4032 = vunpack.c.l.s4 1983009808
        %v4033 = vunpack.c.0.s8 %v4032
        %v4034 = vlaneseq
        %v4035 = vshrl.u32 %v4034, 7
        %v4036 = vsub.s32 %v4033, %v4035
        %v4037 = vrot.slane %v4023, %v4036
        %v4038 = vcombine.high %v4030, %v4030
        %v4039 = vcombine.high %v4037, %v4037
        %v4040 = vcombine.high %v3782, %v3782
        %v4042 = vunpack.c.l.s4 1983009808
        %v4043 = vunpack.c.0.s8 %v4042
        %v4044 = vlaneseq
        %v4045 = vshrl.u32 %v4044, 7
        %v4046 = vsub.s32 %v4043, %v4045
        %v4047 = vrot.slane %v3782, %v4046
        %v4049 = vunpack.c.l.s4 1983009808
        %v4050 = vunpack.c.0.s8 %v4049
        %v4051 = vlaneseq
        %v4052 = vshrl.u32 %v4051, 7
        %v4053 = vsub.s32 %v4050, %v4052
        %v4054 = vrot.slane %v4040, %v4053
        %v4055 = vcombine.high %v4047, %v4047
        %v4056 = vcombine.high %v4054, %v4054
        %v4057 = vcombine.high %v3785, %v3785
        %v4059 = vunpack.c.l.s4 1983009808
        %v4060 = vunpack.c.0.s8 %v4059
        %v4061 = vlaneseq
        %v4062 = vshrl.u32 %v4061, 7
        %v4063 = vsub.s32 %v4060, %v4062
        %v4064 = vrot.slane %v3785, %v4063
        %v4066 = vunpack.c.l.s4 1983009808
        %v4067 = vunpack.c.0.s8 %v4066
        %v4068 = vlaneseq
        %v4069 = vshrl.u32 %v4068, 7
        %v4070 = vsub.s32 %v4067, %v4069
        %v4071 = vrot.slane %v4057, %v4070
        %v4072 = vcombine.high %v4064, %v4064
        %v4073 = vcombine.high %v4071, %v4071
        %vm4138 = vcmask 58368
        %v4139 = vsel %vm4138, %v3809, -inf
        %v4140 = vrot.slane %v4139, 4
        %v4141 = vmax.f32 %v4139, %v4140
        %v4142 = vrot.slane %v4141, 2
        %v4143 = vmax.f32 %v4141, %v4142
        %v4144 = vrot.slane %v4143, 1
        %v4145 = vmax.f32 %v4143, %v4144
        %v4146 = vsel %vm4138, %v3817, -inf
        %v4147 = vrot.slane %v4146, 4
        %v4148 = vmax.f32 %v4146, %v4147
        %v4149 = vrot.slane %v4148, 2
        %v4150 = vmax.f32 %v4148, %v4149
        %v4151 = vrot.slane %v4150, 1
        %v4152 = vmax.f32 %v4150, %v4151
        %v4153 = vsel %vm4138, %v3816, -inf
        %v4154 = vrot.slane %v4153, 4
        %v4155 = vmax.f32 %v4153, %v4154
        %v4156 = vrot.slane %v4155, 2
        %v4157 = vmax.f32 %v4155, %v4156
        %v4158 = vrot.slane %v4157, 1
        %v4159 = vmax.f32 %v4157, %v4158
        %v4160 = vsel %vm4138, %v3818, -inf
        %v4161 = vrot.slane %v4160, 4
        %v4162 = vmax.f32 %v4160, %v4161
        %v4163 = vrot.slane %v4162, 2
        %v4164 = vmax.f32 %v4162, %v4163
        %v4165 = vrot.slane %v4164, 1
        %v4166 = vmax.f32 %v4164, %v4165
        %v4167 = vsel %vm4138, %v3826, -inf
        %v4168 = vrot.slane %v4167, 4
        %v4169 = vmax.f32 %v4167, %v4168
        %v4170 = vrot.slane %v4169, 2
        %v4171 = vmax.f32 %v4169, %v4170
        %v4172 = vrot.slane %v4171, 1
        %v4173 = vmax.f32 %v4171, %v4172
        %v4174 = vsel %vm4138, %v3834, -inf
        %v4175 = vrot.slane %v4174, 4
        %v4176 = vmax.f32 %v4174, %v4175
        %v4177 = vrot.slane %v4176, 2
        %v4178 = vmax.f32 %v4176, %v4177
        %v4179 = vrot.slane %v4178, 1
        %v4180 = vmax.f32 %v4178, %v4179
        %v4181 = vsel %vm4138, %v3833, -inf
        %v4182 = vrot.slane %v4181, 4
        %v4183 = vmax.f32 %v4181, %v4182
        %v4184 = vrot.slane %v4183, 2
        %v4185 = vmax.f32 %v4183, %v4184
        %v4186 = vrot.slane %v4185, 1
        %v4187 = vmax.f32 %v4185, %v4186
        %v4188 = vsel %vm4138, %v3835, -inf
        %v4189 = vrot.slane %v4188, 4
        %v4190 = vmax.f32 %v4188, %v4189
        %v4191 = vrot.slane %v4190, 2
        %v4192 = vmax.f32 %v4190, %v4191
        %v4193 = vrot.slane %v4192, 1
        %v4194 = vmax.f32 %v4192, %v4193
        %v4195 = vsel %vm4138, %v3843, -inf
        %v4196 = vrot.slane %v4195, 4
        %v4197 = vmax.f32 %v4195, %v4196
        %v4198 = vrot.slane %v4197, 2
        %v4199 = vmax.f32 %v4197, %v4198
        %v4200 = vrot.slane %v4199, 1
        %v4201 = vmax.f32 %v4199, %v4200
        %v4202 = vsel %vm4138, %v3851, -inf
        %v4203 = vrot.slane %v4202, 4
        %v4204 = vmax.f32 %v4202, %v4203
        %v4205 = vrot.slane %v4204, 2
        %v4206 = vmax.f32 %v4204, %v4205
        %v4207 = vrot.slane %v4206, 1
        %v4208 = vmax.f32 %v4206, %v4207
        %v4209 = vsel %vm4138, %v3850, -inf
        %v4210 = vrot.slane %v4209, 4
        %v4211 = vmax.f32 %v4209, %v4210
        %v4212 = vrot.slane %v4211, 2
        %v4213 = vmax.f32 %v4211, %v4212
        %v4214 = vrot.slane %v4213, 1
        %v4215 = vmax.f32 %v4213, %v4214
        %v4216 = vsel %vm4138, %v3852, -inf
        %v4217 = vrot.slane %v4216, 4
        %v4218 = vmax.f32 %v4216, %v4217
        %v4219 = vrot.slane %v4218, 2
        %v4220 = vmax.f32 %v4218, %v4219
        %v4221 = vrot.slane %v4220, 1
        %v4222 = vmax.f32 %v4220, %v4221
        %v4223 = vsel %vm4138, %v3860, -inf
        %v4224 = vrot.slane %v4223, 4
        %v4225 = vmax.f32 %v4223, %v4224
        %v4226 = vrot.slane %v4225, 2
        %v4227 = vmax.f32 %v4225, %v4226
        %v4228 = vrot.slane %v4227, 1
        %v4229 = vmax.f32 %v4227, %v4228
        %v4230 = vsel %vm4138, %v3868, -inf
        %v4231 = vrot.slane %v4230, 4
        %v4232 = vmax.f32 %v4230, %v4231
        %v4233 = vrot.slane %v4232, 2
        %v4234 = vmax.f32 %v4232, %v4233
        %v4235 = vrot.slane %v4234, 1
        %v4236 = vmax.f32 %v4234, %v4235
        %v4237 = vsel %vm4138, %v3867, -inf
        %v4238 = vrot.slane %v4237, 4
        %v4239 = vmax.f32 %v4237, %v4238
        %v4240 = vrot.slane %v4239, 2
        %v4241 = vmax.f32 %v4239, %v4240
        %v4242 = vrot.slane %v4241, 1
        %v4243 = vmax.f32 %v4241, %v4242
        %v4244 = vsel %vm4138, %v3869, -inf
        %v4245 = vrot.slane %v4244, 4
        %v4246 = vmax.f32 %v4244, %v4245
        %v4247 = vrot.slane %v4246, 2
        %v4248 = vmax.f32 %v4246, %v4247
        %v4249 = vrot.slane %v4248, 1
        %v4250 = vmax.f32 %v4248, %v4249
        %v4251 = vsel %vm4138, %v3877, -inf
        %v4252 = vrot.slane %v4251, 4
        %v4253 = vmax.f32 %v4251, %v4252
        %v4254 = vrot.slane %v4253, 2
        %v4255 = vmax.f32 %v4253, %v4254
        %v4256 = vrot.slane %v4255, 1
        %v4257 = vmax.f32 %v4255, %v4256
        %v4258 = vsel %vm4138, %v3885, -inf
        %v4259 = vrot.slane %v4258, 4
        %v4260 = vmax.f32 %v4258, %v4259
        %v4261 = vrot.slane %v4260, 2
        %v4262 = vmax.f32 %v4260, %v4261
        %v4263 = vrot.slane %v4262, 1
        %v4264 = vmax.f32 %v4262, %v4263
        %v4265 = vsel %vm4138, %v3884, -inf
        %v4266 = vrot.slane %v4265, 4
        %v4267 = vmax.f32 %v4265, %v4266
        %v4268 = vrot.slane %v4267, 2
        %v4269 = vmax.f32 %v4267, %v4268
        %v4270 = vrot.slane %v4269, 1
        %v4271 = vmax.f32 %v4269, %v4270
        %v4272 = vsel %vm4138, %v3886, -inf
        %v4273 = vrot.slane %v4272, 4
        %v4274 = vmax.f32 %v4272, %v4273
        %v4275 = vrot.slane %v4274, 2
        %v4276 = vmax.f32 %v4274, %v4275
        %v4277 = vrot.slane %v4276, 1
        %v4278 = vmax.f32 %v4276, %v4277
        %v4279 = vsel %vm4138, %v3894, -inf
        %v4280 = vrot.slane %v4279, 4
        %v4281 = vmax.f32 %v4279, %v4280
        %v4282 = vrot.slane %v4281, 2
        %v4283 = vmax.f32 %v4281, %v4282
        %v4284 = vrot.slane %v4283, 1
        %v4285 = vmax.f32 %v4283, %v4284
        %v4286 = vsel %vm4138, %v3902, -inf
        %v4287 = vrot.slane %v4286, 4
        %v4288 = vmax.f32 %v4286, %v4287
        %v4289 = vrot.slane %v4288, 2
        %v4290 = vmax.f32 %v4288, %v4289
        %v4291 = vrot.slane %v4290, 1
        %v4292 = vmax.f32 %v4290, %v4291
        %v4293 = vsel %vm4138, %v3901, -inf
        %v4294 = vrot.slane %v4293, 4
        %v4295 = vmax.f32 %v4293, %v4294
        %v4296 = vrot.slane %v4295, 2
        %v4297 = vmax.f32 %v4295, %v4296
        %v4298 = vrot.slane %v4297, 1
        %v4299 = vmax.f32 %v4297, %v4298
        %v4300 = vsel %vm4138, %v3903, -inf
        %v4301 = vrot.slane %v4300, 4
        %v4302 = vmax.f32 %v4300, %v4301
        %v4303 = vrot.slane %v4302, 2
        %v4304 = vmax.f32 %v4302, %v4303
        %v4305 = vrot.slane %v4304, 1
        %v4306 = vmax.f32 %v4304, %v4305
        %v4307 = vsel %vm4138, %v3911, -inf
        %v4308 = vrot.slane %v4307, 4
        %v4309 = vmax.f32 %v4307, %v4308
        %v4310 = vrot.slane %v4309, 2
        %v4311 = vmax.f32 %v4309, %v4310
        %v4312 = vrot.slane %v4311, 1
        %v4313 = vmax.f32 %v4311, %v4312
        %v4314 = vsel %vm4138, %v3919, -inf
        %v4315 = vrot.slane %v4314, 4
        %v4316 = vmax.f32 %v4314, %v4315
        %v4317 = vrot.slane %v4316, 2
        %v4318 = vmax.f32 %v4316, %v4317
        %v4319 = vrot.slane %v4318, 1
        %v4320 = vmax.f32 %v4318, %v4319
        %v4321 = vsel %vm4138, %v3918, -inf
        %v4322 = vrot.slane %v4321, 4
        %v4323 = vmax.f32 %v4321, %v4322
        %v4324 = vrot.slane %v4323, 2
        %v4325 = vmax.f32 %v4323, %v4324
        %v4326 = vrot.slane %v4325, 1
        %v4327 = vmax.f32 %v4325, %v4326
        %v4328 = vsel %vm4138, %v3920, -inf
        %v4329 = vrot.slane %v4328, 4
        %v4330 = vmax.f32 %v4328, %v4329
        %v4331 = vrot.slane %v4330, 2
        %v4332 = vmax.f32 %v4330, %v4331
        %v4333 = vrot.slane %v4332, 1
        %v4334 = vmax.f32 %v4332, %v4333
        %v4335 = vsel %vm4138, %v3928, -inf
        %v4336 = vrot.slane %v4335, 4
        %v4337 = vmax.f32 %v4335, %v4336
        %v4338 = vrot.slane %v4337, 2
        %v4339 = vmax.f32 %v4337, %v4338
        %v4340 = vrot.slane %v4339, 1
        %v4341 = vmax.f32 %v4339, %v4340
        %v4342 = vsel %vm4138, %v3936, -inf
        %v4343 = vrot.slane %v4342, 4
        %v4344 = vmax.f32 %v4342, %v4343
        %v4345 = vrot.slane %v4344, 2
        %v4346 = vmax.f32 %v4344, %v4345
        %v4347 = vrot.slane %v4346, 1
        %v4348 = vmax.f32 %v4346, %v4347
        %v4349 = vsel %vm4138, %v3935, -inf
        %v4350 = vrot.slane %v4349, 4
        %v4351 = vmax.f32 %v4349, %v4350
        %v4352 = vrot.slane %v4351, 2
        %v4353 = vmax.f32 %v4351, %v4352
        %v4354 = vrot.slane %v4353, 1
        %v4355 = vmax.f32 %v4353, %v4354
        %v4356 = vsel %vm4138, %v3937, -inf
        %v4357 = vrot.slane %v4356, 4
        %v4358 = vmax.f32 %v4356, %v4357
        %v4359 = vrot.slane %v4358, 2
        %v4360 = vmax.f32 %v4358, %v4359
        %v4361 = vrot.slane %v4360, 1
        %v4362 = vmax.f32 %v4360, %v4361
        %v4363 = vsel %vm4138, %v3945, -inf
        %v4364 = vrot.slane %v4363, 4
        %v4365 = vmax.f32 %v4363, %v4364
        %v4366 = vrot.slane %v4365, 2
        %v4367 = vmax.f32 %v4365, %v4366
        %v4368 = vrot.slane %v4367, 1
        %v4369 = vmax.f32 %v4367, %v4368
        %v4370 = vsel %vm4138, %v3953, -inf
        %v4371 = vrot.slane %v4370, 4
        %v4372 = vmax.f32 %v4370, %v4371
        %v4373 = vrot.slane %v4372, 2
        %v4374 = vmax.f32 %v4372, %v4373
        %v4375 = vrot.slane %v4374, 1
        %v4376 = vmax.f32 %v4374, %v4375
        %v4377 = vsel %vm4138, %v3952, -inf
        %v4378 = vrot.slane %v4377, 4
        %v4379 = vmax.f32 %v4377, %v4378
        %v4380 = vrot.slane %v4379, 2
        %v4381 = vmax.f32 %v4379, %v4380
        %v4382 = vrot.slane %v4381, 1
        %v4383 = vmax.f32 %v4381, %v4382
        %v4384 = vsel %vm4138, %v3954, -inf
        %v4385 = vrot.slane %v4384, 4
        %v4386 = vmax.f32 %v4384, %v4385
        %v4387 = vrot.slane %v4386, 2
        %v4388 = vmax.f32 %v4386, %v4387
        %v4389 = vrot.slane %v4388, 1
        %v4390 = vmax.f32 %v4388, %v4389
        %v4391 = vsel %vm4138, %v3962, -inf
        %v4392 = vrot.slane %v4391, 4
        %v4393 = vmax.f32 %v4391, %v4392
        %v4394 = vrot.slane %v4393, 2
        %v4395 = vmax.f32 %v4393, %v4394
        %v4396 = vrot.slane %v4395, 1
        %v4397 = vmax.f32 %v4395, %v4396
        %v4398 = vsel %vm4138, %v3970, -inf
        %v4399 = vrot.slane %v4398, 4
        %v4400 = vmax.f32 %v4398, %v4399
        %v4401 = vrot.slane %v4400, 2
        %v4402 = vmax.f32 %v4400, %v4401
        %v4403 = vrot.slane %v4402, 1
        %v4404 = vmax.f32 %v4402, %v4403
        %v4405 = vsel %vm4138, %v3969, -inf
        %v4406 = vrot.slane %v4405, 4
        %v4407 = vmax.f32 %v4405, %v4406
        %v4408 = vrot.slane %v4407, 2
        %v4409 = vmax.f32 %v4407, %v4408
        %v4410 = vrot.slane %v4409, 1
        %v4411 = vmax.f32 %v4409, %v4410
        %v4412 = vsel %vm4138, %v3971, -inf
        %v4413 = vrot.slane %v4412, 4
        %v4414 = vmax.f32 %v4412, %v4413
        %v4415 = vrot.slane %v4414, 2
        %v4416 = vmax.f32 %v4414, %v4415
        %v4417 = vrot.slane %v4416, 1
        %v4418 = vmax.f32 %v4416, %v4417
        %v4419 = vsel %vm4138, %v3979, -inf
        %v4420 = vrot.slane %v4419, 4
        %v4421 = vmax.f32 %v4419, %v4420
        %v4422 = vrot.slane %v4421, 2
        %v4423 = vmax.f32 %v4421, %v4422
        %v4424 = vrot.slane %v4423, 1
        %v4425 = vmax.f32 %v4423, %v4424
        %v4426 = vsel %vm4138, %v3987, -inf
        %v4427 = vrot.slane %v4426, 4
        %v4428 = vmax.f32 %v4426, %v4427
        %v4429 = vrot.slane %v4428, 2
        %v4430 = vmax.f32 %v4428, %v4429
        %v4431 = vrot.slane %v4430, 1
        %v4432 = vmax.f32 %v4430, %v4431
        %v4433 = vsel %vm4138, %v3986, -inf
        %v4434 = vrot.slane %v4433, 4
        %v4435 = vmax.f32 %v4433, %v4434
        %v4436 = vrot.slane %v4435, 2
        %v4437 = vmax.f32 %v4435, %v4436
        %v4438 = vrot.slane %v4437, 1
        %v4439 = vmax.f32 %v4437, %v4438
        %v4440 = vsel %vm4138, %v3988, -inf
        %v4441 = vrot.slane %v4440, 4
        %v4442 = vmax.f32 %v4440, %v4441
        %v4443 = vrot.slane %v4442, 2
        %v4444 = vmax.f32 %v4442, %v4443
        %v4445 = vrot.slane %v4444, 1
        %v4446 = vmax.f32 %v4444, %v4445
        %v4447 = vsel %vm4138, %v3996, -inf
        %v4448 = vrot.slane %v4447, 4
        %v4449 = vmax.f32 %v4447, %v4448
        %v4450 = vrot.slane %v4449, 2
        %v4451 = vmax.f32 %v4449, %v4450
        %v4452 = vrot.slane %v4451, 1
        %v4453 = vmax.f32 %v4451, %v4452
        %v4454 = vsel %vm4138, %v4004, -inf
        %v4455 = vrot.slane %v4454, 4
        %v4456 = vmax.f32 %v4454, %v4455
        %v4457 = vrot.slane %v4456, 2
        %v4458 = vmax.f32 %v4456, %v4457
        %v4459 = vrot.slane %v4458, 1
        %v4460 = vmax.f32 %v4458, %v4459
        %v4461 = vsel %vm4138, %v4003, -inf
        %v4462 = vrot.slane %v4461, 4
        %v4463 = vmax.f32 %v4461, %v4462
        %v4464 = vrot.slane %v4463, 2
        %v4465 = vmax.f32 %v4463, %v4464
        %v4466 = vrot.slane %v4465, 1
        %v4467 = vmax.f32 %v4465, %v4466
        %v4468 = vsel %vm4138, %v4005, -inf
        %v4469 = vrot.slane %v4468, 4
        %v4470 = vmax.f32 %v4468, %v4469
        %v4471 = vrot.slane %v4470, 2
        %v4472 = vmax.f32 %v4470, %v4471
        %v4473 = vrot.slane %v4472, 1
        %v4474 = vmax.f32 %v4472, %v4473
        %v4475 = vsel %vm4138, %v4013, -inf
        %v4476 = vrot.slane %v4475, 4
        %v4477 = vmax.f32 %v4475, %v4476
        %v4478 = vrot.slane %v4477, 2
        %v4479 = vmax.f32 %v4477, %v4478
        %v4480 = vrot.slane %v4479, 1
        %v4481 = vmax.f32 %v4479, %v4480
        %v4482 = vsel %vm4138, %v4021, -inf
        %v4483 = vrot.slane %v4482, 4
        %v4484 = vmax.f32 %v4482, %v4483
        %v4485 = vrot.slane %v4484, 2
        %v4486 = vmax.f32 %v4484, %v4485
        %v4487 = vrot.slane %v4486, 1
        %v4488 = vmax.f32 %v4486, %v4487
        %v4489 = vsel %vm4138, %v4020, -inf
        %v4490 = vrot.slane %v4489, 4
        %v4491 = vmax.f32 %v4489, %v4490
        %v4492 = vrot.slane %v4491, 2
        %v4493 = vmax.f32 %v4491, %v4492
        %v4494 = vrot.slane %v4493, 1
        %v4495 = vmax.f32 %v4493, %v4494
        %v4496 = vsel %vm4138, %v4022, -inf
        %v4497 = vrot.slane %v4496, 4
        %v4498 = vmax.f32 %v4496, %v4497
        %v4499 = vrot.slane %v4498, 2
        %v4500 = vmax.f32 %v4498, %v4499
        %v4501 = vrot.slane %v4500, 1
        %v4502 = vmax.f32 %v4500, %v4501
        %v4503 = vsel %vm4138, %v4030, -inf
        %v4504 = vrot.slane %v4503, 4
        %v4505 = vmax.f32 %v4503, %v4504
        %v4506 = vrot.slane %v4505, 2
        %v4507 = vmax.f32 %v4505, %v4506
        %v4508 = vrot.slane %v4507, 1
        %v4509 = vmax.f32 %v4507, %v4508
        %v4510 = vsel %vm4138, %v4038, -inf
        %v4511 = vrot.slane %v4510, 4
        %v4512 = vmax.f32 %v4510, %v4511
        %v4513 = vrot.slane %v4512, 2
        %v4514 = vmax.f32 %v4512, %v4513
        %v4515 = vrot.slane %v4514, 1
        %v4516 = vmax.f32 %v4514, %v4515
        %v4517 = vsel %vm4138, %v4037, -inf
        %v4518 = vrot.slane %v4517, 4
        %v4519 = vmax.f32 %v4517, %v4518
        %v4520 = vrot.slane %v4519, 2
        %v4521 = vmax.f32 %v4519, %v4520
        %v4522 = vrot.slane %v4521, 1
        %v4523 = vmax.f32 %v4521, %v4522
        %v4524 = vsel %vm4138, %v4039, -inf
        %v4525 = vrot.slane %v4524, 4
        %v4526 = vmax.f32 %v4524, %v4525
        %v4527 = vrot.slane %v4526, 2
        %v4528 = vmax.f32 %v4526, %v4527
        %v4529 = vrot.slane %v4528, 1
        %v4530 = vmax.f32 %v4528, %v4529
        %v4531 = vsel %vm4138, %v4047, -inf
        %v4532 = vrot.slane %v4531, 4
        %v4533 = vmax.f32 %v4531, %v4532
        %v4534 = vrot.slane %v4533, 2
        %v4535 = vmax.f32 %v4533, %v4534
        %v4536 = vrot.slane %v4535, 1
        %v4537 = vmax.f32 %v4535, %v4536
        %v4538 = vsel %vm4138, %v4055, -inf
        %v4539 = vrot.slane %v4538, 4
        %v4540 = vmax.f32 %v4538, %v4539
        %v4541 = vrot.slane %v4540, 2
        %v4542 = vmax.f32 %v4540, %v4541
        %v4543 = vrot.slane %v4542, 1
        %v4544 = vmax.f32 %v4542, %v4543
        %v4545 = vsel %vm4138, %v4054, -inf
        %v4546 = vrot.slane %v4545, 4
        %v4547 = vmax.f32 %v4545, %v4546
        %v4548 = vrot.slane %v4547, 2
        %v4549 = vmax.f32 %v4547, %v4548
        %v4550 = vrot.slane %v4549, 1
        %v4551 = vmax.f32 %v4549, %v4550
        %v4552 = vsel %vm4138, %v4056, -inf
        %v4553 = vrot.slane %v4552, 4
        %v4554 = vmax.f32 %v4552, %v4553
        %v4555 = vrot.slane %v4554, 2
        %v4556 = vmax.f32 %v4554, %v4555
        %v4557 = vrot.slane %v4556, 1
        %v4558 = vmax.f32 %v4556, %v4557
        %v4559 = vsel %vm4138, %v4064, -inf
        %v4560 = vrot.slane %v4559, 4
        %v4561 = vmax.f32 %v4559, %v4560
        %v4562 = vrot.slane %v4561, 2
        %v4563 = vmax.f32 %v4561, %v4562
        %v4564 = vrot.slane %v4563, 1
        %v4565 = vmax.f32 %v4563, %v4564
        %v4566 = vsel %vm4138, %v4072, -inf
        %v4567 = vrot.slane %v4566, 4
        %v4568 = vmax.f32 %v4566, %v4567
        %v4569 = vrot.slane %v4568, 2
        %v4570 = vmax.f32 %v4568, %v4569
        %v4571 = vrot.slane %v4570, 1
        %v4572 = vmax.f32 %v4570, %v4571
        %v4573 = vsel %vm4138, %v4071, -inf
        %v4574 = vrot.slane %v4573, 4
        %v4575 = vmax.f32 %v4573, %v4574
        %v4576 = vrot.slane %v4575, 2
        %v4577 = vmax.f32 %v4575, %v4576
        %v4578 = vrot.slane %v4577, 1
        %v4579 = vmax.f32 %v4577, %v4578
        %v4580 = vsel %vm4138, %v4073, -inf
        %v4581 = vrot.slane %v4580, 4
        %v4582 = vmax.f32 %v4580, %v4581
        %v4583 = vrot.slane %v4582, 2
        %v4584 = vmax.f32 %v4582, %v4583
        %v4585 = vrot.slane %v4584, 1
        %v4586 = vmax.f32 %v4584, %v4585
        %v4587 = vld [vmem:[%s2] sm:$0x1]
        %v4589 = vlaneseq
        %v4590 = vshrl.u32 %v4589, 7
        %v4591 = vsub.s32 0, %v4590
        %v4592 = vrot.slane %v4587, %v4591
        %v4594 = vadd.f32 %v4145, %v4592
        %v4595 = vadd.f32 %v4152, %v4592
        %v4596 = vadd.f32 %v4159, %v4592
        %v4597 = vadd.f32 %v4166, %v4592
        %v4598 = vadd.f32 %v4173, %v4592
        %v4599 = vadd.f32 %v4180, %v4592
        %v4600 = vadd.f32 %v4187, %v4592
        %v4601 = vadd.f32 %v4194, %v4592
        %v4602 = vadd.f32 %v4201, %v4592
        %v4603 = vadd.f32 %v4208, %v4592
        %v4604 = vadd.f32 %v4215, %v4592
        %v4605 = vadd.f32 %v4222, %v4592
        %v4606 = vadd.f32 %v4229, %v4592
        %v4607 = vadd.f32 %v4236, %v4592
        %v4608 = vadd.f32 %v4243, %v4592
        %v4609 = vadd.f32 %v4250, %v4592
        %v4610 = vadd.f32 %v4257, %v4592
        %v4611 = vadd.f32 %v4264, %v4592
        %v4612 = vadd.f32 %v4271, %v4592
        %v4613 = vadd.f32 %v4278, %v4592
        %v4614 = vadd.f32 %v4285, %v4592
        %v4615 = vadd.f32 %v4292, %v4592
        %v4616 = vadd.f32 %v4299, %v4592
        %v4617 = vadd.f32 %v4306, %v4592
        %v4618 = vadd.f32 %v4313, %v4592
        %v4619 = vadd.f32 %v4320, %v4592
        %v4620 = vadd.f32 %v4327, %v4592
        %v4621 = vadd.f32 %v4334, %v4592
        %v4622 = vadd.f32 %v4341, %v4592
        %v4623 = vadd.f32 %v4348, %v4592
        %v4624 = vadd.f32 %v4355, %v4592
        %v4625 = vadd.f32 %v4362, %v4592
        %v4626 = vadd.f32 %v4369, %v4592
        %v4627 = vadd.f32 %v4376, %v4592
        %v4628 = vadd.f32 %v4383, %v4592
        %v4629 = vadd.f32 %v4390, %v4592
        %v4630 = vadd.f32 %v4397, %v4592
        %v4631 = vadd.f32 %v4404, %v4592
        %v4632 = vadd.f32 %v4411, %v4592
        %v4633 = vadd.f32 %v4418, %v4592
        %v4634 = vadd.f32 %v4425, %v4592
        %v4635 = vadd.f32 %v4432, %v4592
        %v4636 = vadd.f32 %v4439, %v4592
        %v4637 = vadd.f32 %v4446, %v4592
        %v4638 = vadd.f32 %v4453, %v4592
        %v4639 = vadd.f32 %v4460, %v4592
        %v4640 = vadd.f32 %v4467, %v4592
        %v4641 = vadd.f32 %v4474, %v4592
        %v4642 = vadd.f32 %v4481, %v4592
        %v4643 = vadd.f32 %v4488, %v4592
        %v4644 = vadd.f32 %v4495, %v4592
        %v4645 = vadd.f32 %v4502, %v4592
        %v4646 = vadd.f32 %v4509, %v4592
        %v4647 = vadd.f32 %v4516, %v4592
        %v4648 = vadd.f32 %v4523, %v4592
        %v4649 = vadd.f32 %v4530, %v4592
        %v4650 = vadd.f32 %v4537, %v4592
        %v4651 = vadd.f32 %v4544, %v4592
        %v4652 = vadd.f32 %v4551, %v4592
        %v4653 = vadd.f32 %v4558, %v4592
        %v4654 = vadd.f32 %v4565, %v4592
        %v4655 = vadd.f32 %v4572, %v4592
        %v4656 = vadd.f32 %v4579, %v4592
        %v4657 = vadd.f32 %v4586, %v4592
        %v4658 = vmax.f32 %v4594, 0.0
        %v4659 = vmax.f32 %v4595, 0.0
        %v4660 = vmax.f32 %v4596, 0.0
        %v4661 = vmax.f32 %v4597, 0.0
        %v4662 = vmax.f32 %v4598, 0.0
        %v4663 = vmax.f32 %v4599, 0.0
        %v4664 = vmax.f32 %v4600, 0.0
        %v4665 = vmax.f32 %v4601, 0.0
        %v4666 = vmax.f32 %v4602, 0.0
        %v4667 = vmax.f32 %v4603, 0.0
        %v4668 = vmax.f32 %v4604, 0.0
        %v4669 = vmax.f32 %v4605, 0.0
        %v4670 = vmax.f32 %v4606, 0.0
        %v4671 = vmax.f32 %v4607, 0.0
        %v4672 = vmax.f32 %v4608, 0.0
        %v4673 = vmax.f32 %v4609, 0.0
        %v4674 = vmax.f32 %v4610, 0.0
        %v4675 = vmax.f32 %v4611, 0.0
        %v4676 = vmax.f32 %v4612, 0.0
        %v4677 = vmax.f32 %v4613, 0.0
        %v4678 = vmax.f32 %v4614, 0.0
        %v4679 = vmax.f32 %v4615, 0.0
        %v4680 = vmax.f32 %v4616, 0.0
        %v4681 = vmax.f32 %v4617, 0.0
        %v4682 = vmax.f32 %v4618, 0.0
        %v4683 = vmax.f32 %v4619, 0.0
        %v4684 = vmax.f32 %v4620, 0.0
        %v4685 = vmax.f32 %v4621, 0.0
        %v4686 = vmax.f32 %v4622, 0.0
        %v4687 = vmax.f32 %v4623, 0.0
        %v4688 = vmax.f32 %v4624, 0.0
        %v4689 = vmax.f32 %v4625, 0.0
        %v4690 = vmax.f32 %v4626, 0.0
        %v4691 = vmax.f32 %v4627, 0.0
        %v4692 = vmax.f32 %v4628, 0.0
        %v4693 = vmax.f32 %v4629, 0.0
        %v4694 = vmax.f32 %v4630, 0.0
        %v4695 = vmax.f32 %v4631, 0.0
        %v4696 = vmax.f32 %v4632, 0.0
        %v4697 = vmax.f32 %v4633, 0.0
        %v4698 = vmax.f32 %v4634, 0.0
        %v4699 = vmax.f32 %v4635, 0.0
        %v4700 = vmax.f32 %v4636, 0.0
        %v4701 = vmax.f32 %v4637, 0.0
        %v4702 = vmax.f32 %v4638, 0.0
        %v4703 = vmax.f32 %v4639, 0.0
        %v4704 = vmax.f32 %v4640, 0.0
        %v4705 = vmax.f32 %v4641, 0.0
        %v4706 = vmax.f32 %v4642, 0.0
        %v4707 = vmax.f32 %v4643, 0.0
        %v4708 = vmax.f32 %v4644, 0.0
        %v4709 = vmax.f32 %v4645, 0.0
        %v4710 = vmax.f32 %v4646, 0.0
        %v4711 = vmax.f32 %v4647, 0.0
        %v4712 = vmax.f32 %v4648, 0.0
        %v4713 = vmax.f32 %v4649, 0.0
        %v4714 = vmax.f32 %v4650, 0.0
        %v4715 = vmax.f32 %v4651, 0.0
        %v4716 = vmax.f32 %v4652, 0.0
        %v4717 = vmax.f32 %v4653, 0.0
        %v4718 = vmax.f32 %v4654, 0.0
        %v4719 = vmax.f32 %v4655, 0.0
        %v4720 = vmax.f32 %v4656, 0.0
        %v4721 = vmax.f32 %v4657, 0.0
        %v4786 = vrot.slane %v4659, 7
        %vm4787 = vcmask 1041409
        %v4788 = vsel %vm4787, %v4786, %v4658
        %v4789 = vrot.slane %v4660, 6
        %vm4790 = vcmask 1042434
        %v4791 = vsel %vm4790, %v4789, %v4788
        %v4792 = vrot.slane %v4661, 5
        %vm4793 = vcmask 1043459
        %v4794 = vsel %vm4793, %v4792, %v4791
        %v4795 = vrot.slane %v4662, 4
        %vm4796 = vcmask 1044484
        %v4797 = vsel %vm4796, %v4795, %v4794
        %v4798 = vrot.slane %v4663, 3
        %vm4799 = vcmask 1045509
        %v4800 = vsel %vm4799, %v4798, %v4797
        %v4801 = vrot.slane %v4664, 2
        %vm4802 = vcmask 1046534
        %v4803 = vsel %vm4802, %v4801, %v4800
        %v4804 = vrot.slane %v4665, 1
        %vm4805 = vcmask 1047559
        %v4806 = vsel %vm4805, %v4804, %v4803
        %v4807 = vrot.slane %v4667, 7
        %v4808 = vsel %vm4787, %v4807, %v4666
        %v4809 = vrot.slane %v4668, 6
        %v4810 = vsel %vm4790, %v4809, %v4808
        %v4811 = vrot.slane %v4669, 5
        %v4812 = vsel %vm4793, %v4811, %v4810
        %v4813 = vrot.slane %v4670, 4
        %v4814 = vsel %vm4796, %v4813, %v4812
        %v4815 = vrot.slane %v4671, 3
        %v4816 = vsel %vm4799, %v4815, %v4814
        %v4817 = vrot.slane %v4672, 2
        %v4818 = vsel %vm4802, %v4817, %v4816
        %v4819 = vrot.slane %v4673, 1
        %v4820 = vsel %vm4805, %v4819, %v4818
        %v4821 = vrot.slane %v4675, 7
        %v4822 = vsel %vm4787, %v4821, %v4674
        %v4823 = vrot.slane %v4676, 6
        %v4824 = vsel %vm4790, %v4823, %v4822
        %v4825 = vrot.slane %v4677, 5
        %v4826 = vsel %vm4793, %v4825, %v4824
        %v4827 = vrot.slane %v4678, 4
        %v4828 = vsel %vm4796, %v4827, %v4826
        %v4829 = vrot.slane %v4679, 3
        %v4830 = vsel %vm4799, %v4829, %v4828
        %v4831 = vrot.slane %v4680, 2
        %v4832 = vsel %vm4802, %v4831, %v4830
        %v4833 = vrot.slane %v4681, 1
        %v4834 = vsel %vm4805, %v4833, %v4832
        %v4835 = vrot.slane %v4683, 7
        %v4836 = vsel %vm4787, %v4835, %v4682
        %v4837 = vrot.slane %v4684, 6
        %v4838 = vsel %vm4790, %v4837, %v4836
        %v4839 = vrot.slane %v4685, 5
        %v4840 = vsel %vm4793, %v4839, %v4838
        %v4841 = vrot.slane %v4686, 4
        %v4842 = vsel %vm4796, %v4841, %v4840
        %v4843 = vrot.slane %v4687, 3
        %v4844 = vsel %vm4799, %v4843, %v4842
        %v4845 = vrot.slane %v4688, 2
        %v4846 = vsel %vm4802, %v4845, %v4844
        %v4847 = vrot.slane %v4689, 1
        %v4848 = vsel %vm4805, %v4847, %v4846
        %v4849 = vrot.slane %v4691, 7
        %v4850 = vsel %vm4787, %v4849, %v4690
        %v4851 = vrot.slane %v4692, 6
        %v4852 = vsel %vm4790, %v4851, %v4850
        %v4853 = vrot.slane %v4693, 5
        %v4854 = vsel %vm4793, %v4853, %v4852
        %v4855 = vrot.slane %v4694, 4
        %v4856 = vsel %vm4796, %v4855, %v4854
        %v4857 = vrot.slane %v4695, 3
        %v4858 = vsel %vm4799, %v4857, %v4856
        %v4859 = vrot.slane %v4696, 2
        %v4860 = vsel %vm4802, %v4859, %v4858
        %v4861 = vrot.slane %v4697, 1
        %v4862 = vsel %vm4805, %v4861, %v4860
        %v4863 = vrot.slane %v4699, 7
        %v4864 = vsel %vm4787, %v4863, %v4698
        %v4865 = vrot.slane %v4700, 6
        %v4866 = vsel %vm4790, %v4865, %v4864
        %v4867 = vrot.slane %v4701, 5
        %v4868 = vsel %vm4793, %v4867, %v4866
        %v4869 = vrot.slane %v4702, 4
        %v4870 = vsel %vm4796, %v4869, %v4868
        %v4871 = vrot.slane %v4703, 3
        %v4872 = vsel %vm4799, %v4871, %v4870
        %v4873 = vrot.slane %v4704, 2
        %v4874 = vsel %vm4802, %v4873, %v4872
        %v4875 = vrot.slane %v4705, 1
        %v4876 = vsel %vm4805, %v4875, %v4874
        %v4877 = vrot.slane %v4707, 7
        %v4878 = vsel %vm4787, %v4877, %v4706
        %v4879 = vrot.slane %v4708, 6
        %v4880 = vsel %vm4790, %v4879, %v4878
        %v4881 = vrot.slane %v4709, 5
        %v4882 = vsel %vm4793, %v4881, %v4880
        %v4883 = vrot.slane %v4710, 4
        %v4884 = vsel %vm4796, %v4883, %v4882
        %v4885 = vrot.slane %v4711, 3
        %v4886 = vsel %vm4799, %v4885, %v4884
        %v4887 = vrot.slane %v4712, 2
        %v4888 = vsel %vm4802, %v4887, %v4886
        %v4889 = vrot.slane %v4713, 1
        %v4890 = vsel %vm4805, %v4889, %v4888
        %v4891 = vrot.slane %v4715, 7
        %v4892 = vsel %vm4787, %v4891, %v4714
        %v4893 = vrot.slane %v4716, 6
        %v4894 = vsel %vm4790, %v4893, %v4892
        %v4895 = vrot.slane %v4717, 5
        %v4896 = vsel %vm4793, %v4895, %v4894
        %v4897 = vrot.slane %v4718, 4
        %v4898 = vsel %vm4796, %v4897, %v4896
        %v4899 = vrot.slane %v4719, 3
        %v4900 = vsel %vm4799, %v4899, %v4898
        %v4901 = vrot.slane %v4720, 2
        %v4902 = vsel %vm4802, %v4901, %v4900
        %v4903 = vrot.slane %v4721, 1
        %v4904 = vsel %vm4805, %v4903, %v4902
        %4913 = vst.msk [vmem:[%s163] sm:$0xff] %vm3737, %v4806
        %4914 = vst.msk [vmem:[%s163 + $0x8] sm:$0xff] %vm3737, %v4820
        %4915 = vst.msk [vmem:[%s163 + $0x10] sm:$0xff] %vm3737, %v4834
        %4916 = vst.msk [vmem:[%s163 + $0x18] sm:$0xff] %vm3737, %v4848
        %4917 = vst.msk [vmem:[%s163 + $0x20] sm:$0xff] %vm3737, %v4862
        %4918 = vst.msk [vmem:[%s163 + $0x28] sm:$0xff] %vm3737, %v4876
        %4919 = vst.msk [vmem:[%s163 + $0x30] sm:$0xff] %vm3737, %v4890
        %4920 = vst.msk [vmem:[%s163 + $0x38] sm:$0xff] %vm3737, %v4904
        %s4921 = sand.u32 %s93, 1
        %s4922 = scalar_lea.sflag [#allocation4], %s4921
        %s4923 = sand.u32 %s93, 1
        %s4924 = smul.addr %s4923, 64
        %s4925 = scalar_lea.vmem [#allocation3], %s4924
        // Predicated region
        $region33: #{tpu_custom_call.1} parent=31 // pred_check
          %p4926 = pneg %p103
        $region34: #{tpu_custom_call.1} parent=31 // pred_check_branch
          %4928 = sbr.rel (%p4926) target = $region36
        $region35: #{tpu_custom_call.1} parent=31 // pred_region
          %s4930 = ssub.s32 1024, 1024
          %4931 = vsyncadd %s4922, %s4930
          %s4932 = smul.addr %s17, 8
          %s4933 = smul.addr %s4932, 128
          %s4934 = scalar_lea.hbm %s3, %s4933
          %s4935 = sshll.u32 %s4925, 4
          %s4936 = int_to_ptr.vmem [resolvable:$true] %s4935
          %4941 = dma.vmem_to_hbm [thread:$0]  %s4936, 1024, %s4934, %s4922, 128, 128, 8
        $region36: #{tpu_custom_call.1} parent=31 // pred_fallthru
          _
      $region32: #{tpu_custom_call.1} parent=5 // pred_fallthru
        _
      %p4942 = scmp.le.s32.totalorder 2, %s12
      // Predicated region
      $region37: #{tpu_custom_call.1} parent=5 // pred_check
        %p4943 = pneg %p4942
      $region38: #{tpu_custom_call.1} parent=5 // pred_check_branch
        %4945 = sbr.rel (%p4943) target = $region40
      $region39: #{tpu_custom_call.1} parent=5 // pred_region
        %s4946 = ssub.s32 %s12, 2
        // Predicated region
        $region41: #{tpu_custom_call.1} parent=39 // pred_check
          %p4947 = pneg %p109
        $region42: #{tpu_custom_call.1} parent=39 // pred_check_branch
          %4949 = sbr.rel (%p4947) target = $region44
        $region43: #{tpu_custom_call.1} parent=39 // pred_region
          %s4950 = sand.u32 %s94, 1
          %s4951 = scalar_lea.sflag [#allocation4], %s4950
          %s4952 = sand.u32 %s94, 1
          %s4953 = smul.addr %s4952, 64
          %s4954 = scalar_lea.vmem [#allocation3], %s4953
          %4955 = dma.done %s4951, 1024
        $region44: #{tpu_custom_call.1} parent=39 // pred_fallthru
          _
      $region40: #{tpu_custom_call.1} parent=5 // pred_fallthru
        _
    $region6: #{tpu_custom_call.1} parent=1 // loop_footer
      %s16 = sadd.s32 1, %s12
    $region7: #{tpu_custom_call.1} parent=1 // loop_footer_branch
      %11 = sbr.rel target = $region3
    $region8: #{tpu_custom_call.1} parent=1 // loop_exit
      _
    %4956 = vsyncpa [#allocation4], 1
    %s4957 = scalar_lea.sflag [#allocation4], 1
    %4958 = vsyncpa %s4957, 1

</llo_original>
